<compile_context>
chip_gen: v7x
topology: tpu7x:2x2x1
jax: 0.10.0
libtpu: 0.0.40
codegen_flags: <defaults>
</compile_context>

<pallas_src>
import jax
import jax.numpy as jnp
import numpy as np
from jax.experimental import pallas as pl
from jax.experimental.pallas import tpu as pltpu

EPS = 1e-5  # PyTorch InstanceNorm2d default eps


def _make_resblock_kernel(H, W, eps):
    n = H * W
    inv_n = 1.0 / float(n)

    def kernel(x_ref, w1_ref, g1_ref, b1_ref, w2_ref, g2_ref, b2_ref,
               o_ref, acc_ref):
        # x_ref/o_ref : (n, C) per-sample pipelined blocks (f32)
        # w*_ref      : (3, 3*C, C) bf16 whole-array VMEM (grid-invariant)
        # g*/b*_ref   : (1, C) f32 whole-array VMEM
        # acc_ref     : (n, C) f32 VMEM scratch (conv accumulator)
        x = x_ref[...]                                        # (n, C) f32

        # Column masks from an in-kernel iota (no extra operand / DMA).
        col = jax.lax.broadcasted_iota(jnp.int32, (n, 1), 0)
        if W & (W - 1) == 0:
            col = col & (W - 1)
        else:
            col = jax.lax.rem(col, W)
        is_col0 = col == 0            # leftmost image column
        is_colW = col == (W - 1)      # rightmost image column

        def operand(h):
            """(n, C) f32 -> (n, 3*C) bf16 lane-concatenated conv operand."""
            # slab for kernel column offset -1: reads src[p-1]; invalid at col 0
            sm = jnp.where(is_col0, 0.0, pltpu.roll(h, shift=1, axis=0))
            # slab for kernel column offset +1: reads src[p+1]; invalid at col W-1
            sp = jnp.where(is_colW, 0.0, pltpu.roll(h, shift=n - 1, axis=0))
            # single bf16 cast per conv, at the MXU-operand boundary
            return jnp.concatenate([sm, h, sp], axis=1).astype(jnp.bfloat16)

        def conv3x3(z, w_ref):
            """3x3 'same' conv as 3 (n,3C)@(3C,C) matmuls; acc in f32 scratch."""
            # centre row (a=0): full write initializes the accumulator
            acc_ref[...] = jnp.dot(z, w_ref[1],
                                   preferred_element_type=jnp.float32)
            if n > W:
                # row above (a=-1): out rows [W, n) read z rows [0, n-W)
                acc_ref[W:, :] += jnp.dot(z[:n - W, :], w_ref[0],
                                          preferred_element_type=jnp.float32)
                # row below (a=+1): out rows [0, n-W) read z rows [W, n)
                acc_ref[:n - W, :] += jnp.dot(z[W:, :], w_ref[2],
                                              preferred_element_type=jnp.float32)
            return acc_ref[...]

        def instance_norm(h, g_ref, b_ref):
            # Centered two-pass statistics (avoids E[x^2]-E[x]^2 cancellation).
            mean = jnp.sum(h, axis=0, keepdims=True) * inv_n          # (1, C)
            d = h - mean
            var = jnp.sum(d * d, axis=0, keepdims=True) * inv_n       # (1, C)
            scale = g_ref[...] * jax.lax.rsqrt(var + eps)
            return d * scale + b_ref[...]

        # conv1 -> IN1 -> ReLU (fused into building the conv2 operand below)
        h1 = jnp.maximum(
            instance_norm(conv3x3(operand(x), w1_ref), g1_ref, b1_ref), 0.0)

        # conv2 -> IN2
        h2 = instance_norm(conv3x3(operand(h1), w2_ref), g2_ref, b2_ref)

        # residual add; single lane-dense store of the pipelined output block
        o_ref[...] = x + h2

    return kernel


def residual_block(x_nchw, params):
    """x_nchw: (N, C, H, W) float32. Returns (N, C, H, W)."""
    w1, g1, b1, w2, g2, b2 = params
    N, C, H, W = x_nchw.shape
    n = H * W

    # NHWC with spatial dims flattened; channels stay on the lane axis.
    x = jnp.transpose(x_nchw, (0, 2, 3, 1)).reshape(N, n, C).astype(jnp.float32)

    def prep_w(w):
        # HWIO (3, 3, Cin, Cout) -> (3, 3*Cin, Cout); bf16 for the MXU.
        return jnp.asarray(w, jnp.float32).reshape(3, 3 * C, C).astype(jnp.bfloat16)

    w1r, w2r = prep_w(w1), prep_w(w2)
    g1 = g1.reshape(1, C).astype(jnp.float32)
    b1 = b1.reshape(1, C).astype(jnp.float32)
    g2 = g2.reshape(1, C).astype(jnp.float32)
    b2 = b2.reshape(1, C).astype(jnp.float32)

    # Grid-invariant operands: whole-array VMEM (no per-step double buffering).
    vmem_whole = pl.BlockSpec(memory_space=pltpu.MemorySpace.VMEM)

    out = pl.pallas_call(
        _make_resblock_kernel(H, W, EPS),
        out_shape=jax.ShapeDtypeStruct((N, n, C), jnp.float32),
        grid_spec=pltpu.PrefetchScalarGridSpec(
            num_scalar_prefetch=0,
            grid=(N,),
            in_specs=[
                pl.BlockSpec((None, n, C), lambda i: (i, 0, 0)),  # x (pipelined)
                vmem_whole, vmem_whole, vmem_whole,               # w1, g1, b1
                vmem_whole, vmem_whole, vmem_whole,               # w2, g2, b2
            ],
            out_specs=pl.BlockSpec((None, n, C), lambda i: (i, 0, 0)),
            scratch_shapes=[pltpu.VMEM((n, C), jnp.float32)],     # conv acc
        ),
        compiler_params=pltpu.CompilerParams(
            dimension_semantics=("parallel",),        # batch is independent
            vmem_limit_bytes=48 * 1024 * 1024,        # < v7x physical 64 MiB
        ),
    )(x, w1r, g1, b1, w2r, g2, b2)

    return jnp.transpose(out.reshape(N, H, W, C), (0, 3, 1, 2))   # back to NCHW


def residual_block_ref(x_nchw, params):
    """Pure-JAX f32 reference (same math, XLA conv)."""
    w1, g1, b1, w2, g2, b2 = params
    x = jnp.transpose(x_nchw, (0, 2, 3, 1))

    def conv(h, w):
        return jax.lax.conv_general_dilated(
            h, w, window_strides=(1, 1), padding="SAME",
            dimension_numbers=("NHWC", "HWIO", "NHWC"))

    def inorm(h, g, b):
        mean = jnp.mean(h, axis=(1, 2), keepdims=True)
        var = jnp.mean(jnp.square(h - mean), axis=(1, 2), keepdims=True)
        return (h - mean) * jax.lax.rsqrt(var + EPS) * g + b

    h = conv(x, w1)
    h = inorm(h, g1.reshape(1, 1, 1, -1), b1.reshape(1, 1, 1, -1))
    h = jnp.maximum(h, 0.0)
    h = conv(h, w2)
    h = inorm(h, g2.reshape(1, 1, 1, -1), b2.reshape(1, 1, 1, -1))
    return jnp.transpose(x + h, (0, 3, 1, 2))


if __name__ == "__main__":
    N, C, H, W = 2, 4, 16, 16  # dim_in = dim_out = 4
    key = jax.random.PRNGKey(0)
    k_x, k_w1, k_w2, k_g1, k_b1, k_g2, k_b2 = jax.random.split(key, 7)

    x = jax.random.normal(k_x, (N, C, H, W), jnp.float32)

    # Conv2d weights in HWIO layout (3, 3, C_in, C_out); no bias (bias=False).
    w1 = 0.1 * jax.random.normal(k_w1, (3, 3, C, C), jnp.float32)
    w2 = 0.1 * jax.random.normal(k_w2, (3, 3, C, C), jnp.float32)
    # InstanceNorm affine params (deterministic, non-trivial values).
    g1 = 1.0 + 0.1 * jax.random.normal(k_g1, (C,), jnp.float32)
    b1 = 0.1 * jax.random.normal(k_b1, (C,), jnp.float32)
    g2 = 1.0 + 0.1 * jax.random.normal(k_g2, (C,), jnp.float32)
    b2 = 0.1 * jax.random.normal(k_b2, (C,), jnp.float32)

    params = (w1, g1, b1, w2, g2, b2)

    y = jax.block_until_ready(residual_block(x, params))
    y_ref = jax.block_until_ready(residual_block_ref(x, params))

    assert y.shape == (N, C, H, W)
    # Tolerance relaxed vs. pure-f32: conv matmuls run with bf16 operands
    # (f32 accumulation and f32 centered InstanceNorm statistics).
    np.testing.assert_allclose(np.asarray(y), np.asarray(y_ref),
                               rtol=2e-2, atol=2e-2)

    print("KERNEL_OK")
</pallas_src>

<mosaic_0001>
module attributes {stable_mosaic.version = 11 : i64} {
  func.func @kernel(%arg0: i32, %arg1: memref<1x256x4xf32, #tpu.memory_space<vmem>>, %arg2: memref<3x12x4xbf16, #tpu.memory_space<vmem>>, %arg3: memref<1x4xf32, #tpu.memory_space<vmem>>, %arg4: memref<1x4xf32, #tpu.memory_space<vmem>>, %arg5: memref<3x12x4xbf16, #tpu.memory_space<vmem>>, %arg6: memref<1x4xf32, #tpu.memory_space<vmem>>, %arg7: memref<1x4xf32, #tpu.memory_space<vmem>>, %arg8: memref<1x256x4xf32, #tpu.memory_space<vmem>>, %arg9: memref<256x4xf32, #tpu.memory_space<vmem>>) attributes {dimension_semantics = [#tpu.dimension_semantics<parallel>], iteration_bounds = array<i64: 2>, scalar_prefetch = 0 : i64, scratch_operands = 1 : i64, tpu.core_type = #tpu.core_type<tc>, window_params = [{transform_indices = @transform_0, window_bounds = array<i64: 1, 256, 4>}, {pipeline_mode = #tpu.pipeline_mode<synchronous>, transform_indices = @transform_1, window_bounds = array<i64: 3, 12, 4>}, {pipeline_mode = #tpu.pipeline_mode<synchronous>, transform_indices = @transform_2, window_bounds = array<i64: 1, 4>}, {pipeline_mode = #tpu.pipeline_mode<synchronous>, transform_indices = @transform_3, window_bounds = array<i64: 1, 4>}, {pipeline_mode = #tpu.pipeline_mode<synchronous>, transform_indices = @transform_4, window_bounds = array<i64: 3, 12, 4>}, {pipeline_mode = #tpu.pipeline_mode<synchronous>, transform_indices = @transform_5, window_bounds = array<i64: 1, 4>}, {pipeline_mode = #tpu.pipeline_mode<synchronous>, transform_indices = @transform_6, window_bounds = array<i64: 1, 4>}, {transform_indices = @transform_7, window_bounds = array<i64: 1, 256, 4>}]} {
    %c0 = arith.constant 0 : index
    %c0_0 = arith.constant 0 : index
    %c0_1 = arith.constant 0 : index
    %0 = vector.load %arg1[%c0, %c0_0, %c0_1] : memref<1x256x4xf32, #tpu.memory_space<vmem>>, vector<1x256x4xf32>
    %1 = vector.shape_cast %0 : vector<1x256x4xf32> to vector<256x4xf32>
    %2 = tpu.iota {dimensions = array<i32: 0>} : vector<256x1xi32>
    %c15_i32 = arith.constant 15 : i32
    %3 = vector.broadcast %c15_i32 : i32 to vector<256x1xi32>
    %4 = arith.andi %2, %3 : vector<256x1xi32>
    %c0_i32 = arith.constant 0 : i32
    %5 = vector.broadcast %c0_i32 : i32 to vector<256x1xi32>
    %6 = arith.cmpi eq, %4, %5 : vector<256x1xi32>
    %c15_i32_2 = arith.constant 15 : i32
    %7 = vector.broadcast %c15_i32_2 : i32 to vector<256x1xi32>
    %8 = arith.cmpi eq, %4, %7 : vector<256x1xi32>
    %c1_i32 = arith.constant 1 : i32
    %9 = tpu.dynamic_rotate %1 by %c1_i32 dim 0 : vector<256x4xf32>, i32 -> vector<256x4xf32>
    %cst = arith.constant 0.000000e+00 : f32
    %10 = vector.shape_cast %6 : vector<256x1xi1> to vector<256x1xi1>
    %11 = vector.broadcast %10 : vector<256x1xi1> to vector<256x4xi1>
    %12 = vector.broadcast %cst : f32 to vector<256x4xf32>
    %13 = arith.select %11, %12, %9 : vector<256x4xi1>, vector<256x4xf32>
    %c255_i32 = arith.constant 255 : i32
    %14 = tpu.dynamic_rotate %1 by %c255_i32 dim 0 : vector<256x4xf32>, i32 -> vector<256x4xf32>
    %cst_3 = arith.constant 0.000000e+00 : f32
    %15 = vector.shape_cast %8 : vector<256x1xi1> to vector<256x1xi1>
    %16 = vector.broadcast %15 : vector<256x1xi1> to vector<256x4xi1>
    %17 = vector.broadcast %cst_3 : f32 to vector<256x4xf32>
    %18 = arith.select %16, %17, %14 : vector<256x4xi1>, vector<256x4xf32>
    %19 = tpu.concatenate %13, %1, %18 in 1 : vector<256x4xf32>, vector<256x4xf32>, vector<256x4xf32> -> vector<256x12xf32>
    %20 = arith.truncf %19 : vector<256x12xf32> to vector<256x12xbf16>
    %c1 = arith.constant 1 : index
    %c0_4 = arith.constant 0 : index
    %c0_5 = arith.constant 0 : index
    %21 = vector.load %arg2[%c1, %c0_4, %c0_5] : memref<3x12x4xbf16, #tpu.memory_space<vmem>>, vector<1x12x4xbf16>
    %22 = vector.shape_cast %21 : vector<1x12x4xbf16> to vector<12x4xbf16>
    %cst_6 = arith.constant dense<0.000000e+00> : vector<256x4xf32>
    %23 = tpu.matmul %20, %22, %cst_6 {dimension_numbers = #tpu.dot_dimension_numbers<[1], [0], [0], [1], [0, 0, 1, 1], [], []>} : vector<256x12xbf16>, vector<12x4xbf16>, vector<256x4xf32> -> vector<256x4xf32>
    %c0_7 = arith.constant 0 : index
    %c0_8 = arith.constant 0 : index
    %24 = vector.load %arg9[%c0_7, %c0_8] : memref<256x4xf32, #tpu.memory_space<vmem>>, vector<256x4xf32>
    tpu.vector_store %arg9[%c0_7, %c0_8], %23 {strides = array<i32>} : memref<256x4xf32, #tpu.memory_space<vmem>>, vector<256x4xf32>,
    %c16 = arith.constant 16 : index
    %c0_9 = arith.constant 0 : index
    %25 = vector.load %arg9[%c16, %c0_9] : memref<256x4xf32, #tpu.memory_space<vmem>>, vector<240x4xf32>
    %26 = vector.extract_strided_slice %20 {offsets = [0, 0], sizes = [240, 12], strides = [1, 1]} : vector<256x12xbf16> to vector<240x12xbf16>
    %c0_10 = arith.constant 0 : index
    %c0_11 = arith.constant 0 : index
    %c0_12 = arith.constant 0 : index
    %27 = vector.load %arg2[%c0_10, %c0_11, %c0_12] : memref<3x12x4xbf16, #tpu.memory_space<vmem>>, vector<1x12x4xbf16>
    %28 = vector.shape_cast %27 : vector<1x12x4xbf16> to vector<12x4xbf16>
    %cst_13 = arith.constant dense<0.000000e+00> : vector<240x4xf32>
    %29 = tpu.matmul %26, %28, %cst_13 {dimension_numbers = #tpu.dot_dimension_numbers<[1], [0], [0], [1], [0, 0, 1, 1], [], []>} : vector<240x12xbf16>, vector<12x4xbf16>, vector<240x4xf32> -> vector<240x4xf32>
    %30 = arith.addf %25, %29 : vector<240x4xf32>
    %c16_14 = arith.constant 16 : index
    %c0_15 = arith.constant 0 : index
    %31 = vector.load %arg9[%c16_14, %c0_15] : memref<256x4xf32, #tpu.memory_space<vmem>>, vector<240x4xf32>
    tpu.vector_store %arg9[%c16_14, %c0_15], %30 {strides = array<i32>} : memref<256x4xf32, #tpu.memory_space<vmem>>, vector<240x4xf32>,
    %c0_16 = arith.constant 0 : index
    %c0_17 = arith.constant 0 : index
    %32 = vector.load %arg9[%c0_16, %c0_17] : memref<256x4xf32, #tpu.memory_space<vmem>>, vector<240x4xf32>
    %33 = vector.extract_strided_slice %20 {offsets = [16, 0], sizes = [240, 12], strides = [1, 1]} : vector<256x12xbf16> to vector<240x12xbf16>
    %c2 = arith.constant 2 : index
    %c0_18 = arith.constant 0 : index
    %c0_19 = arith.constant 0 : index
    %34 = vector.load %arg2[%c2, %c0_18, %c0_19] : memref<3x12x4xbf16, #tpu.memory_space<vmem>>, vector<1x12x4xbf16>
    %35 = vector.shape_cast %34 : vector<1x12x4xbf16> to vector<12x4xbf16>
    %cst_20 = arith.constant dense<0.000000e+00> : vector<240x4xf32>
    %36 = tpu.matmul %33, %35, %cst_20 {dimension_numbers = #tpu.dot_dimension_numbers<[1], [0], [0], [1], [0, 0, 1, 1], [], []>} : vector<240x12xbf16>, vector<12x4xbf16>, vector<240x4xf32> -> vector<240x4xf32>
    %37 = arith.addf %32, %36 : vector<240x4xf32>
    %c0_21 = arith.constant 0 : index
    %c0_22 = arith.constant 0 : index
    %38 = vector.load %arg9[%c0_21, %c0_22] : memref<256x4xf32, #tpu.memory_space<vmem>>, vector<240x4xf32>
    tpu.vector_store %arg9[%c0_21, %c0_22], %37 {strides = array<i32>} : memref<256x4xf32, #tpu.memory_space<vmem>>, vector<240x4xf32>,
    %c0_23 = arith.constant 0 : index
    %c0_24 = arith.constant 0 : index
    %39 = vector.load %arg9[%c0_23, %c0_24] : memref<256x4xf32, #tpu.memory_space<vmem>>, vector<256x4xf32>
    %cst_25 = arith.constant dense<0.000000e+00> : vector<4xf32>
    %40 = vector.multi_reduction <add>, %39, %cst_25 [0] : vector<256x4xf32> to vector<4xf32>
    %41 = vector.shape_cast %40 : vector<4xf32> to vector<1x4xf32>
    %cst_26 = arith.constant 3.906250e-03 : f32
    %42 = vector.broadcast %cst_26 : f32 to vector<1x4xf32>
    %43 = arith.mulf %41, %42 : vector<1x4xf32>
    %44 = vector.broadcast %43 : vector<1x4xf32> to vector<256x4xf32>
    %45 = arith.subf %39, %44 : vector<256x4xf32>
    %46 = arith.mulf %45, %45 : vector<256x4xf32>
    %cst_27 = arith.constant dense<0.000000e+00> : vector<4xf32>
    %47 = vector.multi_reduction <add>, %46, %cst_27 [0] : vector<256x4xf32> to vector<4xf32>
    %48 = vector.shape_cast %47 : vector<4xf32> to vector<1x4xf32>
    %cst_28 = arith.constant 3.906250e-03 : f32
    %49 = vector.broadcast %cst_28 : f32 to vector<1x4xf32>
    %50 = arith.mulf %48, %49 : vector<1x4xf32>
    %c0_29 = arith.constant 0 : index
    %c0_30 = arith.constant 0 : index
    %51 = vector.load %arg3[%c0_29, %c0_30] : memref<1x4xf32, #tpu.memory_space<vmem>>, vector<1x4xf32>
    %cst_31 = arith.constant 9.99999974E-6 : f32
    %52 = vector.broadcast %cst_31 : f32 to vector<1x4xf32>
    %53 = arith.addf %50, %52 : vector<1x4xf32>
    %54 = math.rsqrt %53 : vector<1x4xf32>
    %55 = arith.mulf %51, %54 : vector<1x4xf32>
    %56 = vector.broadcast %55 : vector<1x4xf32> to vector<256x4xf32>
    %57 = arith.mulf %45, %56 : vector<256x4xf32>
    %c0_32 = arith.constant 0 : index
    %c0_33 = arith.constant 0 : index
    %58 = vector.load %arg4[%c0_32, %c0_33] : memref<1x4xf32, #tpu.memory_space<vmem>>, vector<1x4xf32>
    %59 = vector.broadcast %58 : vector<1x4xf32> to vector<256x4xf32>
    %60 = arith.addf %57, %59 : vector<256x4xf32>
    %cst_34 = arith.constant 0.000000e+00 : f32
    %61 = vector.broadcast %cst_34 : f32 to vector<256x4xf32>
    %62 = arith.maximumf %60, %61 : vector<256x4xf32>
    %c1_i32_35 = arith.constant 1 : i32
    %63 = tpu.dynamic_rotate %62 by %c1_i32_35 dim 0 : vector<256x4xf32>, i32 -> vector<256x4xf32>
    %cst_36 = arith.constant 0.000000e+00 : f32
    %64 = vector.shape_cast %6 : vector<256x1xi1> to vector<256x1xi1>
    %65 = vector.broadcast %64 : vector<256x1xi1> to vector<256x4xi1>
    %66 = vector.broadcast %cst_36 : f32 to vector<256x4xf32>
    %67 = arith.select %65, %66, %63 : vector<256x4xi1>, vector<256x4xf32>
    %c255_i32_37 = arith.constant 255 : i32
    %68 = tpu.dynamic_rotate %62 by %c255_i32_37 dim 0 : vector<256x4xf32>, i32 -> vector<256x4xf32>
    %cst_38 = arith.constant 0.000000e+00 : f32
    %69 = vector.shape_cast %8 : vector<256x1xi1> to vector<256x1xi1>
    %70 = vector.broadcast %69 : vector<256x1xi1> to vector<256x4xi1>
    %71 = vector.broadcast %cst_38 : f32 to vector<256x4xf32>
    %72 = arith.select %70, %71, %68 : vector<256x4xi1>, vector<256x4xf32>
    %73 = tpu.concatenate %67, %62, %72 in 1 : vector<256x4xf32>, vector<256x4xf32>, vector<256x4xf32> -> vector<256x12xf32>
    %74 = arith.truncf %73 : vector<256x12xf32> to vector<256x12xbf16>
    %c1_39 = arith.constant 1 : index
    %c0_40 = arith.constant 0 : index
    %c0_41 = arith.constant 0 : index
    %75 = vector.load %arg5[%c1_39, %c0_40, %c0_41] : memref<3x12x4xbf16, #tpu.memory_space<vmem>>, vector<1x12x4xbf16>
    %76 = vector.shape_cast %75 : vector<1x12x4xbf16> to vector<12x4xbf16>
    %cst_42 = arith.constant dense<0.000000e+00> : vector<256x4xf32>
    %77 = tpu.matmul %74, %76, %cst_42 {dimension_numbers = #tpu.dot_dimension_numbers<[1], [0], [0], [1], [0, 0, 1, 1], [], []>} : vector<256x12xbf16>, vector<12x4xbf16>, vector<256x4xf32> -> vector<256x4xf32>
    %c0_43 = arith.constant 0 : index
    %c0_44 = arith.constant 0 : index
    %78 = vector.load %arg9[%c0_43, %c0_44] : memref<256x4xf32, #tpu.memory_space<vmem>>, vector<256x4xf32>
    tpu.vector_store %arg9[%c0_43, %c0_44], %77 {strides = array<i32>} : memref<256x4xf32, #tpu.memory_space<vmem>>, vector<256x4xf32>,
    %c16_45 = arith.constant 16 : index
    %c0_46 = arith.constant 0 : index
    %79 = vector.load %arg9[%c16_45, %c0_46] : memref<256x4xf32, #tpu.memory_space<vmem>>, vector<240x4xf32>
    %80 = vector.extract_strided_slice %74 {offsets = [0, 0], sizes = [240, 12], strides = [1, 1]} : vector<256x12xbf16> to vector<240x12xbf16>
    %c0_47 = arith.constant 0 : index
    %c0_48 = arith.constant 0 : index
    %c0_49 = arith.constant 0 : index
    %81 = vector.load %arg5[%c0_47, %c0_48, %c0_49] : memref<3x12x4xbf16, #tpu.memory_space<vmem>>, vector<1x12x4xbf16>
    %82 = vector.shape_cast %81 : vector<1x12x4xbf16> to vector<12x4xbf16>
    %cst_50 = arith.constant dense<0.000000e+00> : vector<240x4xf32>
    %83 = tpu.matmul %80, %82, %cst_50 {dimension_numbers = #tpu.dot_dimension_numbers<[1], [0], [0], [1], [0, 0, 1, 1], [], []>} : vector<240x12xbf16>, vector<12x4xbf16>, vector<240x4xf32> -> vector<240x4xf32>
    %84 = arith.addf %79, %83 : vector<240x4xf32>
    %c16_51 = arith.constant 16 : index
    %c0_52 = arith.constant 0 : index
    %85 = vector.load %arg9[%c16_51, %c0_52] : memref<256x4xf32, #tpu.memory_space<vmem>>, vector<240x4xf32>
    tpu.vector_store %arg9[%c16_51, %c0_52], %84 {strides = array<i32>} : memref<256x4xf32, #tpu.memory_space<vmem>>, vector<240x4xf32>,
    %c0_53 = arith.constant 0 : index
    %c0_54 = arith.constant 0 : index
    %86 = vector.load %arg9[%c0_53, %c0_54] : memref<256x4xf32, #tpu.memory_space<vmem>>, vector<240x4xf32>
    %87 = vector.extract_strided_slice %74 {offsets = [16, 0], sizes = [240, 12], strides = [1, 1]} : vector<256x12xbf16> to vector<240x12xbf16>
    %c2_55 = arith.constant 2 : index
    %c0_56 = arith.constant 0 : index
    %c0_57 = arith.constant 0 : index
    %88 = vector.load %arg5[%c2_55, %c0_56, %c0_57] : memref<3x12x4xbf16, #tpu.memory_space<vmem>>, vector<1x12x4xbf16>
    %89 = vector.shape_cast %88 : vector<1x12x4xbf16> to vector<12x4xbf16>
    %cst_58 = arith.constant dense<0.000000e+00> : vector<240x4xf32>
    %90 = tpu.matmul %87, %89, %cst_58 {dimension_numbers = #tpu.dot_dimension_numbers<[1], [0], [0], [1], [0, 0, 1, 1], [], []>} : vector<240x12xbf16>, vector<12x4xbf16>, vector<240x4xf32> -> vector<240x4xf32>
    %91 = arith.addf %86, %90 : vector<240x4xf32>
    %c0_59 = arith.constant 0 : index
    %c0_60 = arith.constant 0 : index
    %92 = vector.load %arg9[%c0_59, %c0_60] : memref<256x4xf32, #tpu.memory_space<vmem>>, vector<240x4xf32>
    tpu.vector_store %arg9[%c0_59, %c0_60], %91 {strides = array<i32>} : memref<256x4xf32, #tpu.memory_space<vmem>>, vector<240x4xf32>,
    %c0_61 = arith.constant 0 : index
    %c0_62 = arith.constant 0 : index
    %93 = vector.load %arg9[%c0_61, %c0_62] : memref<256x4xf32, #tpu.memory_space<vmem>>, vector<256x4xf32>
    %cst_63 = arith.constant dense<0.000000e+00> : vector<4xf32>
    %94 = vector.multi_reduction <add>, %93, %cst_63 [0] : vector<256x4xf32> to vector<4xf32>
    %95 = vector.shape_cast %94 : vector<4xf32> to vector<1x4xf32>
    %cst_64 = arith.constant 3.906250e-03 : f32
    %96 = vector.broadcast %cst_64 : f32 to vector<1x4xf32>
    %97 = arith.mulf %95, %96 : vector<1x4xf32>
    %98 = vector.broadcast %97 : vector<1x4xf32> to vector<256x4xf32>
    %99 = arith.subf %93, %98 : vector<256x4xf32>
    %100 = arith.mulf %99, %99 : vector<256x4xf32>
    %cst_65 = arith.constant dense<0.000000e+00> : vector<4xf32>
    %101 = vector.multi_reduction <add>, %100, %cst_65 [0] : vector<256x4xf32> to vector<4xf32>
    %102 = vector.shape_cast %101 : vector<4xf32> to vector<1x4xf32>
    %cst_66 = arith.constant 3.906250e-03 : f32
    %103 = vector.broadcast %cst_66 : f32 to vector<1x4xf32>
    %104 = arith.mulf %102, %103 : vector<1x4xf32>
    %c0_67 = arith.constant 0 : index
    %c0_68 = arith.constant 0 : index
    %105 = vector.load %arg6[%c0_67, %c0_68] : memref<1x4xf32, #tpu.memory_space<vmem>>, vector<1x4xf32>
    %cst_69 = arith.constant 9.99999974E-6 : f32
    %106 = vector.broadcast %cst_69 : f32 to vector<1x4xf32>
    %107 = arith.addf %104, %106 : vector<1x4xf32>
    %108 = math.rsqrt %107 : vector<1x4xf32>
    %109 = arith.mulf %105, %108 : vector<1x4xf32>
    %110 = vector.broadcast %109 : vector<1x4xf32> to vector<256x4xf32>
    %111 = arith.mulf %99, %110 : vector<256x4xf32>
    %c0_70 = arith.constant 0 : index
    %c0_71 = arith.constant 0 : index
    %112 = vector.load %arg7[%c0_70, %c0_71] : memref<1x4xf32, #tpu.memory_space<vmem>>, vector<1x4xf32>
    %113 = vector.broadcast %112 : vector<1x4xf32> to vector<256x4xf32>
    %114 = arith.addf %111, %113 : vector<256x4xf32>
    %115 = arith.addf %1, %114 : vector<256x4xf32>
    %c0_72 = arith.constant 0 : index
    %c0_73 = arith.constant 0 : index
    %c0_74 = arith.constant 0 : index
    %116 = vector.load %arg8[%c0_72, %c0_73, %c0_74] : memref<1x256x4xf32, #tpu.memory_space<vmem>>, vector<1x256x4xf32>
    %117 = vector.shape_cast %116 : vector<1x256x4xf32> to vector<256x4xf32>
    %118 = vector.shape_cast %115 : vector<256x4xf32> to vector<1x256x4xf32>
    tpu.vector_store %arg8[%c0_72, %c0_73, %c0_74], %118 {strides = array<i32>} : memref<1x256x4xf32, #tpu.memory_space<vmem>>, vector<1x256x4xf32>,
    return
  }
  func.func @transform_0(%arg0: i32) -> (i32, i32, i32) {
    %c0_i32 = arith.constant 0 : i32
    %c0_i32_0 = arith.constant 0 : i32
    %c0_i32_1 = arith.constant 0 : i32
    return %arg0, %c0_i32, %c0_i32_0 : i32, i32, i32
  }
  func.func @transform_1(%arg0: i32) -> (i32, i32, i32) {
    %c0_i32 = arith.constant 0 : i32
    %c0_i32_0 = arith.constant 0 : i32
    %c0_i32_1 = arith.constant 0 : i32
    %c0_i32_2 = arith.constant 0 : i32
    return %c0_i32, %c0_i32_0, %c0_i32_1 : i32, i32, i32
  }
  func.func @transform_2(%arg0: i32) -> (i32, i32) {
    %c0_i32 = arith.constant 0 : i32
    %c0_i32_0 = arith.constant 0 : i32
    %c0_i32_1 = arith.constant 0 : i32
    return %c0_i32, %c0_i32_0 : i32, i32
  }
  func.func @transform_3(%arg0: i32) -> (i32, i32) {
    %c0_i32 = arith.constant 0 : i32
    %c0_i32_0 = arith.constant 0 : i32
    %c0_i32_1 = arith.constant 0 : i32
    return %c0_i32, %c0_i32_0 : i32, i32
  }
  func.func @transform_4(%arg0: i32) -> (i32, i32, i32) {
    %c0_i32 = arith.constant 0 : i32
    %c0_i32_0 = arith.constant 0 : i32
    %c0_i32_1 = arith.constant 0 : i32
    %c0_i32_2 = arith.constant 0 : i32
    return %c0_i32, %c0_i32_0, %c0_i32_1 : i32, i32, i32
  }
  func.func @transform_5(%arg0: i32) -> (i32, i32) {
    %c0_i32 = arith.constant 0 : i32
    %c0_i32_0 = arith.constant 0 : i32
    %c0_i32_1 = arith.constant 0 : i32
    return %c0_i32, %c0_i32_0 : i32, i32
  }
  func.func @transform_6(%arg0: i32) -> (i32, i32) {
    %c0_i32 = arith.constant 0 : i32
    %c0_i32_0 = arith.constant 0 : i32
    %c0_i32_1 = arith.constant 0 : i32
    return %c0_i32, %c0_i32_0 : i32, i32
  }
  func.func @transform_7(%arg0: i32) -> (i32, i32, i32) {
    %c0_i32 = arith.constant 0 : i32
    %c0_i32_0 = arith.constant 0 : i32
    %c0_i32_1 = arith.constant 0 : i32
    return %arg0, %c0_i32, %c0_i32_0 : i32, i32, i32
  }
}

</mosaic_0001>

<llo_original>
// kernel: tpu_custom_call.1
$region0: #{tpu_custom_call.1}
  #allocation0 [shape = 'u32[]', space=smem, size = 0x4, offset = 0x4, fixed_abs, tag = 'smem constant byte address 0x4 - core index']
  #allocation1 [shape = 'u32[144,128]{1,0:T(1,128)}', space=vmem, size = 0x12000, scoped, tag = 'internal scratch']
  #allocation2 [shape = 'f32[256,4]{1,0:T(8,128)}', space=vmem, size = 0x20000, scoped, tag = 'scratch operand']
  %s0 = inlined_call_operand.vmem [shape: f32[2,256,4], index: 0, kind: input, shape index: {}]
  %s1 = inlined_call_operand.vmem [shape: bf16[3,12,4], index: 1, kind: input, shape index: {}]
  %s2 = inlined_call_operand.vmem [shape: f32[1,4], index: 2, kind: input, shape index: {}]
  %s3 = inlined_call_operand.vmem [shape: f32[1,4], index: 3, kind: input, shape index: {}]
  %s4 = inlined_call_operand.vmem [shape: bf16[3,12,4], index: 4, kind: input, shape index: {}]
  %s5 = inlined_call_operand.vmem [shape: f32[1,4], index: 5, kind: input, shape index: {}]
  %s6 = inlined_call_operand.vmem [shape: f32[1,4], index: 6, kind: input, shape index: {}]
  %s7 = inlined_call_operand.vmem [shape: f32[2,256,4], index: 7, kind: output, shape index: {}]
  %s8 = sld [smem:[#allocation0]]
  $region61: #{tpu_custom_call.1} parent=0
    _
  %s10 = ssub.s32 1, %s8
  %s11 = scalar_select 0, %s10, %s8
  loop: start=0, step=1, limit=4
  $region2: #{tpu_custom_call.1} parent=0 // loop_pre_header
    _
  $region3: #{tpu_custom_call.1} parent=0 // loop_header
    %s13 = sphi 0, %s17
    %p14 = scmp.ge.s32.totalorder %s13, 4
    %s23 = sphi 0, %s25
    %s26 = sphi 0, %s23
    %s27 = sphi 0, %s26
    %s43 = sphi 0, %s27
    %s47 = sphi 0, %s47
    %s49 = sphi 0, %s47
    %s50 = sphi 0, %s49
    %s64 = sphi 0, %s50
    %s68 = sphi 0, %s68
    %s70 = sphi 0, %s68
    %s71 = sphi 0, %s70
    %s85 = sphi 0, %s71
    %s89 = sphi 0, %s89
    %s91 = sphi 0, %s89
    %s92 = sphi 0, %s91
    %s106 = sphi 0, %s92
    %s110 = sphi 0, %s110
    %s112 = sphi 0, %s110
    %s113 = sphi 0, %s112
    %s127 = sphi 0, %s113
    %s131 = sphi 0, %s131
    %s133 = sphi 0, %s131
    %s134 = sphi 0, %s133
    %s148 = sphi 0, %s134
    %s152 = sphi 0, %s152
    %s154 = sphi 0, %s152
    %s155 = sphi 0, %s154
    %s169 = sphi 0, %s155
    %s175 = sphi 0, %s177
    %s178 = sphi 0, %s175
    %s179 = sphi 0, %s178
    %s195 = sphi 0, %s179
  $region4: #{tpu_custom_call.1} parent=0 // loop_header_branch
    %16 = sbr.rel (%p14) target = $region8
  $region5: #{tpu_custom_call.1} parent=0 // loop_body
    %s18 = ssub.s32 %s13, 1
    %s19 = ssub.s32 %s13, 2
    %s20 = sadd.s32 %s13, 1
    %s21 = ssub.s32 %s13, %s20
    %p22 = scmp.eq.s32.totalorder %s21, 0
    %s24 = sadd.s32 %s23, 1
    %s25 = scalar_select %p22, %s23, %s24
    %p28 = pneg %p22
    %p29 = scmp.eq.s32.totalorder %s13, 1
    %p30 = por %p28, %p29
    %p31 = scmp.ne.s32.totalorder %s23, %s26
    %p32 = scmp.eq.s32.totalorder %s13, 0
    %p33 = por %p31, %p32
    %p34 = scmp.ne.s32.totalorder %s23, %s26
    %p35 = scmp.eq.s32.totalorder %s18, 1
    %p36 = por %p34, %p35
    %p37 = scmp.ne.s32.totalorder %s26, %s27
    %p38 = scmp.eq.s32.totalorder %s18, 0
    %p39 = por %p37, %p38
    %p40 = scmp.ne.s32.totalorder %s26, %s27
    %p41 = scmp.eq.s32.totalorder %s19, 1
    %p42 = por %p40, %p41
    %p44 = scmp.ne.s32.totalorder %s27, %s43
    %p45 = scmp.eq.s32.totalorder %s19, 0
    %p46 = por %p44, %p45
    %s48 = sadd.s32 %s47, 1
    %p51 = scmp.eq.s32.totalorder %s13, 1
    %p52 = scmp.ne.s32.totalorder %s47, %s49
    %p53 = scmp.eq.s32.totalorder %s13, 0
    %p54 = por %p52, %p53
    %p55 = scmp.ne.s32.totalorder %s47, %s49
    %p56 = scmp.eq.s32.totalorder %s18, 1
    %p57 = por %p55, %p56
    %p58 = scmp.ne.s32.totalorder %s49, %s50
    %p59 = scmp.eq.s32.totalorder %s18, 0
    %p60 = por %p58, %p59
    %p61 = scmp.ne.s32.totalorder %s49, %s50
    %p62 = scmp.eq.s32.totalorder %s19, 1
    %p63 = por %p61, %p62
    %p65 = scmp.ne.s32.totalorder %s50, %s64
    %p66 = scmp.eq.s32.totalorder %s19, 0
    %p67 = por %p65, %p66
    %s69 = sadd.s32 %s68, 1
    %p72 = scmp.eq.s32.totalorder %s13, 1
    %p73 = scmp.ne.s32.totalorder %s68, %s70
    %p74 = scmp.eq.s32.totalorder %s13, 0
    %p75 = por %p73, %p74
    %p76 = scmp.ne.s32.totalorder %s68, %s70
    %p77 = scmp.eq.s32.totalorder %s18, 1
    %p78 = por %p76, %p77
    %p79 = scmp.ne.s32.totalorder %s70, %s71
    %p80 = scmp.eq.s32.totalorder %s18, 0
    %p81 = por %p79, %p80
    %p82 = scmp.ne.s32.totalorder %s70, %s71
    %p83 = scmp.eq.s32.totalorder %s19, 1
    %p84 = por %p82, %p83
    %p86 = scmp.ne.s32.totalorder %s71, %s85
    %p87 = scmp.eq.s32.totalorder %s19, 0
    %p88 = por %p86, %p87
    %s90 = sadd.s32 %s89, 1
    %p93 = scmp.eq.s32.totalorder %s13, 1
    %p94 = scmp.ne.s32.totalorder %s89, %s91
    %p95 = scmp.eq.s32.totalorder %s13, 0
    %p96 = por %p94, %p95
    %p97 = scmp.ne.s32.totalorder %s89, %s91
    %p98 = scmp.eq.s32.totalorder %s18, 1
    %p99 = por %p97, %p98
    %p100 = scmp.ne.s32.totalorder %s91, %s92
    %p101 = scmp.eq.s32.totalorder %s18, 0
    %p102 = por %p100, %p101
    %p103 = scmp.ne.s32.totalorder %s91, %s92
    %p104 = scmp.eq.s32.totalorder %s19, 1
    %p105 = por %p103, %p104
    %p107 = scmp.ne.s32.totalorder %s92, %s106
    %p108 = scmp.eq.s32.totalorder %s19, 0
    %p109 = por %p107, %p108
    %s111 = sadd.s32 %s110, 1
    %p114 = scmp.eq.s32.totalorder %s13, 1
    %p115 = scmp.ne.s32.totalorder %s110, %s112
    %p116 = scmp.eq.s32.totalorder %s13, 0
    %p117 = por %p115, %p116
    %p118 = scmp.ne.s32.totalorder %s110, %s112
    %p119 = scmp.eq.s32.totalorder %s18, 1
    %p120 = por %p118, %p119
    %p121 = scmp.ne.s32.totalorder %s112, %s113
    %p122 = scmp.eq.s32.totalorder %s18, 0
    %p123 = por %p121, %p122
    %p124 = scmp.ne.s32.totalorder %s112, %s113
    %p125 = scmp.eq.s32.totalorder %s19, 1
    %p126 = por %p124, %p125
    %p128 = scmp.ne.s32.totalorder %s113, %s127
    %p129 = scmp.eq.s32.totalorder %s19, 0
    %p130 = por %p128, %p129
    %s132 = sadd.s32 %s131, 1
    %p135 = scmp.eq.s32.totalorder %s13, 1
    %p136 = scmp.ne.s32.totalorder %s131, %s133
    %p137 = scmp.eq.s32.totalorder %s13, 0
    %p138 = por %p136, %p137
    %p139 = scmp.ne.s32.totalorder %s131, %s133
    %p140 = scmp.eq.s32.totalorder %s18, 1
    %p141 = por %p139, %p140
    %p142 = scmp.ne.s32.totalorder %s133, %s134
    %p143 = scmp.eq.s32.totalorder %s18, 0
    %p144 = por %p142, %p143
    %p145 = scmp.ne.s32.totalorder %s133, %s134
    %p146 = scmp.eq.s32.totalorder %s19, 1
    %p147 = por %p145, %p146
    %p149 = scmp.ne.s32.totalorder %s134, %s148
    %p150 = scmp.eq.s32.totalorder %s19, 0
    %p151 = por %p149, %p150
    %s153 = sadd.s32 %s152, 1
    %p156 = scmp.eq.s32.totalorder %s13, 1
    %p157 = scmp.ne.s32.totalorder %s152, %s154
    %p158 = scmp.eq.s32.totalorder %s13, 0
    %p159 = por %p157, %p158
    %p160 = scmp.ne.s32.totalorder %s152, %s154
    %p161 = scmp.eq.s32.totalorder %s18, 1
    %p162 = por %p160, %p161
    %p163 = scmp.ne.s32.totalorder %s154, %s155
    %p164 = scmp.eq.s32.totalorder %s18, 0
    %p165 = por %p163, %p164
    %p166 = scmp.ne.s32.totalorder %s154, %s155
    %p167 = scmp.eq.s32.totalorder %s19, 1
    %p168 = por %p166, %p167
    %p170 = scmp.ne.s32.totalorder %s155, %s169
    %p171 = scmp.eq.s32.totalorder %s19, 0
    %p172 = por %p170, %p171
    %s173 = ssub.s32 %s13, %s20
    %p174 = scmp.eq.s32.totalorder %s173, 0
    %s176 = sadd.s32 %s175, 1
    %s177 = scalar_select %p174, %s175, %s176
    %p180 = pneg %p174
    %p181 = scmp.eq.s32.totalorder %s13, 1
    %p182 = por %p180, %p181
    %p183 = scmp.ne.s32.totalorder %s175, %s178
    %p184 = scmp.eq.s32.totalorder %s13, 0
    %p185 = por %p183, %p184
    %p186 = scmp.ne.s32.totalorder %s175, %s178
    %p187 = scmp.eq.s32.totalorder %s18, 1
    %p188 = por %p186, %p187
    %p189 = scmp.ne.s32.totalorder %s178, %s179
    %p190 = scmp.eq.s32.totalorder %s18, 0
    %p191 = por %p189, %p190
    %p192 = scmp.ne.s32.totalorder %s178, %s179
    %p193 = scmp.eq.s32.totalorder %s19, 1
    %p194 = por %p192, %p193
    %p196 = scmp.ne.s32.totalorder %s179, %s195
    %p197 = scmp.eq.s32.totalorder %s19, 0
    %p198 = por %p196, %p197
    %p199 = scmp.le.s32.totalorder 1, %s13
    %p200 = scmp.lt.s32.totalorder %s13, 3
    %p201 = pnand %p199, %p200
    %p202 = pneg %p201
    // Predicated region
    $region9: #{tpu_custom_call.1} parent=5 // pred_check
      _
    $region10: #{tpu_custom_call.1} parent=5 // pred_check_branch
      %204 = sbr.rel (%p201) target = $region12
    $region11: #{tpu_custom_call.1} parent=5 // pred_region
      %s205 = ssub.s32 %s13, 1
      // Predicated region
      $region13: #{tpu_custom_call.1} parent=11 // pred_check
        %p206 = pneg %p60
      $region14: #{tpu_custom_call.1} parent=11 // pred_check_branch
        %208 = sbr.rel (%p206) target = $region16
      $region15: #{tpu_custom_call.1} parent=11 // pred_region
        _
      $region16: #{tpu_custom_call.1} parent=11 // pred_fallthru
        _
      // Predicated region
      $region17: #{tpu_custom_call.1} parent=11 // pred_check
        %p209 = pneg %p81
      $region18: #{tpu_custom_call.1} parent=11 // pred_check_branch
        %211 = sbr.rel (%p209) target = $region20
      $region19: #{tpu_custom_call.1} parent=11 // pred_region
        _
      $region20: #{tpu_custom_call.1} parent=11 // pred_fallthru
        _
      // Predicated region
      $region21: #{tpu_custom_call.1} parent=11 // pred_check
        %p212 = pneg %p102
      $region22: #{tpu_custom_call.1} parent=11 // pred_check_branch
        %214 = sbr.rel (%p212) target = $region24
      $region23: #{tpu_custom_call.1} parent=11 // pred_region
        _
      $region24: #{tpu_custom_call.1} parent=11 // pred_fallthru
        _
      // Predicated region
      $region25: #{tpu_custom_call.1} parent=11 // pred_check
        %p215 = pneg %p123
      $region26: #{tpu_custom_call.1} parent=11 // pred_check_branch
        %217 = sbr.rel (%p215) target = $region28
      $region27: #{tpu_custom_call.1} parent=11 // pred_region
        _
      $region28: #{tpu_custom_call.1} parent=11 // pred_fallthru
        _
      // Predicated region
      $region29: #{tpu_custom_call.1} parent=11 // pred_check
        %p218 = pneg %p144
      $region30: #{tpu_custom_call.1} parent=11 // pred_check_branch
        %220 = sbr.rel (%p218) target = $region32
      $region31: #{tpu_custom_call.1} parent=11 // pred_region
        _
      $region32: #{tpu_custom_call.1} parent=11 // pred_fallthru
        _
      // Predicated region
      $region33: #{tpu_custom_call.1} parent=11 // pred_check
        %p221 = pneg %p165
      $region34: #{tpu_custom_call.1} parent=11 // pred_check_branch
        %223 = sbr.rel (%p221) target = $region36
      $region35: #{tpu_custom_call.1} parent=11 // pred_region
        _
      $region36: #{tpu_custom_call.1} parent=11 // pred_fallthru
        _
    $region12: #{tpu_custom_call.1} parent=5 // pred_fallthru
      _
    %p224 = scmp.lt.s32.totalorder %s13, 2
    // Predicated region
    $region37: #{tpu_custom_call.1} parent=5 // pred_check
      %p225 = pneg %p224
    $region38: #{tpu_custom_call.1} parent=5 // pred_check_branch
      %227 = sbr.rel (%p225) target = $region40
    $region39: #{tpu_custom_call.1} parent=5 // pred_region
      // Predicated region
      $region41: #{tpu_custom_call.1} parent=39 // pred_check
        %p228 = pneg %p33
      $region42: #{tpu_custom_call.1} parent=39 // pred_check_branch
        %230 = sbr.rel (%p228) target = $region44
      $region43: #{tpu_custom_call.1} parent=39 // pred_region
        %p231 = scmp.lt.s32.totalorder %s13, 1
        %s232 = scalar_select %p231, %s13, 1
        %s233 = smul.addr %s232, 32
        %s234 = smul.addr %s233, 8
        %s235 = scalar_lea.vmem %s0, %s234
      $region44: #{tpu_custom_call.1} parent=39 // pred_fallthru
        _
    $region40: #{tpu_custom_call.1} parent=5 // pred_fallthru
      _
    %p236 = scmp.le.s32.totalorder 1, %s13
    %p237 = scmp.lt.s32.totalorder %s13, 3
    %p238 = pnand %p236, %p237
    %p239 = pneg %p238
    // Predicated region
    $region45: #{tpu_custom_call.1} parent=5 // pred_check
      _
    $region46: #{tpu_custom_call.1} parent=5 // pred_check_branch
      %241 = sbr.rel (%p238) target = $region48
    $region47: #{tpu_custom_call.1} parent=5 // pred_region
      %s242 = ssub.s32 %s13, 1
      %p243 = scmp.lt.s32.totalorder %s18, 1
      %s244 = scalar_select %p243, %s18, 1
      %s245 = smul.addr %s244, 32
      %s246 = smul.addr %s245, 8
      %s247 = scalar_lea.vmem %s0, %s246
      %p248 = pneg %p39
      %p249 = pneg %p36
      %p250 = pneg %p60
      %p251 = pneg %p57
      %p252 = pneg %p81
      %p253 = pneg %p78
      %p254 = pneg %p102
      %p255 = pneg %p99
      %p256 = pneg %p123
      %p257 = pneg %p120
      %p258 = pneg %p144
      %p259 = pneg %p141
      %p260 = pneg %p165
      %p261 = pneg %p162
      %p262 = pneg %p191
      %p263 = pneg %p188
      %p264 = scmp.lt.s32.totalorder %s18, 1
      %s265 = scalar_select %p264, %s18, 1
      %s266 = smul.addr %s265, 32
      %s267 = smul.addr %s266, 8
      %s268 = scalar_lea.vmem %s7, %s267
      %p269 = scmp.lt.s32.totalorder %s18, 1
      %s270 = scalar_select %p269, %s18, 1
      %s271 = smul.addr %s270, 32
      %s272 = smul.addr %s271, 8
      %s273 = scalar_lea.vmem %s0, %s272
      %p274 = scmp.lt.s32.totalorder %s18, 1
      %s275 = scalar_select %p274, %s18, 1
      %s276 = smul.addr %s275, 32
      %s277 = smul.addr %s276, 8
      %s278 = scalar_lea.vmem %s7, %s277
      %v280 = vld [vmem:[%s273] sm:$0xff]
      %v281 = vld [vmem:[%s273 + $0x8] sm:$0xff]
      %v282 = vld [vmem:[%s273 + $0x10] sm:$0xff]
      %v283 = vld [vmem:[%s273 + $0x18] sm:$0xff]
      %v284 = vld [vmem:[%s273 + $0x20] sm:$0xff]
      %v285 = vld [vmem:[%s273 + $0x28] sm:$0xff]
      %v286 = vld [vmem:[%s273 + $0x30] sm:$0xff]
      %v287 = vld [vmem:[%s273 + $0x38] sm:$0xff]
      %v288 = vld [vmem:[%s273 + $0x40] sm:$0xff]
      %v289 = vld [vmem:[%s273 + $0x48] sm:$0xff]
      %v290 = vld [vmem:[%s273 + $0x50] sm:$0xff]
      %v291 = vld [vmem:[%s273 + $0x58] sm:$0xff]
      %v292 = vld [vmem:[%s273 + $0x60] sm:$0xff]
      %v293 = vld [vmem:[%s273 + $0x68] sm:$0xff]
      %v294 = vld [vmem:[%s273 + $0x70] sm:$0xff]
      %v295 = vld [vmem:[%s273 + $0x78] sm:$0xff]
      %v296 = vld [vmem:[%s273 + $0x80] sm:$0xff]
      %v297 = vld [vmem:[%s273 + $0x88] sm:$0xff]
      %v298 = vld [vmem:[%s273 + $0x90] sm:$0xff]
      %v299 = vld [vmem:[%s273 + $0x98] sm:$0xff]
      %v300 = vld [vmem:[%s273 + $0xa0] sm:$0xff]
      %v301 = vld [vmem:[%s273 + $0xa8] sm:$0xff]
      %v302 = vld [vmem:[%s273 + $0xb0] sm:$0xff]
      %v303 = vld [vmem:[%s273 + $0xb8] sm:$0xff]
      %v304 = vld [vmem:[%s273 + $0xc0] sm:$0xff]
      %v305 = vld [vmem:[%s273 + $0xc8] sm:$0xff]
      %v306 = vld [vmem:[%s273 + $0xd0] sm:$0xff]
      %v307 = vld [vmem:[%s273 + $0xd8] sm:$0xff]
      %v308 = vld [vmem:[%s273 + $0xe0] sm:$0xff]
      %v309 = vld [vmem:[%s273 + $0xe8] sm:$0xff]
      %v310 = vld [vmem:[%s273 + $0xf0] sm:$0xff]
      %v311 = vld [vmem:[%s273 + $0xf8] sm:$0xff]
      %v312 = vlaneseq
      %v313 = vshrl.u32 %v312, 7
      %v314 = vadd.s32 %v313, 8
      %v315 = vadd.s32 %v313, 16
      %v316 = vadd.s32 %v313, 24
      %v317 = vadd.s32 %v313, 32
      %v318 = vadd.s32 %v313, 40
      %v319 = vadd.s32 %v313, 48
      %v320 = vadd.s32 %v313, 56
      %v321 = vadd.s32 %v313, 64
      %v322 = vadd.s32 %v313, 72
      %v323 = vadd.s32 %v313, 80
      %v324 = vadd.s32 %v313, 88
      %v325 = vadd.s32 %v313, 96
      %v326 = vadd.s32 %v313, 104
      %v327 = vadd.s32 %v313, 112
      %v328 = vadd.s32 %v313, 120
      %v329 = vadd.s32 %v313, 128
      %v330 = vadd.s32 %v313, 136
      %v331 = vadd.s32 %v313, 144
      %v332 = vadd.s32 %v313, 152
      %v333 = vadd.s32 %v313, 160
      %v334 = vadd.s32 %v313, 168
      %v335 = vadd.s32 %v313, 176
      %v336 = vadd.s32 %v313, 184
      %v337 = vadd.s32 %v313, 192
      %v338 = vadd.s32 %v313, 200
      %v339 = vadd.s32 %v313, 208
      %v340 = vadd.s32 %v313, 216
      %v341 = vadd.s32 %v313, 224
      %v342 = vadd.s32 %v313, 232
      %v343 = vadd.s32 %v313, 240
      %v344 = vadd.s32 %v313, 248
      %v345 = vand.u32 %v313, 15
      %v346 = vand.u32 %v314, 15
      %v347 = vand.u32 %v315, 15
      %v348 = vand.u32 %v316, 15
      %v349 = vand.u32 %v317, 15
      %v350 = vand.u32 %v318, 15
      %v351 = vand.u32 %v319, 15
      %v352 = vand.u32 %v320, 15
      %v353 = vand.u32 %v321, 15
      %v354 = vand.u32 %v322, 15
      %v355 = vand.u32 %v323, 15
      %v356 = vand.u32 %v324, 15
      %v357 = vand.u32 %v325, 15
      %v358 = vand.u32 %v326, 15
      %v359 = vand.u32 %v327, 15
      %v360 = vand.u32 %v328, 15
      %v361 = vand.u32 %v329, 15
      %v362 = vand.u32 %v330, 15
      %v363 = vand.u32 %v331, 15
      %v364 = vand.u32 %v332, 15
      %v365 = vand.u32 %v333, 15
      %v366 = vand.u32 %v334, 15
      %v367 = vand.u32 %v335, 15
      %v368 = vand.u32 %v336, 15
      %v369 = vand.u32 %v337, 15
      %v370 = vand.u32 %v338, 15
      %v371 = vand.u32 %v339, 15
      %v372 = vand.u32 %v340, 15
      %v373 = vand.u32 %v341, 15
      %v374 = vand.u32 %v342, 15
      %v375 = vand.u32 %v343, 15
      %v376 = vand.u32 %v344, 15
      %vm377 = vcmp.eq.s32.totalorder %v345, 0
      %vm378 = vcmp.eq.s32.totalorder %v346, 0
      %vm379 = vcmp.eq.s32.totalorder %v347, 0
      %vm380 = vcmp.eq.s32.totalorder %v348, 0
      %vm381 = vcmp.eq.s32.totalorder %v349, 0
      %vm382 = vcmp.eq.s32.totalorder %v350, 0
      %vm383 = vcmp.eq.s32.totalorder %v351, 0
      %vm384 = vcmp.eq.s32.totalorder %v352, 0
      %vm385 = vcmp.eq.s32.totalorder %v353, 0
      %vm386 = vcmp.eq.s32.totalorder %v354, 0
      %vm387 = vcmp.eq.s32.totalorder %v355, 0
      %vm388 = vcmp.eq.s32.totalorder %v356, 0
      %vm389 = vcmp.eq.s32.totalorder %v357, 0
      %vm390 = vcmp.eq.s32.totalorder %v358, 0
      %vm391 = vcmp.eq.s32.totalorder %v359, 0
      %vm392 = vcmp.eq.s32.totalorder %v360, 0
      %vm393 = vcmp.eq.s32.totalorder %v361, 0
      %vm394 = vcmp.eq.s32.totalorder %v362, 0
      %vm395 = vcmp.eq.s32.totalorder %v363, 0
      %vm396 = vcmp.eq.s32.totalorder %v364, 0
      %vm397 = vcmp.eq.s32.totalorder %v365, 0
      %vm398 = vcmp.eq.s32.totalorder %v366, 0
      %vm399 = vcmp.eq.s32.totalorder %v367, 0
      %vm400 = vcmp.eq.s32.totalorder %v368, 0
      %vm401 = vcmp.eq.s32.totalorder %v369, 0
      %vm402 = vcmp.eq.s32.totalorder %v370, 0
      %vm403 = vcmp.eq.s32.totalorder %v371, 0
      %vm404 = vcmp.eq.s32.totalorder %v372, 0
      %vm405 = vcmp.eq.s32.totalorder %v373, 0
      %vm406 = vcmp.eq.s32.totalorder %v374, 0
      %vm407 = vcmp.eq.s32.totalorder %v375, 0
      %vm408 = vcmp.eq.s32.totalorder %v376, 0
      %vm409 = vcmp.eq.s32.totalorder %v345, 15
      %vm410 = vcmp.eq.s32.totalorder %v346, 15
      %vm411 = vcmp.eq.s32.totalorder %v347, 15
      %vm412 = vcmp.eq.s32.totalorder %v348, 15
      %vm413 = vcmp.eq.s32.totalorder %v349, 15
      %vm414 = vcmp.eq.s32.totalorder %v350, 15
      %vm415 = vcmp.eq.s32.totalorder %v351, 15
      %vm416 = vcmp.eq.s32.totalorder %v352, 15
      %vm417 = vcmp.eq.s32.totalorder %v353, 15
      %vm418 = vcmp.eq.s32.totalorder %v354, 15
      %vm419 = vcmp.eq.s32.totalorder %v355, 15
      %vm420 = vcmp.eq.s32.totalorder %v356, 15
      %vm421 = vcmp.eq.s32.totalorder %v357, 15
      %vm422 = vcmp.eq.s32.totalorder %v358, 15
      %vm423 = vcmp.eq.s32.totalorder %v359, 15
      %vm424 = vcmp.eq.s32.totalorder %v360, 15
      %vm425 = vcmp.eq.s32.totalorder %v361, 15
      %vm426 = vcmp.eq.s32.totalorder %v362, 15
      %vm427 = vcmp.eq.s32.totalorder %v363, 15
      %vm428 = vcmp.eq.s32.totalorder %v364, 15
      %vm429 = vcmp.eq.s32.totalorder %v365, 15
      %vm430 = vcmp.eq.s32.totalorder %v366, 15
      %vm431 = vcmp.eq.s32.totalorder %v367, 15
      %vm432 = vcmp.eq.s32.totalorder %v368, 15
      %vm433 = vcmp.eq.s32.totalorder %v369, 15
      %vm434 = vcmp.eq.s32.totalorder %v370, 15
      %vm435 = vcmp.eq.s32.totalorder %v371, 15
      %vm436 = vcmp.eq.s32.totalorder %v372, 15
      %vm437 = vcmp.eq.s32.totalorder %v373, 15
      %vm438 = vcmp.eq.s32.totalorder %v374, 15
      %vm439 = vcmp.eq.s32.totalorder %v375, 15
      %vm440 = vcmp.eq.s32.totalorder %v376, 15
      %v441 = vrot.slane %v280, 7
      %v442 = vrot.slane %v281, 7
      %v443 = vrot.slane %v282, 7
      %v444 = vrot.slane %v283, 7
      %v445 = vrot.slane %v284, 7
      %v446 = vrot.slane %v285, 7
      %v447 = vrot.slane %v286, 7
      %v448 = vrot.slane %v287, 7
      %v449 = vrot.slane %v288, 7
      %v450 = vrot.slane %v289, 7
      %v451 = vrot.slane %v290, 7
      %v452 = vrot.slane %v291, 7
      %v453 = vrot.slane %v292, 7
      %v454 = vrot.slane %v293, 7
      %v455 = vrot.slane %v294, 7
      %v456 = vrot.slane %v295, 7
      %v457 = vrot.slane %v296, 7
      %v458 = vrot.slane %v297, 7
      %v459 = vrot.slane %v298, 7
      %v460 = vrot.slane %v299, 7
      %v461 = vrot.slane %v300, 7
      %v462 = vrot.slane %v301, 7
      %v463 = vrot.slane %v302, 7
      %v464 = vrot.slane %v303, 7
      %v465 = vrot.slane %v304, 7
      %v466 = vrot.slane %v305, 7
      %v467 = vrot.slane %v306, 7
      %v468 = vrot.slane %v307, 7
      %v469 = vrot.slane %v308, 7
      %v470 = vrot.slane %v309, 7
      %v471 = vrot.slane %v310, 7
      %v472 = vrot.slane %v311, 7
      %vm473 = vcmp.lt.s32.totalorder %v313, 1
      %v474 = vsel %vm473, %v471, %v472
      %v475 = vsel %vm473, %v470, %v471
      %v476 = vsel %vm473, %v469, %v470
      %v477 = vsel %vm473, %v468, %v469
      %v478 = vsel %vm473, %v467, %v468
      %v479 = vsel %vm473, %v466, %v467
      %v480 = vsel %vm473, %v465, %v466
      %v481 = vsel %vm473, %v464, %v465
      %v482 = vsel %vm473, %v463, %v464
      %v483 = vsel %vm473, %v462, %v463
      %v484 = vsel %vm473, %v461, %v462
      %v485 = vsel %vm473, %v460, %v461
      %v486 = vsel %vm473, %v459, %v460
      %v487 = vsel %vm473, %v458, %v459
      %v488 = vsel %vm473, %v457, %v458
      %v489 = vsel %vm473, %v456, %v457
      %v490 = vsel %vm473, %v455, %v456
      %v491 = vsel %vm473, %v454, %v455
      %v492 = vsel %vm473, %v453, %v454
      %v493 = vsel %vm473, %v452, %v453
      %v494 = vsel %vm473, %v451, %v452
      %v495 = vsel %vm473, %v450, %v451
      %v496 = vsel %vm473, %v449, %v450
      %v497 = vsel %vm473, %v448, %v449
      %v498 = vsel %vm473, %v447, %v448
      %v499 = vsel %vm473, %v446, %v447
      %v500 = vsel %vm473, %v445, %v446
      %v501 = vsel %vm473, %v444, %v445
      %v502 = vsel %vm473, %v443, %v444
      %v503 = vsel %vm473, %v442, %v443
      %v504 = vsel %vm473, %v441, %v442
      %v505 = vsel %vm473, %v472, %v441
      %v506 = vsel %vm377, 1, 0
      %v507 = vsel %vm378, 1, 0
      %v508 = vsel %vm379, 1, 0
      %v509 = vsel %vm380, 1, 0
      %v510 = vsel %vm381, 1, 0
      %v511 = vsel %vm382, 1, 0
      %v512 = vsel %vm383, 1, 0
      %v513 = vsel %vm384, 1, 0
      %v514 = vsel %vm385, 1, 0
      %v515 = vsel %vm386, 1, 0
      %v516 = vsel %vm387, 1, 0
      %v517 = vsel %vm388, 1, 0
      %v518 = vsel %vm389, 1, 0
      %v519 = vsel %vm390, 1, 0
      %v520 = vsel %vm391, 1, 0
      %v521 = vsel %vm392, 1, 0
      %v522 = vsel %vm393, 1, 0
      %v523 = vsel %vm394, 1, 0
      %v524 = vsel %vm395, 1, 0
      %v525 = vsel %vm396, 1, 0
      %v526 = vsel %vm397, 1, 0
      %v527 = vsel %vm398, 1, 0
      %v528 = vsel %vm399, 1, 0
      %v529 = vsel %vm400, 1, 0
      %v530 = vsel %vm401, 1, 0
      %v531 = vsel %vm402, 1, 0
      %v532 = vsel %vm403, 1, 0
      %v533 = vsel %vm404, 1, 0
      %v534 = vsel %vm405, 1, 0
      %v535 = vsel %vm406, 1, 0
      %v536 = vsel %vm407, 1, 0
      %v537 = vsel %vm408, 1, 0
      %vm538 = vcmp.eq.s32.totalorder %v506, 1
      %vm539 = vcmp.eq.s32.totalorder %v507, 1
      %vm540 = vcmp.eq.s32.totalorder %v508, 1
      %vm541 = vcmp.eq.s32.totalorder %v509, 1
      %vm542 = vcmp.eq.s32.totalorder %v510, 1
      %vm543 = vcmp.eq.s32.totalorder %v511, 1
      %vm544 = vcmp.eq.s32.totalorder %v512, 1
      %vm545 = vcmp.eq.s32.totalorder %v513, 1
      %vm546 = vcmp.eq.s32.totalorder %v514, 1
      %vm547 = vcmp.eq.s32.totalorder %v515, 1
      %vm548 = vcmp.eq.s32.totalorder %v516, 1
      %vm549 = vcmp.eq.s32.totalorder %v517, 1
      %vm550 = vcmp.eq.s32.totalorder %v518, 1
      %vm551 = vcmp.eq.s32.totalorder %v519, 1
      %vm552 = vcmp.eq.s32.totalorder %v520, 1
      %vm553 = vcmp.eq.s32.totalorder %v521, 1
      %vm554 = vcmp.eq.s32.totalorder %v522, 1
      %vm555 = vcmp.eq.s32.totalorder %v523, 1
      %vm556 = vcmp.eq.s32.totalorder %v524, 1
      %vm557 = vcmp.eq.s32.totalorder %v525, 1
      %vm558 = vcmp.eq.s32.totalorder %v526, 1
      %vm559 = vcmp.eq.s32.totalorder %v527, 1
      %vm560 = vcmp.eq.s32.totalorder %v528, 1
      %vm561 = vcmp.eq.s32.totalorder %v529, 1
      %vm562 = vcmp.eq.s32.totalorder %v530, 1
      %vm563 = vcmp.eq.s32.totalorder %v531, 1
      %vm564 = vcmp.eq.s32.totalorder %v532, 1
      %vm565 = vcmp.eq.s32.totalorder %v533, 1
      %vm566 = vcmp.eq.s32.totalorder %v534, 1
      %vm567 = vcmp.eq.s32.totalorder %v535, 1
      %vm568 = vcmp.eq.s32.totalorder %v536, 1
      %vm569 = vcmp.eq.s32.totalorder %v537, 1
      %v570 = vsel %vm538, 0.0, %v505
      %v571 = vsel %vm539, 0.0, %v504
      %v572 = vsel %vm540, 0.0, %v503
      %v573 = vsel %vm541, 0.0, %v502
      %v574 = vsel %vm542, 0.0, %v501
      %v575 = vsel %vm543, 0.0, %v500
      %v576 = vsel %vm544, 0.0, %v499
      %v577 = vsel %vm545, 0.0, %v498
      %v578 = vsel %vm546, 0.0, %v497
      %v579 = vsel %vm547, 0.0, %v496
      %v580 = vsel %vm548, 0.0, %v495
      %v581 = vsel %vm549, 0.0, %v494
      %v582 = vsel %vm550, 0.0, %v493
      %v583 = vsel %vm551, 0.0, %v492
      %v584 = vsel %vm552, 0.0, %v491
      %v585 = vsel %vm553, 0.0, %v490
      %v586 = vsel %vm554, 0.0, %v489
      %v587 = vsel %vm555, 0.0, %v488
      %v588 = vsel %vm556, 0.0, %v487
      %v589 = vsel %vm557, 0.0, %v486
      %v590 = vsel %vm558, 0.0, %v485
      %v591 = vsel %vm559, 0.0, %v484
      %v592 = vsel %vm560, 0.0, %v483
      %v593 = vsel %vm561, 0.0, %v482
      %v594 = vsel %vm562, 0.0, %v481
      %v595 = vsel %vm563, 0.0, %v480
      %v596 = vsel %vm564, 0.0, %v479
      %v597 = vsel %vm565, 0.0, %v478
      %v598 = vsel %vm566, 0.0, %v477
      %v599 = vsel %vm567, 0.0, %v476
      %v600 = vsel %vm568, 0.0, %v475
      %v601 = vsel %vm569, 0.0, %v474
      %v602 = vrot.slane %v280, 1
      %v603 = vrot.slane %v281, 1
      %v604 = vrot.slane %v282, 1
      %v605 = vrot.slane %v283, 1
      %v606 = vrot.slane %v284, 1
      %v607 = vrot.slane %v285, 1
      %v608 = vrot.slane %v286, 1
      %v609 = vrot.slane %v287, 1
      %v610 = vrot.slane %v288, 1
      %v611 = vrot.slane %v289, 1
      %v612 = vrot.slane %v290, 1
      %v613 = vrot.slane %v291, 1
      %v614 = vrot.slane %v292, 1
      %v615 = vrot.slane %v293, 1
      %v616 = vrot.slane %v294, 1
      %v617 = vrot.slane %v295, 1
      %v618 = vrot.slane %v296, 1
      %v619 = vrot.slane %v297, 1
      %v620 = vrot.slane %v298, 1
      %v621 = vrot.slane %v299, 1
      %v622 = vrot.slane %v300, 1
      %v623 = vrot.slane %v301, 1
      %v624 = vrot.slane %v302, 1
      %v625 = vrot.slane %v303, 1
      %v626 = vrot.slane %v304, 1
      %v627 = vrot.slane %v305, 1
      %v628 = vrot.slane %v306, 1
      %v629 = vrot.slane %v307, 1
      %v630 = vrot.slane %v308, 1
      %v631 = vrot.slane %v309, 1
      %v632 = vrot.slane %v310, 1
      %v633 = vrot.slane %v311, 1
      %vm634 = vcmp.lt.s32.totalorder %v313, 7
      %v635 = vsel %vm634, %v632, %v633
      %v636 = vsel %vm634, %v631, %v632
      %v637 = vsel %vm634, %v630, %v631
      %v638 = vsel %vm634, %v629, %v630
      %v639 = vsel %vm634, %v628, %v629
      %v640 = vsel %vm634, %v627, %v628
      %v641 = vsel %vm634, %v626, %v627
      %v642 = vsel %vm634, %v625, %v626
      %v643 = vsel %vm634, %v624, %v625
      %v644 = vsel %vm634, %v623, %v624
      %v645 = vsel %vm634, %v622, %v623
      %v646 = vsel %vm634, %v621, %v622
      %v647 = vsel %vm634, %v620, %v621
      %v648 = vsel %vm634, %v619, %v620
      %v649 = vsel %vm634, %v618, %v619
      %v650 = vsel %vm634, %v617, %v618
      %v651 = vsel %vm634, %v616, %v617
      %v652 = vsel %vm634, %v615, %v616
      %v653 = vsel %vm634, %v614, %v615
      %v654 = vsel %vm634, %v613, %v614
      %v655 = vsel %vm634, %v612, %v613
      %v656 = vsel %vm634, %v611, %v612
      %v657 = vsel %vm634, %v610, %v611
      %v658 = vsel %vm634, %v609, %v610
      %v659 = vsel %vm634, %v608, %v609
      %v660 = vsel %vm634, %v607, %v608
      %v661 = vsel %vm634, %v606, %v607
      %v662 = vsel %vm634, %v605, %v606
      %v663 = vsel %vm634, %v604, %v605
      %v664 = vsel %vm634, %v603, %v604
      %v665 = vsel %vm634, %v602, %v603
      %v666 = vsel %vm634, %v633, %v602
      %v667 = vsel %vm409, 1, 0
      %v668 = vsel %vm410, 1, 0
      %v669 = vsel %vm411, 1, 0
      %v670 = vsel %vm412, 1, 0
      %v671 = vsel %vm413, 1, 0
      %v672 = vsel %vm414, 1, 0
      %v673 = vsel %vm415, 1, 0
      %v674 = vsel %vm416, 1, 0
      %v675 = vsel %vm417, 1, 0
      %v676 = vsel %vm418, 1, 0
      %v677 = vsel %vm419, 1, 0
      %v678 = vsel %vm420, 1, 0
      %v679 = vsel %vm421, 1, 0
      %v680 = vsel %vm422, 1, 0
      %v681 = vsel %vm423, 1, 0
      %v682 = vsel %vm424, 1, 0
      %v683 = vsel %vm425, 1, 0
      %v684 = vsel %vm426, 1, 0
      %v685 = vsel %vm427, 1, 0
      %v686 = vsel %vm428, 1, 0
      %v687 = vsel %vm429, 1, 0
      %v688 = vsel %vm430, 1, 0
      %v689 = vsel %vm431, 1, 0
      %v690 = vsel %vm432, 1, 0
      %v691 = vsel %vm433, 1, 0
      %v692 = vsel %vm434, 1, 0
      %v693 = vsel %vm435, 1, 0
      %v694 = vsel %vm436, 1, 0
      %v695 = vsel %vm437, 1, 0
      %v696 = vsel %vm438, 1, 0
      %v697 = vsel %vm439, 1, 0
      %v698 = vsel %vm440, 1, 0
      %vm699 = vcmp.eq.s32.totalorder %v667, 1
      %vm700 = vcmp.eq.s32.totalorder %v668, 1
      %vm701 = vcmp.eq.s32.totalorder %v669, 1
      %vm702 = vcmp.eq.s32.totalorder %v670, 1
      %vm703 = vcmp.eq.s32.totalorder %v671, 1
      %vm704 = vcmp.eq.s32.totalorder %v672, 1
      %vm705 = vcmp.eq.s32.totalorder %v673, 1
      %vm706 = vcmp.eq.s32.totalorder %v674, 1
      %vm707 = vcmp.eq.s32.totalorder %v675, 1
      %vm708 = vcmp.eq.s32.totalorder %v676, 1
      %vm709 = vcmp.eq.s32.totalorder %v677, 1
      %vm710 = vcmp.eq.s32.totalorder %v678, 1
      %vm711 = vcmp.eq.s32.totalorder %v679, 1
      %vm712 = vcmp.eq.s32.totalorder %v680, 1
      %vm713 = vcmp.eq.s32.totalorder %v681, 1
      %vm714 = vcmp.eq.s32.totalorder %v682, 1
      %vm715 = vcmp.eq.s32.totalorder %v683, 1
      %vm716 = vcmp.eq.s32.totalorder %v684, 1
      %vm717 = vcmp.eq.s32.totalorder %v685, 1
      %vm718 = vcmp.eq.s32.totalorder %v686, 1
      %vm719 = vcmp.eq.s32.totalorder %v687, 1
      %vm720 = vcmp.eq.s32.totalorder %v688, 1
      %vm721 = vcmp.eq.s32.totalorder %v689, 1
      %vm722 = vcmp.eq.s32.totalorder %v690, 1
      %vm723 = vcmp.eq.s32.totalorder %v691, 1
      %vm724 = vcmp.eq.s32.totalorder %v692, 1
      %vm725 = vcmp.eq.s32.totalorder %v693, 1
      %vm726 = vcmp.eq.s32.totalorder %v694, 1
      %vm727 = vcmp.eq.s32.totalorder %v695, 1
      %vm728 = vcmp.eq.s32.totalorder %v696, 1
      %vm729 = vcmp.eq.s32.totalorder %v697, 1
      %vm730 = vcmp.eq.s32.totalorder %v698, 1
      %v731 = vsel %vm699, 0.0, %v665
      %v732 = vsel %vm700, 0.0, %v664
      %v733 = vsel %vm701, 0.0, %v663
      %v734 = vsel %vm702, 0.0, %v662
      %v735 = vsel %vm703, 0.0, %v661
      %v736 = vsel %vm704, 0.0, %v660
      %v737 = vsel %vm705, 0.0, %v659
      %v738 = vsel %vm706, 0.0, %v658
      %v739 = vsel %vm707, 0.0, %v657
      %v740 = vsel %vm708, 0.0, %v656
      %v741 = vsel %vm709, 0.0, %v655
      %v742 = vsel %vm710, 0.0, %v654
      %v743 = vsel %vm711, 0.0, %v653
      %v744 = vsel %vm712, 0.0, %v652
      %v745 = vsel %vm713, 0.0, %v651
      %v746 = vsel %vm714, 0.0, %v650
      %v747 = vsel %vm715, 0.0, %v649
      %v748 = vsel %vm716, 0.0, %v648
      %v749 = vsel %vm717, 0.0, %v647
      %v750 = vsel %vm718, 0.0, %v646
      %v751 = vsel %vm719, 0.0, %v645
      %v752 = vsel %vm720, 0.0, %v644
      %v753 = vsel %vm721, 0.0, %v643
      %v754 = vsel %vm722, 0.0, %v642
      %v755 = vsel %vm723, 0.0, %v641
      %v756 = vsel %vm724, 0.0, %v640
      %v757 = vsel %vm725, 0.0, %v639
      %v758 = vsel %vm726, 0.0, %v638
      %v759 = vsel %vm727, 0.0, %v637
      %v760 = vsel %vm728, 0.0, %v636
      %v761 = vsel %vm729, 0.0, %v635
      %v762 = vsel %vm730, 0.0, %v666
      %795 = vrot.lane.b32.xlu0 %v280, 4
      %v796 = vpop.permute.xlu0 %795
      %797 = vrot.lane.b32.xlu0 %v281, 4
      %v798 = vpop.permute.xlu0 %797
      %799 = vrot.lane.b32.xlu0 %v282, 4
      %v800 = vpop.permute.xlu0 %799
      %801 = vrot.lane.b32.xlu0 %v283, 4
      %v802 = vpop.permute.xlu0 %801
      %803 = vrot.lane.b32.xlu0 %v284, 4
      %v804 = vpop.permute.xlu0 %803
      %805 = vrot.lane.b32.xlu0 %v285, 4
      %v806 = vpop.permute.xlu0 %805
      %807 = vrot.lane.b32.xlu0 %v286, 4
      %v808 = vpop.permute.xlu0 %807
      %809 = vrot.lane.b32.xlu0 %v287, 4
      %v810 = vpop.permute.xlu0 %809
      %811 = vrot.lane.b32.xlu0 %v288, 4
      %v812 = vpop.permute.xlu0 %811
      %813 = vrot.lane.b32.xlu0 %v289, 4
      %v814 = vpop.permute.xlu0 %813
      %815 = vrot.lane.b32.xlu0 %v290, 4
      %v816 = vpop.permute.xlu0 %815
      %817 = vrot.lane.b32.xlu0 %v291, 4
      %v818 = vpop.permute.xlu0 %817
      %819 = vrot.lane.b32.xlu0 %v292, 4
      %v820 = vpop.permute.xlu0 %819
      %821 = vrot.lane.b32.xlu0 %v293, 4
      %v822 = vpop.permute.xlu0 %821
      %823 = vrot.lane.b32.xlu0 %v294, 4
      %v824 = vpop.permute.xlu0 %823
      %825 = vrot.lane.b32.xlu0 %v295, 4
      %v826 = vpop.permute.xlu0 %825
      %827 = vrot.lane.b32.xlu0 %v296, 4
      %v828 = vpop.permute.xlu0 %827
      %829 = vrot.lane.b32.xlu0 %v297, 4
      %v830 = vpop.permute.xlu0 %829
      %831 = vrot.lane.b32.xlu0 %v298, 4
      %v832 = vpop.permute.xlu0 %831
      %833 = vrot.lane.b32.xlu0 %v299, 4
      %v834 = vpop.permute.xlu0 %833
      %835 = vrot.lane.b32.xlu0 %v300, 4
      %v836 = vpop.permute.xlu0 %835
      %837 = vrot.lane.b32.xlu0 %v301, 4
      %v838 = vpop.permute.xlu0 %837
      %839 = vrot.lane.b32.xlu0 %v302, 4
      %v840 = vpop.permute.xlu0 %839
      %841 = vrot.lane.b32.xlu0 %v303, 4
      %v842 = vpop.permute.xlu0 %841
      %843 = vrot.lane.b32.xlu0 %v304, 4
      %v844 = vpop.permute.xlu0 %843
      %845 = vrot.lane.b32.xlu0 %v305, 4
      %v846 = vpop.permute.xlu0 %845
      %847 = vrot.lane.b32.xlu0 %v306, 4
      %v848 = vpop.permute.xlu0 %847
      %849 = vrot.lane.b32.xlu0 %v307, 4
      %v850 = vpop.permute.xlu0 %849
      %851 = vrot.lane.b32.xlu0 %v308, 4
      %v852 = vpop.permute.xlu0 %851
      %853 = vrot.lane.b32.xlu0 %v309, 4
      %v854 = vpop.permute.xlu0 %853
      %855 = vrot.lane.b32.xlu0 %v310, 4
      %v856 = vpop.permute.xlu0 %855
      %857 = vrot.lane.b32.xlu0 %v311, 4
      %v858 = vpop.permute.xlu0 %857
      %923 = vrot.lane.b32.xlu0 %v731, 8
      %v924 = vpop.permute.xlu0 %923
      %925 = vrot.lane.b32.xlu0 %v732, 8
      %v926 = vpop.permute.xlu0 %925
      %927 = vrot.lane.b32.xlu0 %v733, 8
      %v928 = vpop.permute.xlu0 %927
      %929 = vrot.lane.b32.xlu0 %v734, 8
      %v930 = vpop.permute.xlu0 %929
      %931 = vrot.lane.b32.xlu0 %v735, 8
      %v932 = vpop.permute.xlu0 %931
      %933 = vrot.lane.b32.xlu0 %v736, 8
      %v934 = vpop.permute.xlu0 %933
      %935 = vrot.lane.b32.xlu0 %v737, 8
      %v936 = vpop.permute.xlu0 %935
      %937 = vrot.lane.b32.xlu0 %v738, 8
      %v938 = vpop.permute.xlu0 %937
      %939 = vrot.lane.b32.xlu0 %v739, 8
      %v940 = vpop.permute.xlu0 %939
      %941 = vrot.lane.b32.xlu0 %v740, 8
      %v942 = vpop.permute.xlu0 %941
      %943 = vrot.lane.b32.xlu0 %v741, 8
      %v944 = vpop.permute.xlu0 %943
      %945 = vrot.lane.b32.xlu0 %v742, 8
      %v946 = vpop.permute.xlu0 %945
      %947 = vrot.lane.b32.xlu0 %v743, 8
      %v948 = vpop.permute.xlu0 %947
      %949 = vrot.lane.b32.xlu0 %v744, 8
      %v950 = vpop.permute.xlu0 %949
      %951 = vrot.lane.b32.xlu0 %v745, 8
      %v952 = vpop.permute.xlu0 %951
      %953 = vrot.lane.b32.xlu0 %v746, 8
      %v954 = vpop.permute.xlu0 %953
      %955 = vrot.lane.b32.xlu0 %v747, 8
      %v956 = vpop.permute.xlu0 %955
      %957 = vrot.lane.b32.xlu0 %v748, 8
      %v958 = vpop.permute.xlu0 %957
      %959 = vrot.lane.b32.xlu0 %v749, 8
      %v960 = vpop.permute.xlu0 %959
      %961 = vrot.lane.b32.xlu0 %v750, 8
      %v962 = vpop.permute.xlu0 %961
      %963 = vrot.lane.b32.xlu0 %v751, 8
      %v964 = vpop.permute.xlu0 %963
      %965 = vrot.lane.b32.xlu0 %v752, 8
      %v966 = vpop.permute.xlu0 %965
      %967 = vrot.lane.b32.xlu0 %v753, 8
      %v968 = vpop.permute.xlu0 %967
      %969 = vrot.lane.b32.xlu0 %v754, 8
      %v970 = vpop.permute.xlu0 %969
      %971 = vrot.lane.b32.xlu0 %v755, 8
      %v972 = vpop.permute.xlu0 %971
      %973 = vrot.lane.b32.xlu0 %v756, 8
      %v974 = vpop.permute.xlu0 %973
      %975 = vrot.lane.b32.xlu0 %v757, 8
      %v976 = vpop.permute.xlu0 %975
      %977 = vrot.lane.b32.xlu0 %v758, 8
      %v978 = vpop.permute.xlu0 %977
      %979 = vrot.lane.b32.xlu0 %v759, 8
      %v980 = vpop.permute.xlu0 %979
      %981 = vrot.lane.b32.xlu0 %v760, 8
      %v982 = vpop.permute.xlu0 %981
      %983 = vrot.lane.b32.xlu0 %v761, 8
      %v984 = vpop.permute.xlu0 %983
      %985 = vrot.lane.b32.xlu0 %v762, 8
      %v986 = vpop.permute.xlu0 %985
      %vm1019 = vcmask 31744
      %v1020 = vsel %vm1019, %v570, %v796
      %v1021 = vsel %vm1019, %v571, %v798
      %v1022 = vsel %vm1019, %v572, %v800
      %v1023 = vsel %vm1019, %v573, %v802
      %v1024 = vsel %vm1019, %v574, %v804
      %v1025 = vsel %vm1019, %v575, %v806
      %v1026 = vsel %vm1019, %v576, %v808
      %v1027 = vsel %vm1019, %v577, %v810
      %v1028 = vsel %vm1019, %v578, %v812
      %v1029 = vsel %vm1019, %v579, %v814
      %v1030 = vsel %vm1019, %v580, %v816
      %v1031 = vsel %vm1019, %v581, %v818
      %v1032 = vsel %vm1019, %v582, %v820
      %v1033 = vsel %vm1019, %v583, %v822
      %v1034 = vsel %vm1019, %v584, %v824
      %v1035 = vsel %vm1019, %v585, %v826
      %v1036 = vsel %vm1019, %v586, %v828
      %v1037 = vsel %vm1019, %v587, %v830
      %v1038 = vsel %vm1019, %v588, %v832
      %v1039 = vsel %vm1019, %v589, %v834
      %v1040 = vsel %vm1019, %v590, %v836
      %v1041 = vsel %vm1019, %v591, %v838
      %v1042 = vsel %vm1019, %v592, %v840
      %v1043 = vsel %vm1019, %v593, %v842
      %v1044 = vsel %vm1019, %v594, %v844
      %v1045 = vsel %vm1019, %v595, %v846
      %v1046 = vsel %vm1019, %v596, %v848
      %v1047 = vsel %vm1019, %v597, %v850
      %v1048 = vsel %vm1019, %v598, %v852
      %v1049 = vsel %vm1019, %v599, %v854
      %v1050 = vsel %vm1019, %v600, %v856
      %v1051 = vsel %vm1019, %v601, %v858
      %vm1052 = vcmask 64512
      %v1053 = vsel %vm1052, %v1020, %v924
      %v1054 = vsel %vm1052, %v1021, %v926
      %v1055 = vsel %vm1052, %v1022, %v928
      %v1056 = vsel %vm1052, %v1023, %v930
      %v1057 = vsel %vm1052, %v1024, %v932
      %v1058 = vsel %vm1052, %v1025, %v934
      %v1059 = vsel %vm1052, %v1026, %v936
      %v1060 = vsel %vm1052, %v1027, %v938
      %v1061 = vsel %vm1052, %v1028, %v940
      %v1062 = vsel %vm1052, %v1029, %v942
      %v1063 = vsel %vm1052, %v1030, %v944
      %v1064 = vsel %vm1052, %v1031, %v946
      %v1065 = vsel %vm1052, %v1032, %v948
      %v1066 = vsel %vm1052, %v1033, %v950
      %v1067 = vsel %vm1052, %v1034, %v952
      %v1068 = vsel %vm1052, %v1035, %v954
      %v1069 = vsel %vm1052, %v1036, %v956
      %v1070 = vsel %vm1052, %v1037, %v958
      %v1071 = vsel %vm1052, %v1038, %v960
      %v1072 = vsel %vm1052, %v1039, %v962
      %v1073 = vsel %vm1052, %v1040, %v964
      %v1074 = vsel %vm1052, %v1041, %v966
      %v1075 = vsel %vm1052, %v1042, %v968
      %v1076 = vsel %vm1052, %v1043, %v970
      %v1077 = vsel %vm1052, %v1044, %v972
      %v1078 = vsel %vm1052, %v1045, %v974
      %v1079 = vsel %vm1052, %v1046, %v976
      %v1080 = vsel %vm1052, %v1047, %v978
      %v1081 = vsel %vm1052, %v1048, %v980
      %v1082 = vsel %vm1052, %v1049, %v982
      %v1083 = vsel %vm1052, %v1050, %v984
      %v1084 = vsel %vm1052, %v1051, %v986
      %v1085 = vpack.c.bf16 %v1054, %v1053
      %v1086 = vpack.c.bf16 %v1056, %v1055
      %v1087 = vpack.c.bf16 %v1058, %v1057
      %v1088 = vpack.c.bf16 %v1060, %v1059
      %v1089 = vpack.c.bf16 %v1062, %v1061
      %v1090 = vpack.c.bf16 %v1064, %v1063
      %v1091 = vpack.c.bf16 %v1066, %v1065
      %v1092 = vpack.c.bf16 %v1068, %v1067
      %v1093 = vpack.c.bf16 %v1070, %v1069
      %v1094 = vpack.c.bf16 %v1072, %v1071
      %v1095 = vpack.c.bf16 %v1074, %v1073
      %v1096 = vpack.c.bf16 %v1076, %v1075
      %v1097 = vpack.c.bf16 %v1078, %v1077
      %v1098 = vpack.c.bf16 %v1080, %v1079
      %v1099 = vpack.c.bf16 %v1082, %v1081
      %v1100 = vpack.c.bf16 %v1084, %v1083
      %s1101 = scalar_lea.vmem %s1, 8
      %v1102 = vld [vmem:[%s1101] sm:$0xf]
      %v1103 = vld [vmem:[%s1101 + $0x4] sm:$0x3]
      %v1106 = vunpack.c.l.b16 %v1102
      %v1107 = vunpack.c.l.b16 %v1103
      %v1108 = vpack.c.b16 %v1107, %v1106
      %vm1109 = vcmask 97280
      %v1111 = vsel %vm1109, %v1085, 0
      %v1114 = vsel %vm1109, %v1086, 0
      %v1117 = vsel %vm1109, %v1087, 0
      %v1120 = vsel %vm1109, %v1088, 0
      %v1123 = vsel %vm1109, %v1089, 0
      %v1126 = vsel %vm1109, %v1090, 0
      %v1129 = vsel %vm1109, %v1091, 0
      %v1132 = vsel %vm1109, %v1092, 0
      %v1135 = vsel %vm1109, %v1093, 0
      %v1138 = vsel %vm1109, %v1094, 0
      %v1141 = vsel %vm1109, %v1095, 0
      %v1144 = vsel %vm1109, %v1096, 0
      %v1147 = vsel %vm1109, %v1097, 0
      %v1150 = vsel %vm1109, %v1098, 0
      %v1153 = vsel %vm1109, %v1099, 0
      %v1156 = vsel %vm1109, %v1100, 0
      %vm1158 = vcmask 1045504
      %v1160 = vsel %vm1158, %v1108, 0
      %1162 = vmatprep.subr.bf16.mxu0 0
      %1163 = vmatpush1.bf16.msra.mxu0 %v1160
      %1164 = vmatprep.subr.bf16.mxu0 0
      %1165 = vmatpush1.bf16.msra.mxu0 0
      %1166 = vmatprep.subr.bf16.mxu0 0
      %1167 = vmatpush1.bf16.msra.mxu0 0
      %1168 = vmatprep.subr.bf16.mxu0 0
      %1169 = vmatpush1.bf16.msra.mxu0 0
      %1170 = vmatprep.subr.bf16.mxu0 0
      %1171 = vmatpush1.bf16.msra.mxu0 0
      %1172 = vmatprep.subr.bf16.mxu0 0
      %1173 = vmatpush1.bf16.msra.mxu0 0
      %1174 = vmatprep.subr.bf16.mxu0 0
      %1175 = vmatpush1.bf16.msra.mxu0 0
      %1176 = vmatprep.subr.bf16.mxu0 0
      %1177 = vmatpush1.bf16.msra.mxu0 0
      %1178 = vmatprep.subr.bf16.mxu0 0
      %1179 = vmatpush1.bf16.msra.mxu0 0
      %1180 = vmatprep.subr.bf16.mxu0 0
      %1181 = vmatpush1.bf16.msra.mxu0 0
      %1182 = vmatprep.subr.bf16.mxu0 0
      %1183 = vmatpush1.bf16.msra.mxu0 0
      %1184 = vmatprep.subr.bf16.mxu0 0
      %1185 = vmatpush1.bf16.msra.mxu0 0
      %1186 = vmatprep.subr.bf16.mxu0 0
      %1187 = vmatpush1.bf16.msra.mxu0 0
      %1188 = vmatprep.subr.bf16.mxu0 0
      %1189 = vmatpush1.bf16.msra.mxu0 0
      %1190 = vmatprep.subr.bf16.mxu0 0
      %1191 = vmatpush1.bf16.msra.mxu0 0
      %1192 = vmatprep.subr.bf16.mxu0 0
      %1193 = vmatpush1.bf16.msra.mxu0 0
      %1194 = vmatprep.mubr.bf16.mxu0 0
      %1195 = vmatmul.mubr.bf16.gmra.mrb[0].mxu0 %v1111
      %v1196 = vpop.f32.mrb[0].mxu0
      %v1197 = vadd.f32 0.0, %v1196
      %v1198 = vpop.f32.mrb[0].mxu0
      %v1199 = vpop.f32.mrb[0].mxu0
      %v1200 = vadd.f32 0.0, %v1199
      %v1201 = vpop.f32.mrb[0].mxu0
      %1202 = vmatprep.mubr.bf16.mxu0 0
      %1203 = vmatmul.mubr.bf16.gmra.mrb[0].mxu0 %v1114
      %v1204 = vpop.f32.mrb[0].mxu0
      %v1205 = vadd.f32 0.0, %v1204
      %v1206 = vpop.f32.mrb[0].mxu0
      %v1207 = vpop.f32.mrb[0].mxu0
      %v1208 = vadd.f32 0.0, %v1207
      %v1209 = vpop.f32.mrb[0].mxu0
      %1210 = vmatprep.mubr.bf16.mxu0 0
      %1211 = vmatmul.mubr.bf16.gmra.mrb[0].mxu0 %v1117
      %v1212 = vpop.f32.mrb[0].mxu0
      %v1213 = vadd.f32 0.0, %v1212
      %v1214 = vpop.f32.mrb[0].mxu0
      %v1215 = vpop.f32.mrb[0].mxu0
      %v1216 = vadd.f32 0.0, %v1215
      %v1217 = vpop.f32.mrb[0].mxu0
      %1218 = vmatprep.mubr.bf16.mxu0 0
      %1219 = vmatmul.mubr.bf16.gmra.mrb[0].mxu0 %v1120
      %v1220 = vpop.f32.mrb[0].mxu0
      %v1221 = vadd.f32 0.0, %v1220
      %v1222 = vpop.f32.mrb[0].mxu0
      %v1223 = vpop.f32.mrb[0].mxu0
      %v1224 = vadd.f32 0.0, %v1223
      %v1225 = vpop.f32.mrb[0].mxu0
      %1226 = vmatprep.mubr.bf16.mxu0 0
      %1227 = vmatmul.mubr.bf16.gmra.mrb[0].mxu0 %v1123
      %v1228 = vpop.f32.mrb[0].mxu0
      %v1229 = vadd.f32 0.0, %v1228
      %v1230 = vpop.f32.mrb[0].mxu0
      %v1231 = vpop.f32.mrb[0].mxu0
      %v1232 = vadd.f32 0.0, %v1231
      %v1233 = vpop.f32.mrb[0].mxu0
      %1234 = vmatprep.mubr.bf16.mxu0 0
      %1235 = vmatmul.mubr.bf16.gmra.mrb[0].mxu0 %v1126
      %v1236 = vpop.f32.mrb[0].mxu0
      %v1237 = vadd.f32 0.0, %v1236
      %v1238 = vpop.f32.mrb[0].mxu0
      %v1239 = vpop.f32.mrb[0].mxu0
      %v1240 = vadd.f32 0.0, %v1239
      %v1241 = vpop.f32.mrb[0].mxu0
      %1242 = vmatprep.mubr.bf16.mxu0 0
      %1243 = vmatmul.mubr.bf16.gmra.mrb[0].mxu0 %v1129
      %v1244 = vpop.f32.mrb[0].mxu0
      %v1245 = vadd.f32 0.0, %v1244
      %v1246 = vpop.f32.mrb[0].mxu0
      %v1247 = vpop.f32.mrb[0].mxu0
      %v1248 = vadd.f32 0.0, %v1247
      %v1249 = vpop.f32.mrb[0].mxu0
      %1250 = vmatprep.mubr.bf16.mxu0 0
      %1251 = vmatmul.mubr.bf16.gmra.mrb[0].mxu0 %v1132
      %v1252 = vpop.f32.mrb[0].mxu0
      %v1253 = vadd.f32 0.0, %v1252
      %v1254 = vpop.f32.mrb[0].mxu0
      %v1255 = vpop.f32.mrb[0].mxu0
      %v1256 = vadd.f32 0.0, %v1255
      %v1257 = vpop.f32.mrb[0].mxu0
      %1258 = vmatprep.mubr.bf16.mxu0 0
      %1259 = vmatmul.mubr.bf16.gmra.mrb[0].mxu0 %v1135
      %v1260 = vpop.f32.mrb[0].mxu0
      %v1261 = vadd.f32 0.0, %v1260
      %v1262 = vpop.f32.mrb[0].mxu0
      %v1263 = vpop.f32.mrb[0].mxu0
      %v1264 = vadd.f32 0.0, %v1263
      %v1265 = vpop.f32.mrb[0].mxu0
      %1266 = vmatprep.mubr.bf16.mxu0 0
      %1267 = vmatmul.mubr.bf16.gmra.mrb[0].mxu0 %v1138
      %v1268 = vpop.f32.mrb[0].mxu0
      %v1269 = vadd.f32 0.0, %v1268
      %v1270 = vpop.f32.mrb[0].mxu0
      %v1271 = vpop.f32.mrb[0].mxu0
      %v1272 = vadd.f32 0.0, %v1271
      %v1273 = vpop.f32.mrb[0].mxu0
      %1274 = vmatprep.mubr.bf16.mxu0 0
      %1275 = vmatmul.mubr.bf16.gmra.mrb[0].mxu0 %v1141
      %v1276 = vpop.f32.mrb[0].mxu0
      %v1277 = vadd.f32 0.0, %v1276
      %v1278 = vpop.f32.mrb[0].mxu0
      %v1279 = vpop.f32.mrb[0].mxu0
      %v1280 = vadd.f32 0.0, %v1279
      %v1281 = vpop.f32.mrb[0].mxu0
      %1282 = vmatprep.mubr.bf16.mxu0 0
      %1283 = vmatmul.mubr.bf16.gmra.mrb[0].mxu0 %v1144
      %v1284 = vpop.f32.mrb[0].mxu0
      %v1285 = vadd.f32 0.0, %v1284
      %v1286 = vpop.f32.mrb[0].mxu0
      %v1287 = vpop.f32.mrb[0].mxu0
      %v1288 = vadd.f32 0.0, %v1287
      %v1289 = vpop.f32.mrb[0].mxu0
      %1290 = vmatprep.mubr.bf16.mxu0 0
      %1291 = vmatmul.mubr.bf16.gmra.mrb[0].mxu0 %v1147
      %v1292 = vpop.f32.mrb[0].mxu0
      %v1293 = vadd.f32 0.0, %v1292
      %v1294 = vpop.f32.mrb[0].mxu0
      %v1295 = vpop.f32.mrb[0].mxu0
      %v1296 = vadd.f32 0.0, %v1295
      %v1297 = vpop.f32.mrb[0].mxu0
      %1298 = vmatprep.mubr.bf16.mxu0 0
      %1299 = vmatmul.mubr.bf16.gmra.mrb[0].mxu0 %v1150
      %v1300 = vpop.f32.mrb[0].mxu0
      %v1301 = vadd.f32 0.0, %v1300
      %v1302 = vpop.f32.mrb[0].mxu0
      %v1303 = vpop.f32.mrb[0].mxu0
      %v1304 = vadd.f32 0.0, %v1303
      %v1305 = vpop.f32.mrb[0].mxu0
      %1306 = vmatprep.mubr.bf16.mxu0 0
      %1307 = vmatmul.mubr.bf16.gmra.mrb[0].mxu0 %v1153
      %v1308 = vpop.f32.mrb[0].mxu0
      %v1309 = vadd.f32 0.0, %v1308
      %v1310 = vpop.f32.mrb[0].mxu0
      %v1311 = vpop.f32.mrb[0].mxu0
      %v1312 = vadd.f32 0.0, %v1311
      %v1313 = vpop.f32.mrb[0].mxu0
      %1314 = vmatprep.mubr.bf16.mxu0 0
      %1315 = vmatmul.mubr.bf16.gmra.mrb[0].mxu0 %v1156
      %v1316 = vpop.f32.mrb[0].mxu0
      %v1317 = vadd.f32 0.0, %v1316
      %v1318 = vpop.f32.mrb[0].mxu0
      %v1319 = vpop.f32.mrb[0].mxu0
      %v1320 = vadd.f32 0.0, %v1319
      %v1321 = vpop.f32.mrb[0].mxu0
      %1322 = vdwg.mxu0
      %1323 = vst.msk [vmem:[#allocation2] sm:$0xff] %vm1019, %v1197
      %1324 = vst.msk [vmem:[#allocation2 + $0x8] sm:$0xff] %vm1019, %v1200
      %1325 = vst.msk [vmem:[#allocation2 + $0x10] sm:$0xff] %vm1019, %v1205
      %1326 = vst.msk [vmem:[#allocation2 + $0x18] sm:$0xff] %vm1019, %v1208
      %1327 = vst.msk [vmem:[#allocation2 + $0x20] sm:$0xff] %vm1019, %v1213
      %1328 = vst.msk [vmem:[#allocation2 + $0x28] sm:$0xff] %vm1019, %v1216
      %1329 = vst.msk [vmem:[#allocation2 + $0x30] sm:$0xff] %vm1019, %v1221
      %1330 = vst.msk [vmem:[#allocation2 + $0x38] sm:$0xff] %vm1019, %v1224
      %1331 = vst.msk [vmem:[#allocation2 + $0x40] sm:$0xff] %vm1019, %v1229
      %1332 = vst.msk [vmem:[#allocation2 + $0x48] sm:$0xff] %vm1019, %v1232
      %1333 = vst.msk [vmem:[#allocation2 + $0x50] sm:$0xff] %vm1019, %v1237
      %1334 = vst.msk [vmem:[#allocation2 + $0x58] sm:$0xff] %vm1019, %v1240
      %1335 = vst.msk [vmem:[#allocation2 + $0x60] sm:$0xff] %vm1019, %v1245
      %1336 = vst.msk [vmem:[#allocation2 + $0x68] sm:$0xff] %vm1019, %v1248
      %1337 = vst.msk [vmem:[#allocation2 + $0x70] sm:$0xff] %vm1019, %v1253
      %1338 = vst.msk [vmem:[#allocation2 + $0x78] sm:$0xff] %vm1019, %v1256
      %1339 = vst.msk [vmem:[#allocation2 + $0x80] sm:$0xff] %vm1019, %v1261
      %1340 = vst.msk [vmem:[#allocation2 + $0x88] sm:$0xff] %vm1019, %v1264
      %1341 = vst.msk [vmem:[#allocation2 + $0x90] sm:$0xff] %vm1019, %v1269
      %1342 = vst.msk [vmem:[#allocation2 + $0x98] sm:$0xff] %vm1019, %v1272
      %1343 = vst.msk [vmem:[#allocation2 + $0xa0] sm:$0xff] %vm1019, %v1277
      %1344 = vst.msk [vmem:[#allocation2 + $0xa8] sm:$0xff] %vm1019, %v1280
      %1345 = vst.msk [vmem:[#allocation2 + $0xb0] sm:$0xff] %vm1019, %v1285
      %1346 = vst.msk [vmem:[#allocation2 + $0xb8] sm:$0xff] %vm1019, %v1288
      %1347 = vst.msk [vmem:[#allocation2 + $0xc0] sm:$0xff] %vm1019, %v1293
      %1348 = vst.msk [vmem:[#allocation2 + $0xc8] sm:$0xff] %vm1019, %v1296
      %1349 = vst.msk [vmem:[#allocation2 + $0xd0] sm:$0xff] %vm1019, %v1301
      %1350 = vst.msk [vmem:[#allocation2 + $0xd8] sm:$0xff] %vm1019, %v1304
      %1351 = vst.msk [vmem:[#allocation2 + $0xe0] sm:$0xff] %vm1019, %v1309
      %1352 = vst.msk [vmem:[#allocation2 + $0xe8] sm:$0xff] %vm1019, %v1312
      %1353 = vst.msk [vmem:[#allocation2 + $0xf0] sm:$0xff] %vm1019, %v1317
      %1354 = vst.msk [vmem:[#allocation2 + $0xf8] sm:$0xff] %vm1019, %v1320
      %v1355 = vld [vmem:[#allocation2 + $0x10] sm:$0xff]
      %v1356 = vld [vmem:[#allocation2 + $0x18] sm:$0xff]
      %v1357 = vld [vmem:[#allocation2 + $0x20] sm:$0xff]
      %v1358 = vld [vmem:[#allocation2 + $0x28] sm:$0xff]
      %v1359 = vld [vmem:[#allocation2 + $0x30] sm:$0xff]
      %v1360 = vld [vmem:[#allocation2 + $0x38] sm:$0xff]
      %v1361 = vld [vmem:[#allocation2 + $0x40] sm:$0xff]
      %v1362 = vld [vmem:[#allocation2 + $0x48] sm:$0xff]
      %v1363 = vld [vmem:[#allocation2 + $0x50] sm:$0xff]
      %v1364 = vld [vmem:[#allocation2 + $0x58] sm:$0xff]
      %v1365 = vld [vmem:[#allocation2 + $0x60] sm:$0xff]
      %v1366 = vld [vmem:[#allocation2 + $0x68] sm:$0xff]
      %v1367 = vld [vmem:[#allocation2 + $0x70] sm:$0xff]
      %v1368 = vld [vmem:[#allocation2 + $0x78] sm:$0xff]
      %v1369 = vld [vmem:[#allocation2 + $0x80] sm:$0xff]
      %v1370 = vld [vmem:[#allocation2 + $0x88] sm:$0xff]
      %v1371 = vld [vmem:[#allocation2 + $0x90] sm:$0xff]
      %v1372 = vld [vmem:[#allocation2 + $0x98] sm:$0xff]
      %v1373 = vld [vmem:[#allocation2 + $0xa0] sm:$0xff]
      %v1374 = vld [vmem:[#allocation2 + $0xa8] sm:$0xff]
      %v1375 = vld [vmem:[#allocation2 + $0xb0] sm:$0xff]
      %v1376 = vld [vmem:[#allocation2 + $0xb8] sm:$0xff]
      %v1377 = vld [vmem:[#allocation2 + $0xc0] sm:$0xff]
      %v1378 = vld [vmem:[#allocation2 + $0xc8] sm:$0xff]
      %v1379 = vld [vmem:[#allocation2 + $0xd0] sm:$0xff]
      %v1380 = vld [vmem:[#allocation2 + $0xd8] sm:$0xff]
      %v1381 = vld [vmem:[#allocation2 + $0xe0] sm:$0xff]
      %v1382 = vld [vmem:[#allocation2 + $0xe8] sm:$0xff]
      %v1383 = vld [vmem:[#allocation2 + $0xf0] sm:$0xff]
      %v1384 = vld [vmem:[#allocation2 + $0xf8] sm:$0xff]
      %v1385 = vld [vmem:[%s1] sm:$0xf]
      %v1386 = vld [vmem:[%s1 + $0x4] sm:$0x3]
      %v1389 = vunpack.c.l.b16 %v1385
      %v1390 = vunpack.c.l.b16 %v1386
      %v1391 = vpack.c.b16 %v1390, %v1389
      %v1393 = vsel %vm1158, %v1391, 0
      %1395 = vmatprep.subr.bf16.mxu0 0
      %1396 = vmatpush1.bf16.msra.mxu0 %v1393
      %1397 = vmatprep.subr.bf16.mxu0 0
      %1398 = vmatpush1.bf16.msra.mxu0 0
      %1399 = vmatprep.subr.bf16.mxu0 0
      %1400 = vmatpush1.bf16.msra.mxu0 0
      %1401 = vmatprep.subr.bf16.mxu0 0
      %1402 = vmatpush1.bf16.msra.mxu0 0
      %1403 = vmatprep.subr.bf16.mxu0 0
      %1404 = vmatpush1.bf16.msra.mxu0 0
      %1405 = vmatprep.subr.bf16.mxu0 0
      %1406 = vmatpush1.bf16.msra.mxu0 0
      %1407 = vmatprep.subr.bf16.mxu0 0
      %1408 = vmatpush1.bf16.msra.mxu0 0
      %1409 = vmatprep.subr.bf16.mxu0 0
      %1410 = vmatpush1.bf16.msra.mxu0 0
      %1411 = vmatprep.subr.bf16.mxu0 0
      %1412 = vmatpush1.bf16.msra.mxu0 0
      %1413 = vmatprep.subr.bf16.mxu0 0
      %1414 = vmatpush1.bf16.msra.mxu0 0
      %1415 = vmatprep.subr.bf16.mxu0 0
      %1416 = vmatpush1.bf16.msra.mxu0 0
      %1417 = vmatprep.subr.bf16.mxu0 0
      %1418 = vmatpush1.bf16.msra.mxu0 0
      %1419 = vmatprep.subr.bf16.mxu0 0
      %1420 = vmatpush1.bf16.msra.mxu0 0
      %1421 = vmatprep.subr.bf16.mxu0 0
      %1422 = vmatpush1.bf16.msra.mxu0 0
      %1423 = vmatprep.subr.bf16.mxu0 0
      %1424 = vmatpush1.bf16.msra.mxu0 0
      %1425 = vmatprep.subr.bf16.mxu0 0
      %1426 = vmatpush1.bf16.msra.mxu0 0
      %1427 = vmatprep.mubr.bf16.mxu0 0
      %1428 = vmatmul.mubr.bf16.gmra.mrb[0].mxu0 %v1111
      %v1429 = vpop.f32.mrb[0].mxu0
      %v1430 = vadd.f32 0.0, %v1429
      %v1431 = vpop.f32.mrb[0].mxu0
      %v1432 = vpop.f32.mrb[0].mxu0
      %v1433 = vadd.f32 0.0, %v1432
      %v1434 = vpop.f32.mrb[0].mxu0
      %1435 = vmatprep.mubr.bf16.mxu0 0
      %1436 = vmatmul.mubr.bf16.gmra.mrb[0].mxu0 %v1114
      %v1437 = vpop.f32.mrb[0].mxu0
      %v1438 = vadd.f32 0.0, %v1437
      %v1439 = vpop.f32.mrb[0].mxu0
      %v1440 = vpop.f32.mrb[0].mxu0
      %v1441 = vadd.f32 0.0, %v1440
      %v1442 = vpop.f32.mrb[0].mxu0
      %1443 = vmatprep.mubr.bf16.mxu0 0
      %1444 = vmatmul.mubr.bf16.gmra.mrb[0].mxu0 %v1117
      %v1445 = vpop.f32.mrb[0].mxu0
      %v1446 = vadd.f32 0.0, %v1445
      %v1447 = vpop.f32.mrb[0].mxu0
      %v1448 = vpop.f32.mrb[0].mxu0
      %v1449 = vadd.f32 0.0, %v1448
      %v1450 = vpop.f32.mrb[0].mxu0
      %1451 = vmatprep.mubr.bf16.mxu0 0
      %1452 = vmatmul.mubr.bf16.gmra.mrb[0].mxu0 %v1120
      %v1453 = vpop.f32.mrb[0].mxu0
      %v1454 = vadd.f32 0.0, %v1453
      %v1455 = vpop.f32.mrb[0].mxu0
      %v1456 = vpop.f32.mrb[0].mxu0
      %v1457 = vadd.f32 0.0, %v1456
      %v1458 = vpop.f32.mrb[0].mxu0
      %1459 = vmatprep.mubr.bf16.mxu0 0
      %1460 = vmatmul.mubr.bf16.gmra.mrb[0].mxu0 %v1123
      %v1461 = vpop.f32.mrb[0].mxu0
      %v1462 = vadd.f32 0.0, %v1461
      %v1463 = vpop.f32.mrb[0].mxu0
      %v1464 = vpop.f32.mrb[0].mxu0
      %v1465 = vadd.f32 0.0, %v1464
      %v1466 = vpop.f32.mrb[0].mxu0
      %1467 = vmatprep.mubr.bf16.mxu0 0
      %1468 = vmatmul.mubr.bf16.gmra.mrb[0].mxu0 %v1126
      %v1469 = vpop.f32.mrb[0].mxu0
      %v1470 = vadd.f32 0.0, %v1469
      %v1471 = vpop.f32.mrb[0].mxu0
      %v1472 = vpop.f32.mrb[0].mxu0
      %v1473 = vadd.f32 0.0, %v1472
      %v1474 = vpop.f32.mrb[0].mxu0
      %1475 = vmatprep.mubr.bf16.mxu0 0
      %1476 = vmatmul.mubr.bf16.gmra.mrb[0].mxu0 %v1129
      %v1477 = vpop.f32.mrb[0].mxu0
      %v1478 = vadd.f32 0.0, %v1477
      %v1479 = vpop.f32.mrb[0].mxu0
      %v1480 = vpop.f32.mrb[0].mxu0
      %v1481 = vadd.f32 0.0, %v1480
      %v1482 = vpop.f32.mrb[0].mxu0
      %1483 = vmatprep.mubr.bf16.mxu0 0
      %1484 = vmatmul.mubr.bf16.gmra.mrb[0].mxu0 %v1132
      %v1485 = vpop.f32.mrb[0].mxu0
      %v1486 = vadd.f32 0.0, %v1485
      %v1487 = vpop.f32.mrb[0].mxu0
      %v1488 = vpop.f32.mrb[0].mxu0
      %v1489 = vadd.f32 0.0, %v1488
      %v1490 = vpop.f32.mrb[0].mxu0
      %1491 = vmatprep.mubr.bf16.mxu0 0
      %1492 = vmatmul.mubr.bf16.gmra.mrb[0].mxu0 %v1135
      %v1493 = vpop.f32.mrb[0].mxu0
      %v1494 = vadd.f32 0.0, %v1493
      %v1495 = vpop.f32.mrb[0].mxu0
      %v1496 = vpop.f32.mrb[0].mxu0
      %v1497 = vadd.f32 0.0, %v1496
      %v1498 = vpop.f32.mrb[0].mxu0
      %1499 = vmatprep.mubr.bf16.mxu0 0
      %1500 = vmatmul.mubr.bf16.gmra.mrb[0].mxu0 %v1138
      %v1501 = vpop.f32.mrb[0].mxu0
      %v1502 = vadd.f32 0.0, %v1501
      %v1503 = vpop.f32.mrb[0].mxu0
      %v1504 = vpop.f32.mrb[0].mxu0
      %v1505 = vadd.f32 0.0, %v1504
      %v1506 = vpop.f32.mrb[0].mxu0
      %1507 = vmatprep.mubr.bf16.mxu0 0
      %1508 = vmatmul.mubr.bf16.gmra.mrb[0].mxu0 %v1141
      %v1509 = vpop.f32.mrb[0].mxu0
      %v1510 = vadd.f32 0.0, %v1509
      %v1511 = vpop.f32.mrb[0].mxu0
      %v1512 = vpop.f32.mrb[0].mxu0
      %v1513 = vadd.f32 0.0, %v1512
      %v1514 = vpop.f32.mrb[0].mxu0
      %1515 = vmatprep.mubr.bf16.mxu0 0
      %1516 = vmatmul.mubr.bf16.gmra.mrb[0].mxu0 %v1144
      %v1517 = vpop.f32.mrb[0].mxu0
      %v1518 = vadd.f32 0.0, %v1517
      %v1519 = vpop.f32.mrb[0].mxu0
      %v1520 = vpop.f32.mrb[0].mxu0
      %v1521 = vadd.f32 0.0, %v1520
      %v1522 = vpop.f32.mrb[0].mxu0
      %1523 = vmatprep.mubr.bf16.mxu0 0
      %1524 = vmatmul.mubr.bf16.gmra.mrb[0].mxu0 %v1147
      %v1525 = vpop.f32.mrb[0].mxu0
      %v1526 = vadd.f32 0.0, %v1525
      %v1527 = vpop.f32.mrb[0].mxu0
      %v1528 = vpop.f32.mrb[0].mxu0
      %v1529 = vadd.f32 0.0, %v1528
      %v1530 = vpop.f32.mrb[0].mxu0
      %1531 = vmatprep.mubr.bf16.mxu0 0
      %1532 = vmatmul.mubr.bf16.gmra.mrb[0].mxu0 %v1150
      %v1533 = vpop.f32.mrb[0].mxu0
      %v1534 = vadd.f32 0.0, %v1533
      %v1535 = vpop.f32.mrb[0].mxu0
      %v1536 = vpop.f32.mrb[0].mxu0
      %v1537 = vadd.f32 0.0, %v1536
      %v1538 = vpop.f32.mrb[0].mxu0
      %1539 = vmatprep.mubr.bf16.mxu0 0
      %1540 = vmatmul.mubr.bf16.gmra.mrb[0].mxu0 %v1153
      %v1541 = vpop.f32.mrb[0].mxu0
      %v1542 = vadd.f32 0.0, %v1541
      %v1543 = vpop.f32.mrb[0].mxu0
      %v1544 = vpop.f32.mrb[0].mxu0
      %v1545 = vadd.f32 0.0, %v1544
      %v1546 = vpop.f32.mrb[0].mxu0
      %1547 = vdwg.mxu0
      %v1548 = vadd.f32 %v1355, %v1430
      %v1549 = vadd.f32 %v1356, %v1433
      %v1550 = vadd.f32 %v1357, %v1438
      %v1551 = vadd.f32 %v1358, %v1441
      %v1552 = vadd.f32 %v1359, %v1446
      %v1553 = vadd.f32 %v1360, %v1449
      %v1554 = vadd.f32 %v1361, %v1454
      %v1555 = vadd.f32 %v1362, %v1457
      %v1556 = vadd.f32 %v1363, %v1462
      %v1557 = vadd.f32 %v1364, %v1465
      %v1558 = vadd.f32 %v1365, %v1470
      %v1559 = vadd.f32 %v1366, %v1473
      %v1560 = vadd.f32 %v1367, %v1478
      %v1561 = vadd.f32 %v1368, %v1481
      %v1562 = vadd.f32 %v1369, %v1486
      %v1563 = vadd.f32 %v1370, %v1489
      %v1564 = vadd.f32 %v1371, %v1494
      %v1565 = vadd.f32 %v1372, %v1497
      %v1566 = vadd.f32 %v1373, %v1502
      %v1567 = vadd.f32 %v1374, %v1505
      %v1568 = vadd.f32 %v1375, %v1510
      %v1569 = vadd.f32 %v1376, %v1513
      %v1570 = vadd.f32 %v1377, %v1518
      %v1571 = vadd.f32 %v1378, %v1521
      %v1572 = vadd.f32 %v1379, %v1526
      %v1573 = vadd.f32 %v1380, %v1529
      %v1574 = vadd.f32 %v1381, %v1534
      %v1575 = vadd.f32 %v1382, %v1537
      %v1576 = vadd.f32 %v1383, %v1542
      %v1577 = vadd.f32 %v1384, %v1545
      %1578 = vst.msk [vmem:[#allocation2 + $0x10] sm:$0xff] %vm1019, %v1548
      %1579 = vst.msk [vmem:[#allocation2 + $0x18] sm:$0xff] %vm1019, %v1549
      %1580 = vst.msk [vmem:[#allocation2 + $0x20] sm:$0xff] %vm1019, %v1550
      %1581 = vst.msk [vmem:[#allocation2 + $0x28] sm:$0xff] %vm1019, %v1551
      %1582 = vst.msk [vmem:[#allocation2 + $0x30] sm:$0xff] %vm1019, %v1552
      %1583 = vst.msk [vmem:[#allocation2 + $0x38] sm:$0xff] %vm1019, %v1553
      %1584 = vst.msk [vmem:[#allocation2 + $0x40] sm:$0xff] %vm1019, %v1554
      %1585 = vst.msk [vmem:[#allocation2 + $0x48] sm:$0xff] %vm1019, %v1555
      %1586 = vst.msk [vmem:[#allocation2 + $0x50] sm:$0xff] %vm1019, %v1556
      %1587 = vst.msk [vmem:[#allocation2 + $0x58] sm:$0xff] %vm1019, %v1557
      %1588 = vst.msk [vmem:[#allocation2 + $0x60] sm:$0xff] %vm1019, %v1558
      %1589 = vst.msk [vmem:[#allocation2 + $0x68] sm:$0xff] %vm1019, %v1559
      %1590 = vst.msk [vmem:[#allocation2 + $0x70] sm:$0xff] %vm1019, %v1560
      %1591 = vst.msk [vmem:[#allocation2 + $0x78] sm:$0xff] %vm1019, %v1561
      %1592 = vst.msk [vmem:[#allocation2 + $0x80] sm:$0xff] %vm1019, %v1562
      %1593 = vst.msk [vmem:[#allocation2 + $0x88] sm:$0xff] %vm1019, %v1563
      %1594 = vst.msk [vmem:[#allocation2 + $0x90] sm:$0xff] %vm1019, %v1564
      %1595 = vst.msk [vmem:[#allocation2 + $0x98] sm:$0xff] %vm1019, %v1565
      %1596 = vst.msk [vmem:[#allocation2 + $0xa0] sm:$0xff] %vm1019, %v1566
      %1597 = vst.msk [vmem:[#allocation2 + $0xa8] sm:$0xff] %vm1019, %v1567
      %1598 = vst.msk [vmem:[#allocation2 + $0xb0] sm:$0xff] %vm1019, %v1568
      %1599 = vst.msk [vmem:[#allocation2 + $0xb8] sm:$0xff] %vm1019, %v1569
      %1600 = vst.msk [vmem:[#allocation2 + $0xc0] sm:$0xff] %vm1019, %v1570
      %1601 = vst.msk [vmem:[#allocation2 + $0xc8] sm:$0xff] %vm1019, %v1571
      %1602 = vst.msk [vmem:[#allocation2 + $0xd0] sm:$0xff] %vm1019, %v1572
      %1603 = vst.msk [vmem:[#allocation2 + $0xd8] sm:$0xff] %vm1019, %v1573
      %1604 = vst.msk [vmem:[#allocation2 + $0xe0] sm:$0xff] %vm1019, %v1574
      %1605 = vst.msk [vmem:[#allocation2 + $0xe8] sm:$0xff] %vm1019, %v1575
      %1606 = vst.msk [vmem:[#allocation2 + $0xf0] sm:$0xff] %vm1019, %v1576
      %1607 = vst.msk [vmem:[#allocation2 + $0xf8] sm:$0xff] %vm1019, %v1577
      %v1608 = vld [vmem:[#allocation2] sm:$0xff]
      %v1609 = vld [vmem:[#allocation2 + $0x8] sm:$0xff]
      %v1610 = vld [vmem:[#allocation2 + $0x10] sm:$0xff]
      %v1611 = vld [vmem:[#allocation2 + $0x18] sm:$0xff]
      %v1612 = vld [vmem:[#allocation2 + $0x20] sm:$0xff]
      %v1613 = vld [vmem:[#allocation2 + $0x28] sm:$0xff]
      %v1614 = vld [vmem:[#allocation2 + $0x30] sm:$0xff]
      %v1615 = vld [vmem:[#allocation2 + $0x38] sm:$0xff]
      %v1616 = vld [vmem:[#allocation2 + $0x40] sm:$0xff]
      %v1617 = vld [vmem:[#allocation2 + $0x48] sm:$0xff]
      %v1618 = vld [vmem:[#allocation2 + $0x50] sm:$0xff]
      %v1619 = vld [vmem:[#allocation2 + $0x58] sm:$0xff]
      %v1620 = vld [vmem:[#allocation2 + $0x60] sm:$0xff]
      %v1621 = vld [vmem:[#allocation2 + $0x68] sm:$0xff]
      %v1622 = vld [vmem:[#allocation2 + $0x70] sm:$0xff]
      %v1623 = vld [vmem:[#allocation2 + $0x78] sm:$0xff]
      %v1624 = vld [vmem:[#allocation2 + $0x80] sm:$0xff]
      %v1625 = vld [vmem:[#allocation2 + $0x88] sm:$0xff]
      %v1626 = vld [vmem:[#allocation2 + $0x90] sm:$0xff]
      %v1627 = vld [vmem:[#allocation2 + $0x98] sm:$0xff]
      %v1628 = vld [vmem:[#allocation2 + $0xa0] sm:$0xff]
      %v1629 = vld [vmem:[#allocation2 + $0xa8] sm:$0xff]
      %v1630 = vld [vmem:[#allocation2 + $0xb0] sm:$0xff]
      %v1631 = vld [vmem:[#allocation2 + $0xb8] sm:$0xff]
      %v1632 = vld [vmem:[#allocation2 + $0xc0] sm:$0xff]
      %v1633 = vld [vmem:[#allocation2 + $0xc8] sm:$0xff]
      %v1634 = vld [vmem:[#allocation2 + $0xd0] sm:$0xff]
      %v1635 = vld [vmem:[#allocation2 + $0xd8] sm:$0xff]
      %v1636 = vld [vmem:[#allocation2 + $0xe0] sm:$0xff]
      %v1637 = vld [vmem:[#allocation2 + $0xe8] sm:$0xff]
      %s1638 = scalar_lea.vmem %s1, 16
      %v1639 = vld [vmem:[%s1638] sm:$0xf]
      %v1640 = vld [vmem:[%s1638 + $0x4] sm:$0x3]
      %v1643 = vunpack.c.l.b16 %v1639
      %v1644 = vunpack.c.l.b16 %v1640
      %v1645 = vpack.c.b16 %v1644, %v1643
      %v1647 = vsel %vm1158, %v1645, 0
      %1649 = vmatprep.subr.bf16.mxu0 0
      %1650 = vmatpush1.bf16.msra.mxu0 %v1647
      %1651 = vmatprep.subr.bf16.mxu0 0
      %1652 = vmatpush1.bf16.msra.mxu0 0
      %1653 = vmatprep.subr.bf16.mxu0 0
      %1654 = vmatpush1.bf16.msra.mxu0 0
      %1655 = vmatprep.subr.bf16.mxu0 0
      %1656 = vmatpush1.bf16.msra.mxu0 0
      %1657 = vmatprep.subr.bf16.mxu0 0
      %1658 = vmatpush1.bf16.msra.mxu0 0
      %1659 = vmatprep.subr.bf16.mxu0 0
      %1660 = vmatpush1.bf16.msra.mxu0 0
      %1661 = vmatprep.subr.bf16.mxu0 0
      %1662 = vmatpush1.bf16.msra.mxu0 0
      %1663 = vmatprep.subr.bf16.mxu0 0
      %1664 = vmatpush1.bf16.msra.mxu0 0
      %1665 = vmatprep.subr.bf16.mxu0 0
      %1666 = vmatpush1.bf16.msra.mxu0 0
      %1667 = vmatprep.subr.bf16.mxu0 0
      %1668 = vmatpush1.bf16.msra.mxu0 0
      %1669 = vmatprep.subr.bf16.mxu0 0
      %1670 = vmatpush1.bf16.msra.mxu0 0
      %1671 = vmatprep.subr.bf16.mxu0 0
      %1672 = vmatpush1.bf16.msra.mxu0 0
      %1673 = vmatprep.subr.bf16.mxu0 0
      %1674 = vmatpush1.bf16.msra.mxu0 0
      %1675 = vmatprep.subr.bf16.mxu0 0
      %1676 = vmatpush1.bf16.msra.mxu0 0
      %1677 = vmatprep.subr.bf16.mxu0 0
      %1678 = vmatpush1.bf16.msra.mxu0 0
      %1679 = vmatprep.subr.bf16.mxu0 0
      %1680 = vmatpush1.bf16.msra.mxu0 0
      %1681 = vmatprep.mubr.bf16.mxu0 0
      %1682 = vmatmul.mubr.bf16.gmra.mrb[0].mxu0 %v1114
      %v1683 = vpop.f32.mrb[0].mxu0
      %v1684 = vadd.f32 0.0, %v1683
      %v1685 = vpop.f32.mrb[0].mxu0
      %v1686 = vpop.f32.mrb[0].mxu0
      %v1687 = vadd.f32 0.0, %v1686
      %v1688 = vpop.f32.mrb[0].mxu0
      %1689 = vmatprep.mubr.bf16.mxu0 0
      %1690 = vmatmul.mubr.bf16.gmra.mrb[0].mxu0 %v1117
      %v1691 = vpop.f32.mrb[0].mxu0
      %v1692 = vadd.f32 0.0, %v1691
      %v1693 = vpop.f32.mrb[0].mxu0
      %v1694 = vpop.f32.mrb[0].mxu0
      %v1695 = vadd.f32 0.0, %v1694
      %v1696 = vpop.f32.mrb[0].mxu0
      %1697 = vmatprep.mubr.bf16.mxu0 0
      %1698 = vmatmul.mubr.bf16.gmra.mrb[0].mxu0 %v1120
      %v1699 = vpop.f32.mrb[0].mxu0
      %v1700 = vadd.f32 0.0, %v1699
      %v1701 = vpop.f32.mrb[0].mxu0
      %v1702 = vpop.f32.mrb[0].mxu0
      %v1703 = vadd.f32 0.0, %v1702
      %v1704 = vpop.f32.mrb[0].mxu0
      %1705 = vmatprep.mubr.bf16.mxu0 0
      %1706 = vmatmul.mubr.bf16.gmra.mrb[0].mxu0 %v1123
      %v1707 = vpop.f32.mrb[0].mxu0
      %v1708 = vadd.f32 0.0, %v1707
      %v1709 = vpop.f32.mrb[0].mxu0
      %v1710 = vpop.f32.mrb[0].mxu0
      %v1711 = vadd.f32 0.0, %v1710
      %v1712 = vpop.f32.mrb[0].mxu0
      %1713 = vmatprep.mubr.bf16.mxu0 0
      %1714 = vmatmul.mubr.bf16.gmra.mrb[0].mxu0 %v1126
      %v1715 = vpop.f32.mrb[0].mxu0
      %v1716 = vadd.f32 0.0, %v1715
      %v1717 = vpop.f32.mrb[0].mxu0
      %v1718 = vpop.f32.mrb[0].mxu0
      %v1719 = vadd.f32 0.0, %v1718
      %v1720 = vpop.f32.mrb[0].mxu0
      %1721 = vmatprep.mubr.bf16.mxu0 0
      %1722 = vmatmul.mubr.bf16.gmra.mrb[0].mxu0 %v1129
      %v1723 = vpop.f32.mrb[0].mxu0
      %v1724 = vadd.f32 0.0, %v1723
      %v1725 = vpop.f32.mrb[0].mxu0
      %v1726 = vpop.f32.mrb[0].mxu0
      %v1727 = vadd.f32 0.0, %v1726
      %v1728 = vpop.f32.mrb[0].mxu0
      %1729 = vmatprep.mubr.bf16.mxu0 0
      %1730 = vmatmul.mubr.bf16.gmra.mrb[0].mxu0 %v1132
      %v1731 = vpop.f32.mrb[0].mxu0
      %v1732 = vadd.f32 0.0, %v1731
      %v1733 = vpop.f32.mrb[0].mxu0
      %v1734 = vpop.f32.mrb[0].mxu0
      %v1735 = vadd.f32 0.0, %v1734
      %v1736 = vpop.f32.mrb[0].mxu0
      %1737 = vmatprep.mubr.bf16.mxu0 0
      %1738 = vmatmul.mubr.bf16.gmra.mrb[0].mxu0 %v1135
      %v1739 = vpop.f32.mrb[0].mxu0
      %v1740 = vadd.f32 0.0, %v1739
      %v1741 = vpop.f32.mrb[0].mxu0
      %v1742 = vpop.f32.mrb[0].mxu0
      %v1743 = vadd.f32 0.0, %v1742
      %v1744 = vpop.f32.mrb[0].mxu0
      %1745 = vmatprep.mubr.bf16.mxu0 0
      %1746 = vmatmul.mubr.bf16.gmra.mrb[0].mxu0 %v1138
      %v1747 = vpop.f32.mrb[0].mxu0
      %v1748 = vadd.f32 0.0, %v1747
      %v1749 = vpop.f32.mrb[0].mxu0
      %v1750 = vpop.f32.mrb[0].mxu0
      %v1751 = vadd.f32 0.0, %v1750
      %v1752 = vpop.f32.mrb[0].mxu0
      %1753 = vmatprep.mubr.bf16.mxu0 0
      %1754 = vmatmul.mubr.bf16.gmra.mrb[0].mxu0 %v1141
      %v1755 = vpop.f32.mrb[0].mxu0
      %v1756 = vadd.f32 0.0, %v1755
      %v1757 = vpop.f32.mrb[0].mxu0
      %v1758 = vpop.f32.mrb[0].mxu0
      %v1759 = vadd.f32 0.0, %v1758
      %v1760 = vpop.f32.mrb[0].mxu0
      %1761 = vmatprep.mubr.bf16.mxu0 0
      %1762 = vmatmul.mubr.bf16.gmra.mrb[0].mxu0 %v1144
      %v1763 = vpop.f32.mrb[0].mxu0
      %v1764 = vadd.f32 0.0, %v1763
      %v1765 = vpop.f32.mrb[0].mxu0
      %v1766 = vpop.f32.mrb[0].mxu0
      %v1767 = vadd.f32 0.0, %v1766
      %v1768 = vpop.f32.mrb[0].mxu0
      %1769 = vmatprep.mubr.bf16.mxu0 0
      %1770 = vmatmul.mubr.bf16.gmra.mrb[0].mxu0 %v1147
      %v1771 = vpop.f32.mrb[0].mxu0
      %v1772 = vadd.f32 0.0, %v1771
      %v1773 = vpop.f32.mrb[0].mxu0
      %v1774 = vpop.f32.mrb[0].mxu0
      %v1775 = vadd.f32 0.0, %v1774
      %v1776 = vpop.f32.mrb[0].mxu0
      %1777 = vmatprep.mubr.bf16.mxu0 0
      %1778 = vmatmul.mubr.bf16.gmra.mrb[0].mxu0 %v1150
      %v1779 = vpop.f32.mrb[0].mxu0
      %v1780 = vadd.f32 0.0, %v1779
      %v1781 = vpop.f32.mrb[0].mxu0
      %v1782 = vpop.f32.mrb[0].mxu0
      %v1783 = vadd.f32 0.0, %v1782
      %v1784 = vpop.f32.mrb[0].mxu0
      %1785 = vmatprep.mubr.bf16.mxu0 0
      %1786 = vmatmul.mubr.bf16.gmra.mrb[0].mxu0 %v1153
      %v1787 = vpop.f32.mrb[0].mxu0
      %v1788 = vadd.f32 0.0, %v1787
      %v1789 = vpop.f32.mrb[0].mxu0
      %v1790 = vpop.f32.mrb[0].mxu0
      %v1791 = vadd.f32 0.0, %v1790
      %v1792 = vpop.f32.mrb[0].mxu0
      %1793 = vmatprep.mubr.bf16.mxu0 0
      %1794 = vmatmul.mubr.bf16.gmra.mrb[0].mxu0 %v1156
      %v1795 = vpop.f32.mrb[0].mxu0
      %v1796 = vadd.f32 0.0, %v1795
      %v1797 = vpop.f32.mrb[0].mxu0
      %v1798 = vpop.f32.mrb[0].mxu0
      %v1799 = vadd.f32 0.0, %v1798
      %v1800 = vpop.f32.mrb[0].mxu0
      %1801 = vdwg.mxu0
      %v1802 = vadd.f32 %v1608, %v1684
      %v1803 = vadd.f32 %v1609, %v1687
      %v1804 = vadd.f32 %v1610, %v1692
      %v1805 = vadd.f32 %v1611, %v1695
      %v1806 = vadd.f32 %v1612, %v1700
      %v1807 = vadd.f32 %v1613, %v1703
      %v1808 = vadd.f32 %v1614, %v1708
      %v1809 = vadd.f32 %v1615, %v1711
      %v1810 = vadd.f32 %v1616, %v1716
      %v1811 = vadd.f32 %v1617, %v1719
      %v1812 = vadd.f32 %v1618, %v1724
      %v1813 = vadd.f32 %v1619, %v1727
      %v1814 = vadd.f32 %v1620, %v1732
      %v1815 = vadd.f32 %v1621, %v1735
      %v1816 = vadd.f32 %v1622, %v1740
      %v1817 = vadd.f32 %v1623, %v1743
      %v1818 = vadd.f32 %v1624, %v1748
      %v1819 = vadd.f32 %v1625, %v1751
      %v1820 = vadd.f32 %v1626, %v1756
      %v1821 = vadd.f32 %v1627, %v1759
      %v1822 = vadd.f32 %v1628, %v1764
      %v1823 = vadd.f32 %v1629, %v1767
      %v1824 = vadd.f32 %v1630, %v1772
      %v1825 = vadd.f32 %v1631, %v1775
      %v1826 = vadd.f32 %v1632, %v1780
      %v1827 = vadd.f32 %v1633, %v1783
      %v1828 = vadd.f32 %v1634, %v1788
      %v1829 = vadd.f32 %v1635, %v1791
      %v1830 = vadd.f32 %v1636, %v1796
      %v1831 = vadd.f32 %v1637, %v1799
      %1832 = vst.msk [vmem:[#allocation2] sm:$0xff] %vm1019, %v1802
      %1833 = vst.msk [vmem:[#allocation2 + $0x8] sm:$0xff] %vm1019, %v1803
      %1834 = vst.msk [vmem:[#allocation2 + $0x10] sm:$0xff] %vm1019, %v1804
      %1835 = vst.msk [vmem:[#allocation2 + $0x18] sm:$0xff] %vm1019, %v1805
      %1836 = vst.msk [vmem:[#allocation2 + $0x20] sm:$0xff] %vm1019, %v1806
      %1837 = vst.msk [vmem:[#allocation2 + $0x28] sm:$0xff] %vm1019, %v1807
      %1838 = vst.msk [vmem:[#allocation2 + $0x30] sm:$0xff] %vm1019, %v1808
      %1839 = vst.msk [vmem:[#allocation2 + $0x38] sm:$0xff] %vm1019, %v1809
      %1840 = vst.msk [vmem:[#allocation2 + $0x40] sm:$0xff] %vm1019, %v1810
      %1841 = vst.msk [vmem:[#allocation2 + $0x48] sm:$0xff] %vm1019, %v1811
      %1842 = vst.msk [vmem:[#allocation2 + $0x50] sm:$0xff] %vm1019, %v1812
      %1843 = vst.msk [vmem:[#allocation2 + $0x58] sm:$0xff] %vm1019, %v1813
      %1844 = vst.msk [vmem:[#allocation2 + $0x60] sm:$0xff] %vm1019, %v1814
      %1845 = vst.msk [vmem:[#allocation2 + $0x68] sm:$0xff] %vm1019, %v1815
      %1846 = vst.msk [vmem:[#allocation2 + $0x70] sm:$0xff] %vm1019, %v1816
      %1847 = vst.msk [vmem:[#allocation2 + $0x78] sm:$0xff] %vm1019, %v1817
      %1848 = vst.msk [vmem:[#allocation2 + $0x80] sm:$0xff] %vm1019, %v1818
      %1849 = vst.msk [vmem:[#allocation2 + $0x88] sm:$0xff] %vm1019, %v1819
      %1850 = vst.msk [vmem:[#allocation2 + $0x90] sm:$0xff] %vm1019, %v1820
      %1851 = vst.msk [vmem:[#allocation2 + $0x98] sm:$0xff] %vm1019, %v1821
      %1852 = vst.msk [vmem:[#allocation2 + $0xa0] sm:$0xff] %vm1019, %v1822
      %1853 = vst.msk [vmem:[#allocation2 + $0xa8] sm:$0xff] %vm1019, %v1823
      %1854 = vst.msk [vmem:[#allocation2 + $0xb0] sm:$0xff] %vm1019, %v1824
      %1855 = vst.msk [vmem:[#allocation2 + $0xb8] sm:$0xff] %vm1019, %v1825
      %1856 = vst.msk [vmem:[#allocation2 + $0xc0] sm:$0xff] %vm1019, %v1826
      %1857 = vst.msk [vmem:[#allocation2 + $0xc8] sm:$0xff] %vm1019, %v1827
      %1858 = vst.msk [vmem:[#allocation2 + $0xd0] sm:$0xff] %vm1019, %v1828
      %1859 = vst.msk [vmem:[#allocation2 + $0xd8] sm:$0xff] %vm1019, %v1829
      %1860 = vst.msk [vmem:[#allocation2 + $0xe0] sm:$0xff] %vm1019, %v1830
      %1861 = vst.msk [vmem:[#allocation2 + $0xe8] sm:$0xff] %vm1019, %v1831
      %v1862 = vld [vmem:[#allocation2] sm:$0xff]
      %v1863 = vld [vmem:[#allocation2 + $0x8] sm:$0xff]
      %v1864 = vld [vmem:[#allocation2 + $0x10] sm:$0xff]
      %v1865 = vld [vmem:[#allocation2 + $0x18] sm:$0xff]
      %v1866 = vld [vmem:[#allocation2 + $0x20] sm:$0xff]
      %v1867 = vld [vmem:[#allocation2 + $0x28] sm:$0xff]
      %v1868 = vld [vmem:[#allocation2 + $0x30] sm:$0xff]
      %v1869 = vld [vmem:[#allocation2 + $0x38] sm:$0xff]
      %v1870 = vld [vmem:[#allocation2 + $0x40] sm:$0xff]
      %v1871 = vld [vmem:[#allocation2 + $0x48] sm:$0xff]
      %v1872 = vld [vmem:[#allocation2 + $0x50] sm:$0xff]
      %v1873 = vld [vmem:[#allocation2 + $0x58] sm:$0xff]
      %v1874 = vld [vmem:[#allocation2 + $0x60] sm:$0xff]
      %v1875 = vld [vmem:[#allocation2 + $0x68] sm:$0xff]
      %v1876 = vld [vmem:[#allocation2 + $0x70] sm:$0xff]
      %v1877 = vld [vmem:[#allocation2 + $0x78] sm:$0xff]
      %v1878 = vld [vmem:[#allocation2 + $0x80] sm:$0xff]
      %v1879 = vld [vmem:[#allocation2 + $0x88] sm:$0xff]
      %v1880 = vld [vmem:[#allocation2 + $0x90] sm:$0xff]
      %v1881 = vld [vmem:[#allocation2 + $0x98] sm:$0xff]
      %v1882 = vld [vmem:[#allocation2 + $0xa0] sm:$0xff]
      %v1883 = vld [vmem:[#allocation2 + $0xa8] sm:$0xff]
      %v1884 = vld [vmem:[#allocation2 + $0xb0] sm:$0xff]
      %v1885 = vld [vmem:[#allocation2 + $0xb8] sm:$0xff]
      %v1886 = vld [vmem:[#allocation2 + $0xc0] sm:$0xff]
      %v1887 = vld [vmem:[#allocation2 + $0xc8] sm:$0xff]
      %v1888 = vld [vmem:[#allocation2 + $0xd0] sm:$0xff]
      %v1889 = vld [vmem:[#allocation2 + $0xd8] sm:$0xff]
      %v1890 = vld [vmem:[#allocation2 + $0xe0] sm:$0xff]
      %v1891 = vld [vmem:[#allocation2 + $0xe8] sm:$0xff]
      %v1892 = vld [vmem:[#allocation2 + $0xf0] sm:$0xff]
      %v1893 = vld [vmem:[#allocation2 + $0xf8] sm:$0xff]
      %v1894 = vsel %vm1019, %v1862, 0.0
      %v1895 = vsel %vm1019, %v1863, 0.0
      %v1896 = vadd.f32 %v1894, %v1895
      %v1897 = vsel %vm1019, %v1864, 0.0
      %v1898 = vadd.f32 %v1896, %v1897
      %v1899 = vsel %vm1019, %v1865, 0.0
      %v1900 = vadd.f32 %v1898, %v1899
      %v1901 = vsel %vm1019, %v1866, 0.0
      %v1902 = vadd.f32 %v1900, %v1901
      %v1903 = vsel %vm1019, %v1867, 0.0
      %v1904 = vadd.f32 %v1902, %v1903
      %v1905 = vsel %vm1019, %v1868, 0.0
      %v1906 = vadd.f32 %v1904, %v1905
      %v1907 = vsel %vm1019, %v1869, 0.0
      %v1908 = vadd.f32 %v1906, %v1907
      %v1909 = vsel %vm1019, %v1870, 0.0
      %v1910 = vadd.f32 %v1908, %v1909
      %v1911 = vsel %vm1019, %v1871, 0.0
      %v1912 = vadd.f32 %v1910, %v1911
      %v1913 = vsel %vm1019, %v1872, 0.0
      %v1914 = vadd.f32 %v1912, %v1913
      %v1915 = vsel %vm1019, %v1873, 0.0
      %v1916 = vadd.f32 %v1914, %v1915
      %v1917 = vsel %vm1019, %v1874, 0.0
      %v1918 = vadd.f32 %v1916, %v1917
      %v1919 = vsel %vm1019, %v1875, 0.0
      %v1920 = vadd.f32 %v1918, %v1919
      %v1921 = vsel %vm1019, %v1876, 0.0
      %v1922 = vadd.f32 %v1920, %v1921
      %v1923 = vsel %vm1019, %v1877, 0.0
      %v1924 = vadd.f32 %v1922, %v1923
      %v1925 = vsel %vm1019, %v1878, 0.0
      %v1926 = vadd.f32 %v1924, %v1925
      %v1927 = vsel %vm1019, %v1879, 0.0
      %v1928 = vadd.f32 %v1926, %v1927
      %v1929 = vsel %vm1019, %v1880, 0.0
      %v1930 = vadd.f32 %v1928, %v1929
      %v1931 = vsel %vm1019, %v1881, 0.0
      %v1932 = vadd.f32 %v1930, %v1931
      %v1933 = vsel %vm1019, %v1882, 0.0
      %v1934 = vadd.f32 %v1932, %v1933
      %v1935 = vsel %vm1019, %v1883, 0.0
      %v1936 = vadd.f32 %v1934, %v1935
      %v1937 = vsel %vm1019, %v1884, 0.0
      %v1938 = vadd.f32 %v1936, %v1937
      %v1939 = vsel %vm1019, %v1885, 0.0
      %v1940 = vadd.f32 %v1938, %v1939
      %v1941 = vsel %vm1019, %v1886, 0.0
      %v1942 = vadd.f32 %v1940, %v1941
      %v1943 = vsel %vm1019, %v1887, 0.0
      %v1944 = vadd.f32 %v1942, %v1943
      %v1945 = vsel %vm1019, %v1888, 0.0
      %v1946 = vadd.f32 %v1944, %v1945
      %v1947 = vsel %vm1019, %v1889, 0.0
      %v1948 = vadd.f32 %v1946, %v1947
      %v1949 = vsel %vm1019, %v1890, 0.0
      %v1950 = vadd.f32 %v1948, %v1949
      %v1951 = vsel %vm1019, %v1891, 0.0
      %v1952 = vadd.f32 %v1950, %v1951
      %v1953 = vsel %vm1019, %v1892, 0.0
      %v1954 = vadd.f32 %v1952, %v1953
      %v1955 = vsel %vm1019, %v1893, 0.0
      %v1956 = vadd.f32 %v1954, %v1955
      %v1957 = vrot.slane %v1956, 4
      %v1958 = vadd.f32 %v1956, %v1957
      %v1959 = vrot.slane %v1958, 2
      %v1960 = vadd.f32 %v1958, %v1959
      %v1961 = vrot.slane %v1960, 1
      %v1962 = vadd.f32 %v1960, %v1961
      %v1963 = vmul.f32 %v1962, 0.00390625
      %v1964 = vsub.f32 %v1862, %v1963
      %v1965 = vsub.f32 %v1863, %v1963
      %v1966 = vsub.f32 %v1864, %v1963
      %v1967 = vsub.f32 %v1865, %v1963
      %v1968 = vsub.f32 %v1866, %v1963
      %v1969 = vsub.f32 %v1867, %v1963
      %v1970 = vsub.f32 %v1868, %v1963
      %v1971 = vsub.f32 %v1869, %v1963
      %v1972 = vsub.f32 %v1870, %v1963
      %v1973 = vsub.f32 %v1871, %v1963
      %v1974 = vsub.f32 %v1872, %v1963
      %v1975 = vsub.f32 %v1873, %v1963
      %v1976 = vsub.f32 %v1874, %v1963
      %v1977 = vsub.f32 %v1875, %v1963
      %v1978 = vsub.f32 %v1876, %v1963
      %v1979 = vsub.f32 %v1877, %v1963
      %v1980 = vsub.f32 %v1878, %v1963
      %v1981 = vsub.f32 %v1879, %v1963
      %v1982 = vsub.f32 %v1880, %v1963
      %v1983 = vsub.f32 %v1881, %v1963
      %v1984 = vsub.f32 %v1882, %v1963
      %v1985 = vsub.f32 %v1883, %v1963
      %v1986 = vsub.f32 %v1884, %v1963
      %v1987 = vsub.f32 %v1885, %v1963
      %v1988 = vsub.f32 %v1886, %v1963
      %v1989 = vsub.f32 %v1887, %v1963
      %v1990 = vsub.f32 %v1888, %v1963
      %v1991 = vsub.f32 %v1889, %v1963
      %v1992 = vsub.f32 %v1890, %v1963
      %v1993 = vsub.f32 %v1891, %v1963
      %v1994 = vsub.f32 %v1892, %v1963
      %v1995 = vsub.f32 %v1893, %v1963
      %v1996 = vmul.f32 %v1964, %v1964
      %v1997 = vmul.f32 %v1965, %v1965
      %v1998 = vmul.f32 %v1966, %v1966
      %v1999 = vmul.f32 %v1967, %v1967
      %v2000 = vmul.f32 %v1968, %v1968
      %v2001 = vmul.f32 %v1969, %v1969
      %v2002 = vmul.f32 %v1970, %v1970
      %v2003 = vmul.f32 %v1971, %v1971
      %v2004 = vmul.f32 %v1972, %v1972
      %v2005 = vmul.f32 %v1973, %v1973
      %v2006 = vmul.f32 %v1974, %v1974
      %v2007 = vmul.f32 %v1975, %v1975
      %v2008 = vmul.f32 %v1976, %v1976
      %v2009 = vmul.f32 %v1977, %v1977
      %v2010 = vmul.f32 %v1978, %v1978
      %v2011 = vmul.f32 %v1979, %v1979
      %v2012 = vmul.f32 %v1980, %v1980
      %v2013 = vmul.f32 %v1981, %v1981
      %v2014 = vmul.f32 %v1982, %v1982
      %v2015 = vmul.f32 %v1983, %v1983
      %v2016 = vmul.f32 %v1984, %v1984
      %v2017 = vmul.f32 %v1985, %v1985
      %v2018 = vmul.f32 %v1986, %v1986
      %v2019 = vmul.f32 %v1987, %v1987
      %v2020 = vmul.f32 %v1988, %v1988
      %v2021 = vmul.f32 %v1989, %v1989
      %v2022 = vmul.f32 %v1990, %v1990
      %v2023 = vmul.f32 %v1991, %v1991
      %v2024 = vmul.f32 %v1992, %v1992
      %v2025 = vmul.f32 %v1993, %v1993
      %v2026 = vmul.f32 %v1994, %v1994
      %v2027 = vmul.f32 %v1995, %v1995
      %v2028 = vsel %vm1019, %v1996, 0.0
      %v2029 = vsel %vm1019, %v1997, 0.0
      %v2030 = vadd.f32 %v2028, %v2029
      %v2031 = vsel %vm1019, %v1998, 0.0
      %v2032 = vadd.f32 %v2030, %v2031
      %v2033 = vsel %vm1019, %v1999, 0.0
      %v2034 = vadd.f32 %v2032, %v2033
      %v2035 = vsel %vm1019, %v2000, 0.0
      %v2036 = vadd.f32 %v2034, %v2035
      %v2037 = vsel %vm1019, %v2001, 0.0
      %v2038 = vadd.f32 %v2036, %v2037
      %v2039 = vsel %vm1019, %v2002, 0.0
      %v2040 = vadd.f32 %v2038, %v2039
      %v2041 = vsel %vm1019, %v2003, 0.0
      %v2042 = vadd.f32 %v2040, %v2041
      %v2043 = vsel %vm1019, %v2004, 0.0
      %v2044 = vadd.f32 %v2042, %v2043
      %v2045 = vsel %vm1019, %v2005, 0.0
      %v2046 = vadd.f32 %v2044, %v2045
      %v2047 = vsel %vm1019, %v2006, 0.0
      %v2048 = vadd.f32 %v2046, %v2047
      %v2049 = vsel %vm1019, %v2007, 0.0
      %v2050 = vadd.f32 %v2048, %v2049
      %v2051 = vsel %vm1019, %v2008, 0.0
      %v2052 = vadd.f32 %v2050, %v2051
      %v2053 = vsel %vm1019, %v2009, 0.0
      %v2054 = vadd.f32 %v2052, %v2053
      %v2055 = vsel %vm1019, %v2010, 0.0
      %v2056 = vadd.f32 %v2054, %v2055
      %v2057 = vsel %vm1019, %v2011, 0.0
      %v2058 = vadd.f32 %v2056, %v2057
      %v2059 = vsel %vm1019, %v2012, 0.0
      %v2060 = vadd.f32 %v2058, %v2059
      %v2061 = vsel %vm1019, %v2013, 0.0
      %v2062 = vadd.f32 %v2060, %v2061
      %v2063 = vsel %vm1019, %v2014, 0.0
      %v2064 = vadd.f32 %v2062, %v2063
      %v2065 = vsel %vm1019, %v2015, 0.0
      %v2066 = vadd.f32 %v2064, %v2065
      %v2067 = vsel %vm1019, %v2016, 0.0
      %v2068 = vadd.f32 %v2066, %v2067
      %v2069 = vsel %vm1019, %v2017, 0.0
      %v2070 = vadd.f32 %v2068, %v2069
      %v2071 = vsel %vm1019, %v2018, 0.0
      %v2072 = vadd.f32 %v2070, %v2071
      %v2073 = vsel %vm1019, %v2019, 0.0
      %v2074 = vadd.f32 %v2072, %v2073
      %v2075 = vsel %vm1019, %v2020, 0.0
      %v2076 = vadd.f32 %v2074, %v2075
      %v2077 = vsel %vm1019, %v2021, 0.0
      %v2078 = vadd.f32 %v2076, %v2077
      %v2079 = vsel %vm1019, %v2022, 0.0
      %v2080 = vadd.f32 %v2078, %v2079
      %v2081 = vsel %vm1019, %v2023, 0.0
      %v2082 = vadd.f32 %v2080, %v2081
      %v2083 = vsel %vm1019, %v2024, 0.0
      %v2084 = vadd.f32 %v2082, %v2083
      %v2085 = vsel %vm1019, %v2025, 0.0
      %v2086 = vadd.f32 %v2084, %v2085
      %v2087 = vsel %vm1019, %v2026, 0.0
      %v2088 = vadd.f32 %v2086, %v2087
      %v2089 = vsel %vm1019, %v2027, 0.0
      %v2090 = vadd.f32 %v2088, %v2089
      %v2091 = vrot.slane %v2090, 4
      %v2092 = vadd.f32 %v2090, %v2091
      %v2093 = vrot.slane %v2092, 2
      %v2094 = vadd.f32 %v2092, %v2093
      %v2095 = vrot.slane %v2094, 1
      %v2096 = vadd.f32 %v2094, %v2095
      %v2097 = vmul.f32 %v2096, 0.00390625
      %v2098 = vld [vmem:[%s2] sm:$0x1]
      %v2099 = vadd.f32 %v2097, 1e-05
      %v2100 = vrsqrt.pop %v2099
      %v2101 = vmul.f32 %v2098, %v2100
      %v2103 = vlaneseq
      %v2104 = vshrl.u32 %v2103, 7
      %v2105 = vsub.s32 0, %v2104
      %v2106 = vrot.slane %v2101, %v2105
      %v2108 = vmul.f32 %v1964, %v2106
      %v2109 = vmul.f32 %v1965, %v2106
      %v2110 = vmul.f32 %v1966, %v2106
      %v2111 = vmul.f32 %v1967, %v2106
      %v2112 = vmul.f32 %v1968, %v2106
      %v2113 = vmul.f32 %v1969, %v2106
      %v2114 = vmul.f32 %v1970, %v2106
      %v2115 = vmul.f32 %v1971, %v2106
      %v2116 = vmul.f32 %v1972, %v2106
      %v2117 = vmul.f32 %v1973, %v2106
      %v2118 = vmul.f32 %v1974, %v2106
      %v2119 = vmul.f32 %v1975, %v2106
      %v2120 = vmul.f32 %v1976, %v2106
      %v2121 = vmul.f32 %v1977, %v2106
      %v2122 = vmul.f32 %v1978, %v2106
      %v2123 = vmul.f32 %v1979, %v2106
      %v2124 = vmul.f32 %v1980, %v2106
      %v2125 = vmul.f32 %v1981, %v2106
      %v2126 = vmul.f32 %v1982, %v2106
      %v2127 = vmul.f32 %v1983, %v2106
      %v2128 = vmul.f32 %v1984, %v2106
      %v2129 = vmul.f32 %v1985, %v2106
      %v2130 = vmul.f32 %v1986, %v2106
      %v2131 = vmul.f32 %v1987, %v2106
      %v2132 = vmul.f32 %v1988, %v2106
      %v2133 = vmul.f32 %v1989, %v2106
      %v2134 = vmul.f32 %v1990, %v2106
      %v2135 = vmul.f32 %v1991, %v2106
      %v2136 = vmul.f32 %v1992, %v2106
      %v2137 = vmul.f32 %v1993, %v2106
      %v2138 = vmul.f32 %v1994, %v2106
      %v2139 = vmul.f32 %v1995, %v2106
      %v2140 = vld [vmem:[%s3] sm:$0x1]
      %v2142 = vlaneseq
      %v2143 = vshrl.u32 %v2142, 7
      %v2144 = vsub.s32 0, %v2143
      %v2145 = vrot.slane %v2140, %v2144
      %v2147 = vadd.f32 %v2108, %v2145
      %v2148 = vadd.f32 %v2109, %v2145
      %v2149 = vadd.f32 %v2110, %v2145
      %v2150 = vadd.f32 %v2111, %v2145
      %v2151 = vadd.f32 %v2112, %v2145
      %v2152 = vadd.f32 %v2113, %v2145
      %v2153 = vadd.f32 %v2114, %v2145
      %v2154 = vadd.f32 %v2115, %v2145
      %v2155 = vadd.f32 %v2116, %v2145
      %v2156 = vadd.f32 %v2117, %v2145
      %v2157 = vadd.f32 %v2118, %v2145
      %v2158 = vadd.f32 %v2119, %v2145
      %v2159 = vadd.f32 %v2120, %v2145
      %v2160 = vadd.f32 %v2121, %v2145
      %v2161 = vadd.f32 %v2122, %v2145
      %v2162 = vadd.f32 %v2123, %v2145
      %v2163 = vadd.f32 %v2124, %v2145
      %v2164 = vadd.f32 %v2125, %v2145
      %v2165 = vadd.f32 %v2126, %v2145
      %v2166 = vadd.f32 %v2127, %v2145
      %v2167 = vadd.f32 %v2128, %v2145
      %v2168 = vadd.f32 %v2129, %v2145
      %v2169 = vadd.f32 %v2130, %v2145
      %v2170 = vadd.f32 %v2131, %v2145
      %v2171 = vadd.f32 %v2132, %v2145
      %v2172 = vadd.f32 %v2133, %v2145
      %v2173 = vadd.f32 %v2134, %v2145
      %v2174 = vadd.f32 %v2135, %v2145
      %v2175 = vadd.f32 %v2136, %v2145
      %v2176 = vadd.f32 %v2137, %v2145
      %v2177 = vadd.f32 %v2138, %v2145
      %v2178 = vadd.f32 %v2139, %v2145
      %v2179 = vmax.f32 %v2147, 0.0
      %v2180 = vmax.f32 %v2148, 0.0
      %v2181 = vmax.f32 %v2149, 0.0
      %v2182 = vmax.f32 %v2150, 0.0
      %v2183 = vmax.f32 %v2151, 0.0
      %v2184 = vmax.f32 %v2152, 0.0
      %v2185 = vmax.f32 %v2153, 0.0
      %v2186 = vmax.f32 %v2154, 0.0
      %v2187 = vmax.f32 %v2155, 0.0
      %v2188 = vmax.f32 %v2156, 0.0
      %v2189 = vmax.f32 %v2157, 0.0
      %v2190 = vmax.f32 %v2158, 0.0
      %v2191 = vmax.f32 %v2159, 0.0
      %v2192 = vmax.f32 %v2160, 0.0
      %v2193 = vmax.f32 %v2161, 0.0
      %v2194 = vmax.f32 %v2162, 0.0
      %v2195 = vmax.f32 %v2163, 0.0
      %v2196 = vmax.f32 %v2164, 0.0
      %v2197 = vmax.f32 %v2165, 0.0
      %v2198 = vmax.f32 %v2166, 0.0
      %v2199 = vmax.f32 %v2167, 0.0
      %v2200 = vmax.f32 %v2168, 0.0
      %v2201 = vmax.f32 %v2169, 0.0
      %v2202 = vmax.f32 %v2170, 0.0
      %v2203 = vmax.f32 %v2171, 0.0
      %v2204 = vmax.f32 %v2172, 0.0
      %v2205 = vmax.f32 %v2173, 0.0
      %v2206 = vmax.f32 %v2174, 0.0
      %v2207 = vmax.f32 %v2175, 0.0
      %v2208 = vmax.f32 %v2176, 0.0
      %v2209 = vmax.f32 %v2177, 0.0
      %v2210 = vmax.f32 %v2178, 0.0
      %v2211 = vrot.slane %v2179, 7
      %v2212 = vrot.slane %v2180, 7
      %v2213 = vrot.slane %v2181, 7
      %v2214 = vrot.slane %v2182, 7
      %v2215 = vrot.slane %v2183, 7
      %v2216 = vrot.slane %v2184, 7
      %v2217 = vrot.slane %v2185, 7
      %v2218 = vrot.slane %v2186, 7
      %v2219 = vrot.slane %v2187, 7
      %v2220 = vrot.slane %v2188, 7
      %v2221 = vrot.slane %v2189, 7
      %v2222 = vrot.slane %v2190, 7
      %v2223 = vrot.slane %v2191, 7
      %v2224 = vrot.slane %v2192, 7
      %v2225 = vrot.slane %v2193, 7
      %v2226 = vrot.slane %v2194, 7
      %v2227 = vrot.slane %v2195, 7
      %v2228 = vrot.slane %v2196, 7
      %v2229 = vrot.slane %v2197, 7
      %v2230 = vrot.slane %v2198, 7
      %v2231 = vrot.slane %v2199, 7
      %v2232 = vrot.slane %v2200, 7
      %v2233 = vrot.slane %v2201, 7
      %v2234 = vrot.slane %v2202, 7
      %v2235 = vrot.slane %v2203, 7
      %v2236 = vrot.slane %v2204, 7
      %v2237 = vrot.slane %v2205, 7
      %v2238 = vrot.slane %v2206, 7
      %v2239 = vrot.slane %v2207, 7
      %v2240 = vrot.slane %v2208, 7
      %v2241 = vrot.slane %v2209, 7
      %v2242 = vrot.slane %v2210, 7
      %v2243 = vsel %vm473, %v2241, %v2242
      %v2244 = vsel %vm473, %v2240, %v2241
      %v2245 = vsel %vm473, %v2239, %v2240
      %v2246 = vsel %vm473, %v2238, %v2239
      %v2247 = vsel %vm473, %v2237, %v2238
      %v2248 = vsel %vm473, %v2236, %v2237
      %v2249 = vsel %vm473, %v2235, %v2236
      %v2250 = vsel %vm473, %v2234, %v2235
      %v2251 = vsel %vm473, %v2233, %v2234
      %v2252 = vsel %vm473, %v2232, %v2233
      %v2253 = vsel %vm473, %v2231, %v2232
      %v2254 = vsel %vm473, %v2230, %v2231
      %v2255 = vsel %vm473, %v2229, %v2230
      %v2256 = vsel %vm473, %v2228, %v2229
      %v2257 = vsel %vm473, %v2227, %v2228
      %v2258 = vsel %vm473, %v2226, %v2227
      %v2259 = vsel %vm473, %v2225, %v2226
      %v2260 = vsel %vm473, %v2224, %v2225
      %v2261 = vsel %vm473, %v2223, %v2224
      %v2262 = vsel %vm473, %v2222, %v2223
      %v2263 = vsel %vm473, %v2221, %v2222
      %v2264 = vsel %vm473, %v2220, %v2221
      %v2265 = vsel %vm473, %v2219, %v2220
      %v2266 = vsel %vm473, %v2218, %v2219
      %v2267 = vsel %vm473, %v2217, %v2218
      %v2268 = vsel %vm473, %v2216, %v2217
      %v2269 = vsel %vm473, %v2215, %v2216
      %v2270 = vsel %vm473, %v2214, %v2215
      %v2271 = vsel %vm473, %v2213, %v2214
      %v2272 = vsel %vm473, %v2212, %v2213
      %v2273 = vsel %vm473, %v2211, %v2212
      %v2274 = vsel %vm473, %v2242, %v2211
      %v2275 = vsel %vm538, 0.0, %v2274
      %v2276 = vsel %vm539, 0.0, %v2273
      %v2277 = vsel %vm540, 0.0, %v2272
      %v2278 = vsel %vm541, 0.0, %v2271
      %v2279 = vsel %vm542, 0.0, %v2270
      %v2280 = vsel %vm543, 0.0, %v2269
      %v2281 = vsel %vm544, 0.0, %v2268
      %v2282 = vsel %vm545, 0.0, %v2267
      %v2283 = vsel %vm546, 0.0, %v2266
      %v2284 = vsel %vm547, 0.0, %v2265
      %v2285 = vsel %vm548, 0.0, %v2264
      %v2286 = vsel %vm549, 0.0, %v2263
      %v2287 = vsel %vm550, 0.0, %v2262
      %v2288 = vsel %vm551, 0.0, %v2261
      %v2289 = vsel %vm552, 0.0, %v2260
      %v2290 = vsel %vm553, 0.0, %v2259
      %v2291 = vsel %vm554, 0.0, %v2258
      %v2292 = vsel %vm555, 0.0, %v2257
      %v2293 = vsel %vm556, 0.0, %v2256
      %v2294 = vsel %vm557, 0.0, %v2255
      %v2295 = vsel %vm558, 0.0, %v2254
      %v2296 = vsel %vm559, 0.0, %v2253
      %v2297 = vsel %vm560, 0.0, %v2252
      %v2298 = vsel %vm561, 0.0, %v2251
      %v2299 = vsel %vm562, 0.0, %v2250
      %v2300 = vsel %vm563, 0.0, %v2249
      %v2301 = vsel %vm564, 0.0, %v2248
      %v2302 = vsel %vm565, 0.0, %v2247
      %v2303 = vsel %vm566, 0.0, %v2246
      %v2304 = vsel %vm567, 0.0, %v2245
      %v2305 = vsel %vm568, 0.0, %v2244
      %v2306 = vsel %vm569, 0.0, %v2243
      %v2307 = vrot.slane %v2179, 1
      %v2308 = vrot.slane %v2180, 1
      %v2309 = vrot.slane %v2181, 1
      %v2310 = vrot.slane %v2182, 1
      %v2311 = vrot.slane %v2183, 1
      %v2312 = vrot.slane %v2184, 1
      %v2313 = vrot.slane %v2185, 1
      %v2314 = vrot.slane %v2186, 1
      %v2315 = vrot.slane %v2187, 1
      %v2316 = vrot.slane %v2188, 1
      %v2317 = vrot.slane %v2189, 1
      %v2318 = vrot.slane %v2190, 1
      %v2319 = vrot.slane %v2191, 1
      %v2320 = vrot.slane %v2192, 1
      %v2321 = vrot.slane %v2193, 1
      %v2322 = vrot.slane %v2194, 1
      %v2323 = vrot.slane %v2195, 1
      %v2324 = vrot.slane %v2196, 1
      %v2325 = vrot.slane %v2197, 1
      %v2326 = vrot.slane %v2198, 1
      %v2327 = vrot.slane %v2199, 1
      %v2328 = vrot.slane %v2200, 1
      %v2329 = vrot.slane %v2201, 1
      %v2330 = vrot.slane %v2202, 1
      %v2331 = vrot.slane %v2203, 1
      %v2332 = vrot.slane %v2204, 1
      %v2333 = vrot.slane %v2205, 1
      %v2334 = vrot.slane %v2206, 1
      %v2335 = vrot.slane %v2207, 1
      %v2336 = vrot.slane %v2208, 1
      %v2337 = vrot.slane %v2209, 1
      %v2338 = vrot.slane %v2210, 1
      %v2339 = vsel %vm634, %v2337, %v2338
      %v2340 = vsel %vm634, %v2336, %v2337
      %v2341 = vsel %vm634, %v2335, %v2336
      %v2342 = vsel %vm634, %v2334, %v2335
      %v2343 = vsel %vm634, %v2333, %v2334
      %v2344 = vsel %vm634, %v2332, %v2333
      %v2345 = vsel %vm634, %v2331, %v2332
      %v2346 = vsel %vm634, %v2330, %v2331
      %v2347 = vsel %vm634, %v2329, %v2330
      %v2348 = vsel %vm634, %v2328, %v2329
      %v2349 = vsel %vm634, %v2327, %v2328
      %v2350 = vsel %vm634, %v2326, %v2327
      %v2351 = vsel %vm634, %v2325, %v2326
      %v2352 = vsel %vm634, %v2324, %v2325
      %v2353 = vsel %vm634, %v2323, %v2324
      %v2354 = vsel %vm634, %v2322, %v2323
      %v2355 = vsel %vm634, %v2321, %v2322
      %v2356 = vsel %vm634, %v2320, %v2321
      %v2357 = vsel %vm634, %v2319, %v2320
      %v2358 = vsel %vm634, %v2318, %v2319
      %v2359 = vsel %vm634, %v2317, %v2318
      %v2360 = vsel %vm634, %v2316, %v2317
      %v2361 = vsel %vm634, %v2315, %v2316
      %v2362 = vsel %vm634, %v2314, %v2315
      %v2363 = vsel %vm634, %v2313, %v2314
      %v2364 = vsel %vm634, %v2312, %v2313
      %v2365 = vsel %vm634, %v2311, %v2312
      %v2366 = vsel %vm634, %v2310, %v2311
      %v2367 = vsel %vm634, %v2309, %v2310
      %v2368 = vsel %vm634, %v2308, %v2309
      %v2369 = vsel %vm634, %v2307, %v2308
      %v2370 = vsel %vm634, %v2338, %v2307
      %v2371 = vsel %vm699, 0.0, %v2369
      %v2372 = vsel %vm700, 0.0, %v2368
      %v2373 = vsel %vm701, 0.0, %v2367
      %v2374 = vsel %vm702, 0.0, %v2366
      %v2375 = vsel %vm703, 0.0, %v2365
      %v2376 = vsel %vm704, 0.0, %v2364
      %v2377 = vsel %vm705, 0.0, %v2363
      %v2378 = vsel %vm706, 0.0, %v2362
      %v2379 = vsel %vm707, 0.0, %v2361
      %v2380 = vsel %vm708, 0.0, %v2360
      %v2381 = vsel %vm709, 0.0, %v2359
      %v2382 = vsel %vm710, 0.0, %v2358
      %v2383 = vsel %vm711, 0.0, %v2357
      %v2384 = vsel %vm712, 0.0, %v2356
      %v2385 = vsel %vm713, 0.0, %v2355
      %v2386 = vsel %vm714, 0.0, %v2354
      %v2387 = vsel %vm715, 0.0, %v2353
      %v2388 = vsel %vm716, 0.0, %v2352
      %v2389 = vsel %vm717, 0.0, %v2351
      %v2390 = vsel %vm718, 0.0, %v2350
      %v2391 = vsel %vm719, 0.0, %v2349
      %v2392 = vsel %vm720, 0.0, %v2348
      %v2393 = vsel %vm721, 0.0, %v2347
      %v2394 = vsel %vm722, 0.0, %v2346
      %v2395 = vsel %vm723, 0.0, %v2345
      %v2396 = vsel %vm724, 0.0, %v2344
      %v2397 = vsel %vm725, 0.0, %v2343
      %v2398 = vsel %vm726, 0.0, %v2342
      %v2399 = vsel %vm727, 0.0, %v2341
      %v2400 = vsel %vm728, 0.0, %v2340
      %v2401 = vsel %vm729, 0.0, %v2339
      %v2402 = vsel %vm730, 0.0, %v2370
      %2435 = vrot.lane.b32.xlu0 %v2179, 4
      %v2436 = vpop.permute.xlu0 %2435
      %2437 = vrot.lane.b32.xlu0 %v2180, 4
      %v2438 = vpop.permute.xlu0 %2437
      %2439 = vrot.lane.b32.xlu0 %v2181, 4
      %v2440 = vpop.permute.xlu0 %2439
      %2441 = vrot.lane.b32.xlu0 %v2182, 4
      %v2442 = vpop.permute.xlu0 %2441
      %2443 = vrot.lane.b32.xlu0 %v2183, 4
      %v2444 = vpop.permute.xlu0 %2443
      %2445 = vrot.lane.b32.xlu0 %v2184, 4
      %v2446 = vpop.permute.xlu0 %2445
      %2447 = vrot.lane.b32.xlu0 %v2185, 4
      %v2448 = vpop.permute.xlu0 %2447
      %2449 = vrot.lane.b32.xlu0 %v2186, 4
      %v2450 = vpop.permute.xlu0 %2449
      %2451 = vrot.lane.b32.xlu0 %v2187, 4
      %v2452 = vpop.permute.xlu0 %2451
      %2453 = vrot.lane.b32.xlu0 %v2188, 4
      %v2454 = vpop.permute.xlu0 %2453
      %2455 = vrot.lane.b32.xlu0 %v2189, 4
      %v2456 = vpop.permute.xlu0 %2455
      %2457 = vrot.lane.b32.xlu0 %v2190, 4
      %v2458 = vpop.permute.xlu0 %2457
      %2459 = vrot.lane.b32.xlu0 %v2191, 4
      %v2460 = vpop.permute.xlu0 %2459
      %2461 = vrot.lane.b32.xlu0 %v2192, 4
      %v2462 = vpop.permute.xlu0 %2461
      %2463 = vrot.lane.b32.xlu0 %v2193, 4
      %v2464 = vpop.permute.xlu0 %2463
      %2465 = vrot.lane.b32.xlu0 %v2194, 4
      %v2466 = vpop.permute.xlu0 %2465
      %2467 = vrot.lane.b32.xlu0 %v2195, 4
      %v2468 = vpop.permute.xlu0 %2467
      %2469 = vrot.lane.b32.xlu0 %v2196, 4
      %v2470 = vpop.permute.xlu0 %2469
      %2471 = vrot.lane.b32.xlu0 %v2197, 4
      %v2472 = vpop.permute.xlu0 %2471
      %2473 = vrot.lane.b32.xlu0 %v2198, 4
      %v2474 = vpop.permute.xlu0 %2473
      %2475 = vrot.lane.b32.xlu0 %v2199, 4
      %v2476 = vpop.permute.xlu0 %2475
      %2477 = vrot.lane.b32.xlu0 %v2200, 4
      %v2478 = vpop.permute.xlu0 %2477
      %2479 = vrot.lane.b32.xlu0 %v2201, 4
      %v2480 = vpop.permute.xlu0 %2479
      %2481 = vrot.lane.b32.xlu0 %v2202, 4
      %v2482 = vpop.permute.xlu0 %2481
      %2483 = vrot.lane.b32.xlu0 %v2203, 4
      %v2484 = vpop.permute.xlu0 %2483
      %2485 = vrot.lane.b32.xlu0 %v2204, 4
      %v2486 = vpop.permute.xlu0 %2485
      %2487 = vrot.lane.b32.xlu0 %v2205, 4
      %v2488 = vpop.permute.xlu0 %2487
      %2489 = vrot.lane.b32.xlu0 %v2206, 4
      %v2490 = vpop.permute.xlu0 %2489
      %2491 = vrot.lane.b32.xlu0 %v2207, 4
      %v2492 = vpop.permute.xlu0 %2491
      %2493 = vrot.lane.b32.xlu0 %v2208, 4
      %v2494 = vpop.permute.xlu0 %2493
      %2495 = vrot.lane.b32.xlu0 %v2209, 4
      %v2496 = vpop.permute.xlu0 %2495
      %2497 = vrot.lane.b32.xlu0 %v2210, 4
      %v2498 = vpop.permute.xlu0 %2497
      %2563 = vrot.lane.b32.xlu0 %v2371, 8
      %v2564 = vpop.permute.xlu0 %2563
      %2565 = vrot.lane.b32.xlu0 %v2372, 8
      %v2566 = vpop.permute.xlu0 %2565
      %2567 = vrot.lane.b32.xlu0 %v2373, 8
      %v2568 = vpop.permute.xlu0 %2567
      %2569 = vrot.lane.b32.xlu0 %v2374, 8
      %v2570 = vpop.permute.xlu0 %2569
      %2571 = vrot.lane.b32.xlu0 %v2375, 8
      %v2572 = vpop.permute.xlu0 %2571
      %2573 = vrot.lane.b32.xlu0 %v2376, 8
      %v2574 = vpop.permute.xlu0 %2573
      %2575 = vrot.lane.b32.xlu0 %v2377, 8
      %v2576 = vpop.permute.xlu0 %2575
      %2577 = vrot.lane.b32.xlu0 %v2378, 8
      %v2578 = vpop.permute.xlu0 %2577
      %2579 = vrot.lane.b32.xlu0 %v2379, 8
      %v2580 = vpop.permute.xlu0 %2579
      %2581 = vrot.lane.b32.xlu0 %v2380, 8
      %v2582 = vpop.permute.xlu0 %2581
      %2583 = vrot.lane.b32.xlu0 %v2381, 8
      %v2584 = vpop.permute.xlu0 %2583
      %2585 = vrot.lane.b32.xlu0 %v2382, 8
      %v2586 = vpop.permute.xlu0 %2585
      %2587 = vrot.lane.b32.xlu0 %v2383, 8
      %v2588 = vpop.permute.xlu0 %2587
      %2589 = vrot.lane.b32.xlu0 %v2384, 8
      %v2590 = vpop.permute.xlu0 %2589
      %2591 = vrot.lane.b32.xlu0 %v2385, 8
      %v2592 = vpop.permute.xlu0 %2591
      %2593 = vrot.lane.b32.xlu0 %v2386, 8
      %v2594 = vpop.permute.xlu0 %2593
      %2595 = vrot.lane.b32.xlu0 %v2387, 8
      %v2596 = vpop.permute.xlu0 %2595
      %2597 = vrot.lane.b32.xlu0 %v2388, 8
      %v2598 = vpop.permute.xlu0 %2597
      %2599 = vrot.lane.b32.xlu0 %v2389, 8
      %v2600 = vpop.permute.xlu0 %2599
      %2601 = vrot.lane.b32.xlu0 %v2390, 8
      %v2602 = vpop.permute.xlu0 %2601
      %2603 = vrot.lane.b32.xlu0 %v2391, 8
      %v2604 = vpop.permute.xlu0 %2603
      %2605 = vrot.lane.b32.xlu0 %v2392, 8
      %v2606 = vpop.permute.xlu0 %2605
      %2607 = vrot.lane.b32.xlu0 %v2393, 8
      %v2608 = vpop.permute.xlu0 %2607
      %2609 = vrot.lane.b32.xlu0 %v2394, 8
      %v2610 = vpop.permute.xlu0 %2609
      %2611 = vrot.lane.b32.xlu0 %v2395, 8
      %v2612 = vpop.permute.xlu0 %2611
      %2613 = vrot.lane.b32.xlu0 %v2396, 8
      %v2614 = vpop.permute.xlu0 %2613
      %2615 = vrot.lane.b32.xlu0 %v2397, 8
      %v2616 = vpop.permute.xlu0 %2615
      %2617 = vrot.lane.b32.xlu0 %v2398, 8
      %v2618 = vpop.permute.xlu0 %2617
      %2619 = vrot.lane.b32.xlu0 %v2399, 8
      %v2620 = vpop.permute.xlu0 %2619
      %2621 = vrot.lane.b32.xlu0 %v2400, 8
      %v2622 = vpop.permute.xlu0 %2621
      %2623 = vrot.lane.b32.xlu0 %v2401, 8
      %v2624 = vpop.permute.xlu0 %2623
      %2625 = vrot.lane.b32.xlu0 %v2402, 8
      %v2626 = vpop.permute.xlu0 %2625
      %v2659 = vsel %vm1019, %v2275, %v2436
      %v2660 = vsel %vm1019, %v2276, %v2438
      %v2661 = vsel %vm1019, %v2277, %v2440
      %v2662 = vsel %vm1019, %v2278, %v2442
      %v2663 = vsel %vm1019, %v2279, %v2444
      %v2664 = vsel %vm1019, %v2280, %v2446
      %v2665 = vsel %vm1019, %v2281, %v2448
      %v2666 = vsel %vm1019, %v2282, %v2450
      %v2667 = vsel %vm1019, %v2283, %v2452
      %v2668 = vsel %vm1019, %v2284, %v2454
      %v2669 = vsel %vm1019, %v2285, %v2456
      %v2670 = vsel %vm1019, %v2286, %v2458
      %v2671 = vsel %vm1019, %v2287, %v2460
      %v2672 = vsel %vm1019, %v2288, %v2462
      %v2673 = vsel %vm1019, %v2289, %v2464
      %v2674 = vsel %vm1019, %v2290, %v2466
      %v2675 = vsel %vm1019, %v2291, %v2468
      %v2676 = vsel %vm1019, %v2292, %v2470
      %v2677 = vsel %vm1019, %v2293, %v2472
      %v2678 = vsel %vm1019, %v2294, %v2474
      %v2679 = vsel %vm1019, %v2295, %v2476
      %v2680 = vsel %vm1019, %v2296, %v2478
      %v2681 = vsel %vm1019, %v2297, %v2480
      %v2682 = vsel %vm1019, %v2298, %v2482
      %v2683 = vsel %vm1019, %v2299, %v2484
      %v2684 = vsel %vm1019, %v2300, %v2486
      %v2685 = vsel %vm1019, %v2301, %v2488
      %v2686 = vsel %vm1019, %v2302, %v2490
      %v2687 = vsel %vm1019, %v2303, %v2492
      %v2688 = vsel %vm1019, %v2304, %v2494
      %v2689 = vsel %vm1019, %v2305, %v2496
      %v2690 = vsel %vm1019, %v2306, %v2498
      %v2691 = vsel %vm1052, %v2659, %v2564
      %v2692 = vsel %vm1052, %v2660, %v2566
      %v2693 = vsel %vm1052, %v2661, %v2568
      %v2694 = vsel %vm1052, %v2662, %v2570
      %v2695 = vsel %vm1052, %v2663, %v2572
      %v2696 = vsel %vm1052, %v2664, %v2574
      %v2697 = vsel %vm1052, %v2665, %v2576
      %v2698 = vsel %vm1052, %v2666, %v2578
      %v2699 = vsel %vm1052, %v2667, %v2580
      %v2700 = vsel %vm1052, %v2668, %v2582
      %v2701 = vsel %vm1052, %v2669, %v2584
      %v2702 = vsel %vm1052, %v2670, %v2586
      %v2703 = vsel %vm1052, %v2671, %v2588
      %v2704 = vsel %vm1052, %v2672, %v2590
      %v2705 = vsel %vm1052, %v2673, %v2592
      %v2706 = vsel %vm1052, %v2674, %v2594
      %v2707 = vsel %vm1052, %v2675, %v2596
      %v2708 = vsel %vm1052, %v2676, %v2598
      %v2709 = vsel %vm1052, %v2677, %v2600
      %v2710 = vsel %vm1052, %v2678, %v2602
      %v2711 = vsel %vm1052, %v2679, %v2604
      %v2712 = vsel %vm1052, %v2680, %v2606
      %v2713 = vsel %vm1052, %v2681, %v2608
      %v2714 = vsel %vm1052, %v2682, %v2610
      %v2715 = vsel %vm1052, %v2683, %v2612
      %v2716 = vsel %vm1052, %v2684, %v2614
      %v2717 = vsel %vm1052, %v2685, %v2616
      %v2718 = vsel %vm1052, %v2686, %v2618
      %v2719 = vsel %vm1052, %v2687, %v2620
      %v2720 = vsel %vm1052, %v2688, %v2622
      %v2721 = vsel %vm1052, %v2689, %v2624
      %v2722 = vsel %vm1052, %v2690, %v2626
      %v2723 = vpack.c.bf16 %v2692, %v2691
      %v2724 = vpack.c.bf16 %v2694, %v2693
      %v2725 = vpack.c.bf16 %v2696, %v2695
      %v2726 = vpack.c.bf16 %v2698, %v2697
      %v2727 = vpack.c.bf16 %v2700, %v2699
      %v2728 = vpack.c.bf16 %v2702, %v2701
      %v2729 = vpack.c.bf16 %v2704, %v2703
      %v2730 = vpack.c.bf16 %v2706, %v2705
      %v2731 = vpack.c.bf16 %v2708, %v2707
      %v2732 = vpack.c.bf16 %v2710, %v2709
      %v2733 = vpack.c.bf16 %v2712, %v2711
      %v2734 = vpack.c.bf16 %v2714, %v2713
      %v2735 = vpack.c.bf16 %v2716, %v2715
      %v2736 = vpack.c.bf16 %v2718, %v2717
      %v2737 = vpack.c.bf16 %v2720, %v2719
      %v2738 = vpack.c.bf16 %v2722, %v2721
      %s2739 = scalar_lea.vmem %s4, 8
      %v2740 = vld [vmem:[%s2739] sm:$0xf]
      %v2741 = vld [vmem:[%s2739 + $0x4] sm:$0x3]
      %v2744 = vunpack.c.l.b16 %v2740
      %v2745 = vunpack.c.l.b16 %v2741
      %v2746 = vpack.c.b16 %v2745, %v2744
      %v2748 = vsel %vm1109, %v2723, 0
      %v2751 = vsel %vm1109, %v2724, 0
      %v2754 = vsel %vm1109, %v2725, 0
      %v2757 = vsel %vm1109, %v2726, 0
      %v2760 = vsel %vm1109, %v2727, 0
      %v2763 = vsel %vm1109, %v2728, 0
      %v2766 = vsel %vm1109, %v2729, 0
      %v2769 = vsel %vm1109, %v2730, 0
      %v2772 = vsel %vm1109, %v2731, 0
      %v2775 = vsel %vm1109, %v2732, 0
      %v2778 = vsel %vm1109, %v2733, 0
      %v2781 = vsel %vm1109, %v2734, 0
      %v2784 = vsel %vm1109, %v2735, 0
      %v2787 = vsel %vm1109, %v2736, 0
      %v2790 = vsel %vm1109, %v2737, 0
      %v2793 = vsel %vm1109, %v2738, 0
      %v2796 = vsel %vm1158, %v2746, 0
      %2798 = vmatprep.subr.bf16.mxu0 0
      %2799 = vmatpush1.bf16.msra.mxu0 %v2796
      %2800 = vmatprep.subr.bf16.mxu0 0
      %2801 = vmatpush1.bf16.msra.mxu0 0
      %2802 = vmatprep.subr.bf16.mxu0 0
      %2803 = vmatpush1.bf16.msra.mxu0 0
      %2804 = vmatprep.subr.bf16.mxu0 0
      %2805 = vmatpush1.bf16.msra.mxu0 0
      %2806 = vmatprep.subr.bf16.mxu0 0
      %2807 = vmatpush1.bf16.msra.mxu0 0
      %2808 = vmatprep.subr.bf16.mxu0 0
      %2809 = vmatpush1.bf16.msra.mxu0 0
      %2810 = vmatprep.subr.bf16.mxu0 0
      %2811 = vmatpush1.bf16.msra.mxu0 0
      %2812 = vmatprep.subr.bf16.mxu0 0
      %2813 = vmatpush1.bf16.msra.mxu0 0
      %2814 = vmatprep.subr.bf16.mxu0 0
      %2815 = vmatpush1.bf16.msra.mxu0 0
      %2816 = vmatprep.subr.bf16.mxu0 0
      %2817 = vmatpush1.bf16.msra.mxu0 0
      %2818 = vmatprep.subr.bf16.mxu0 0
      %2819 = vmatpush1.bf16.msra.mxu0 0
      %2820 = vmatprep.subr.bf16.mxu0 0
      %2821 = vmatpush1.bf16.msra.mxu0 0
      %2822 = vmatprep.subr.bf16.mxu0 0
      %2823 = vmatpush1.bf16.msra.mxu0 0
      %2824 = vmatprep.subr.bf16.mxu0 0
      %2825 = vmatpush1.bf16.msra.mxu0 0
      %2826 = vmatprep.subr.bf16.mxu0 0
      %2827 = vmatpush1.bf16.msra.mxu0 0
      %2828 = vmatprep.subr.bf16.mxu0 0
      %2829 = vmatpush1.bf16.msra.mxu0 0
      %2830 = vmatprep.mubr.bf16.mxu0 0
      %2831 = vmatmul.mubr.bf16.gmra.mrb[0].mxu0 %v2748
      %v2832 = vpop.f32.mrb[0].mxu0
      %v2833 = vadd.f32 0.0, %v2832
      %v2834 = vpop.f32.mrb[0].mxu0
      %v2835 = vpop.f32.mrb[0].mxu0
      %v2836 = vadd.f32 0.0, %v2835
      %v2837 = vpop.f32.mrb[0].mxu0
      %2838 = vmatprep.mubr.bf16.mxu0 0
      %2839 = vmatmul.mubr.bf16.gmra.mrb[0].mxu0 %v2751
      %v2840 = vpop.f32.mrb[0].mxu0
      %v2841 = vadd.f32 0.0, %v2840
      %v2842 = vpop.f32.mrb[0].mxu0
      %v2843 = vpop.f32.mrb[0].mxu0
      %v2844 = vadd.f32 0.0, %v2843
      %v2845 = vpop.f32.mrb[0].mxu0
      %2846 = vmatprep.mubr.bf16.mxu0 0
      %2847 = vmatmul.mubr.bf16.gmra.mrb[0].mxu0 %v2754
      %v2848 = vpop.f32.mrb[0].mxu0
      %v2849 = vadd.f32 0.0, %v2848
      %v2850 = vpop.f32.mrb[0].mxu0
      %v2851 = vpop.f32.mrb[0].mxu0
      %v2852 = vadd.f32 0.0, %v2851
      %v2853 = vpop.f32.mrb[0].mxu0
      %2854 = vmatprep.mubr.bf16.mxu0 0
      %2855 = vmatmul.mubr.bf16.gmra.mrb[0].mxu0 %v2757
      %v2856 = vpop.f32.mrb[0].mxu0
      %v2857 = vadd.f32 0.0, %v2856
      %v2858 = vpop.f32.mrb[0].mxu0
      %v2859 = vpop.f32.mrb[0].mxu0
      %v2860 = vadd.f32 0.0, %v2859
      %v2861 = vpop.f32.mrb[0].mxu0
      %2862 = vmatprep.mubr.bf16.mxu0 0
      %2863 = vmatmul.mubr.bf16.gmra.mrb[0].mxu0 %v2760
      %v2864 = vpop.f32.mrb[0].mxu0
      %v2865 = vadd.f32 0.0, %v2864
      %v2866 = vpop.f32.mrb[0].mxu0
      %v2867 = vpop.f32.mrb[0].mxu0
      %v2868 = vadd.f32 0.0, %v2867
      %v2869 = vpop.f32.mrb[0].mxu0
      %2870 = vmatprep.mubr.bf16.mxu0 0
      %2871 = vmatmul.mubr.bf16.gmra.mrb[0].mxu0 %v2763
      %v2872 = vpop.f32.mrb[0].mxu0
      %v2873 = vadd.f32 0.0, %v2872
      %v2874 = vpop.f32.mrb[0].mxu0
      %v2875 = vpop.f32.mrb[0].mxu0
      %v2876 = vadd.f32 0.0, %v2875
      %v2877 = vpop.f32.mrb[0].mxu0
      %2878 = vmatprep.mubr.bf16.mxu0 0
      %2879 = vmatmul.mubr.bf16.gmra.mrb[0].mxu0 %v2766
      %v2880 = vpop.f32.mrb[0].mxu0
      %v2881 = vadd.f32 0.0, %v2880
      %v2882 = vpop.f32.mrb[0].mxu0
      %v2883 = vpop.f32.mrb[0].mxu0
      %v2884 = vadd.f32 0.0, %v2883
      %v2885 = vpop.f32.mrb[0].mxu0
      %2886 = vmatprep.mubr.bf16.mxu0 0
      %2887 = vmatmul.mubr.bf16.gmra.mrb[0].mxu0 %v2769
      %v2888 = vpop.f32.mrb[0].mxu0
      %v2889 = vadd.f32 0.0, %v2888
      %v2890 = vpop.f32.mrb[0].mxu0
      %v2891 = vpop.f32.mrb[0].mxu0
      %v2892 = vadd.f32 0.0, %v2891
      %v2893 = vpop.f32.mrb[0].mxu0
      %2894 = vmatprep.mubr.bf16.mxu0 0
      %2895 = vmatmul.mubr.bf16.gmra.mrb[0].mxu0 %v2772
      %v2896 = vpop.f32.mrb[0].mxu0
      %v2897 = vadd.f32 0.0, %v2896
      %v2898 = vpop.f32.mrb[0].mxu0
      %v2899 = vpop.f32.mrb[0].mxu0
      %v2900 = vadd.f32 0.0, %v2899
      %v2901 = vpop.f32.mrb[0].mxu0
      %2902 = vmatprep.mubr.bf16.mxu0 0
      %2903 = vmatmul.mubr.bf16.gmra.mrb[0].mxu0 %v2775
      %v2904 = vpop.f32.mrb[0].mxu0
      %v2905 = vadd.f32 0.0, %v2904
      %v2906 = vpop.f32.mrb[0].mxu0
      %v2907 = vpop.f32.mrb[0].mxu0
      %v2908 = vadd.f32 0.0, %v2907
      %v2909 = vpop.f32.mrb[0].mxu0
      %2910 = vmatprep.mubr.bf16.mxu0 0
      %2911 = vmatmul.mubr.bf16.gmra.mrb[0].mxu0 %v2778
      %v2912 = vpop.f32.mrb[0].mxu0
      %v2913 = vadd.f32 0.0, %v2912
      %v2914 = vpop.f32.mrb[0].mxu0
      %v2915 = vpop.f32.mrb[0].mxu0
      %v2916 = vadd.f32 0.0, %v2915
      %v2917 = vpop.f32.mrb[0].mxu0
      %2918 = vmatprep.mubr.bf16.mxu0 0
      %2919 = vmatmul.mubr.bf16.gmra.mrb[0].mxu0 %v2781
      %v2920 = vpop.f32.mrb[0].mxu0
      %v2921 = vadd.f32 0.0, %v2920
      %v2922 = vpop.f32.mrb[0].mxu0
      %v2923 = vpop.f32.mrb[0].mxu0
      %v2924 = vadd.f32 0.0, %v2923
      %v2925 = vpop.f32.mrb[0].mxu0
      %2926 = vmatprep.mubr.bf16.mxu0 0
      %2927 = vmatmul.mubr.bf16.gmra.mrb[0].mxu0 %v2784
      %v2928 = vpop.f32.mrb[0].mxu0
      %v2929 = vadd.f32 0.0, %v2928
      %v2930 = vpop.f32.mrb[0].mxu0
      %v2931 = vpop.f32.mrb[0].mxu0
      %v2932 = vadd.f32 0.0, %v2931
      %v2933 = vpop.f32.mrb[0].mxu0
      %2934 = vmatprep.mubr.bf16.mxu0 0
      %2935 = vmatmul.mubr.bf16.gmra.mrb[0].mxu0 %v2787
      %v2936 = vpop.f32.mrb[0].mxu0
      %v2937 = vadd.f32 0.0, %v2936
      %v2938 = vpop.f32.mrb[0].mxu0
      %v2939 = vpop.f32.mrb[0].mxu0
      %v2940 = vadd.f32 0.0, %v2939
      %v2941 = vpop.f32.mrb[0].mxu0
      %2942 = vmatprep.mubr.bf16.mxu0 0
      %2943 = vmatmul.mubr.bf16.gmra.mrb[0].mxu0 %v2790
      %v2944 = vpop.f32.mrb[0].mxu0
      %v2945 = vadd.f32 0.0, %v2944
      %v2946 = vpop.f32.mrb[0].mxu0
      %v2947 = vpop.f32.mrb[0].mxu0
      %v2948 = vadd.f32 0.0, %v2947
      %v2949 = vpop.f32.mrb[0].mxu0
      %2950 = vmatprep.mubr.bf16.mxu0 0
      %2951 = vmatmul.mubr.bf16.gmra.mrb[0].mxu0 %v2793
      %v2952 = vpop.f32.mrb[0].mxu0
      %v2953 = vadd.f32 0.0, %v2952
      %v2954 = vpop.f32.mrb[0].mxu0
      %v2955 = vpop.f32.mrb[0].mxu0
      %v2956 = vadd.f32 0.0, %v2955
      %v2957 = vpop.f32.mrb[0].mxu0
      %2958 = vdwg.mxu0
      %2959 = vst.msk [vmem:[#allocation2] sm:$0xff] %vm1019, %v2833
      %2960 = vst.msk [vmem:[#allocation2 + $0x8] sm:$0xff] %vm1019, %v2836
      %2961 = vst.msk [vmem:[#allocation2 + $0x10] sm:$0xff] %vm1019, %v2841
      %2962 = vst.msk [vmem:[#allocation2 + $0x18] sm:$0xff] %vm1019, %v2844
      %2963 = vst.msk [vmem:[#allocation2 + $0x20] sm:$0xff] %vm1019, %v2849
      %2964 = vst.msk [vmem:[#allocation2 + $0x28] sm:$0xff] %vm1019, %v2852
      %2965 = vst.msk [vmem:[#allocation2 + $0x30] sm:$0xff] %vm1019, %v2857
      %2966 = vst.msk [vmem:[#allocation2 + $0x38] sm:$0xff] %vm1019, %v2860
      %2967 = vst.msk [vmem:[#allocation2 + $0x40] sm:$0xff] %vm1019, %v2865
      %2968 = vst.msk [vmem:[#allocation2 + $0x48] sm:$0xff] %vm1019, %v2868
      %2969 = vst.msk [vmem:[#allocation2 + $0x50] sm:$0xff] %vm1019, %v2873
      %2970 = vst.msk [vmem:[#allocation2 + $0x58] sm:$0xff] %vm1019, %v2876
      %2971 = vst.msk [vmem:[#allocation2 + $0x60] sm:$0xff] %vm1019, %v2881
      %2972 = vst.msk [vmem:[#allocation2 + $0x68] sm:$0xff] %vm1019, %v2884
      %2973 = vst.msk [vmem:[#allocation2 + $0x70] sm:$0xff] %vm1019, %v2889
      %2974 = vst.msk [vmem:[#allocation2 + $0x78] sm:$0xff] %vm1019, %v2892
      %2975 = vst.msk [vmem:[#allocation2 + $0x80] sm:$0xff] %vm1019, %v2897
      %2976 = vst.msk [vmem:[#allocation2 + $0x88] sm:$0xff] %vm1019, %v2900
      %2977 = vst.msk [vmem:[#allocation2 + $0x90] sm:$0xff] %vm1019, %v2905
      %2978 = vst.msk [vmem:[#allocation2 + $0x98] sm:$0xff] %vm1019, %v2908
      %2979 = vst.msk [vmem:[#allocation2 + $0xa0] sm:$0xff] %vm1019, %v2913
      %2980 = vst.msk [vmem:[#allocation2 + $0xa8] sm:$0xff] %vm1019, %v2916
      %2981 = vst.msk [vmem:[#allocation2 + $0xb0] sm:$0xff] %vm1019, %v2921
      %2982 = vst.msk [vmem:[#allocation2 + $0xb8] sm:$0xff] %vm1019, %v2924
      %2983 = vst.msk [vmem:[#allocation2 + $0xc0] sm:$0xff] %vm1019, %v2929
      %2984 = vst.msk [vmem:[#allocation2 + $0xc8] sm:$0xff] %vm1019, %v2932
      %2985 = vst.msk [vmem:[#allocation2 + $0xd0] sm:$0xff] %vm1019, %v2937
      %2986 = vst.msk [vmem:[#allocation2 + $0xd8] sm:$0xff] %vm1019, %v2940
      %2987 = vst.msk [vmem:[#allocation2 + $0xe0] sm:$0xff] %vm1019, %v2945
      %2988 = vst.msk [vmem:[#allocation2 + $0xe8] sm:$0xff] %vm1019, %v2948
      %2989 = vst.msk [vmem:[#allocation2 + $0xf0] sm:$0xff] %vm1019, %v2953
      %2990 = vst.msk [vmem:[#allocation2 + $0xf8] sm:$0xff] %vm1019, %v2956
      %v2991 = vld [vmem:[#allocation2 + $0x10] sm:$0xff]
      %v2992 = vld [vmem:[#allocation2 + $0x18] sm:$0xff]
      %v2993 = vld [vmem:[#allocation2 + $0x20] sm:$0xff]
      %v2994 = vld [vmem:[#allocation2 + $0x28] sm:$0xff]
      %v2995 = vld [vmem:[#allocation2 + $0x30] sm:$0xff]
      %v2996 = vld [vmem:[#allocation2 + $0x38] sm:$0xff]
      %v2997 = vld [vmem:[#allocation2 + $0x40] sm:$0xff]
      %v2998 = vld [vmem:[#allocation2 + $0x48] sm:$0xff]
      %v2999 = vld [vmem:[#allocation2 + $0x50] sm:$0xff]
      %v3000 = vld [vmem:[#allocation2 + $0x58] sm:$0xff]
      %v3001 = vld [vmem:[#allocation2 + $0x60] sm:$0xff]
      %v3002 = vld [vmem:[#allocation2 + $0x68] sm:$0xff]
      %v3003 = vld [vmem:[#allocation2 + $0x70] sm:$0xff]
      %v3004 = vld [vmem:[#allocation2 + $0x78] sm:$0xff]
      %v3005 = vld [vmem:[#allocation2 + $0x80] sm:$0xff]
      %v3006 = vld [vmem:[#allocation2 + $0x88] sm:$0xff]
      %v3007 = vld [vmem:[#allocation2 + $0x90] sm:$0xff]
      %v3008 = vld [vmem:[#allocation2 + $0x98] sm:$0xff]
      %v3009 = vld [vmem:[#allocation2 + $0xa0] sm:$0xff]
      %v3010 = vld [vmem:[#allocation2 + $0xa8] sm:$0xff]
      %v3011 = vld [vmem:[#allocation2 + $0xb0] sm:$0xff]
      %v3012 = vld [vmem:[#allocation2 + $0xb8] sm:$0xff]
      %v3013 = vld [vmem:[#allocation2 + $0xc0] sm:$0xff]
      %v3014 = vld [vmem:[#allocation2 + $0xc8] sm:$0xff]
      %v3015 = vld [vmem:[#allocation2 + $0xd0] sm:$0xff]
      %v3016 = vld [vmem:[#allocation2 + $0xd8] sm:$0xff]
      %v3017 = vld [vmem:[#allocation2 + $0xe0] sm:$0xff]
      %v3018 = vld [vmem:[#allocation2 + $0xe8] sm:$0xff]
      %v3019 = vld [vmem:[#allocation2 + $0xf0] sm:$0xff]
      %v3020 = vld [vmem:[#allocation2 + $0xf8] sm:$0xff]
      %v3021 = vld [vmem:[%s4] sm:$0xf]
      %v3022 = vld [vmem:[%s4 + $0x4] sm:$0x3]
      %v3025 = vunpack.c.l.b16 %v3021
      %v3026 = vunpack.c.l.b16 %v3022
      %v3027 = vpack.c.b16 %v3026, %v3025
      %v3029 = vsel %vm1158, %v3027, 0
      %3031 = vmatprep.subr.bf16.mxu0 0
      %3032 = vmatpush1.bf16.msra.mxu0 %v3029
      %3033 = vmatprep.subr.bf16.mxu0 0
      %3034 = vmatpush1.bf16.msra.mxu0 0
      %3035 = vmatprep.subr.bf16.mxu0 0
      %3036 = vmatpush1.bf16.msra.mxu0 0
      %3037 = vmatprep.subr.bf16.mxu0 0
      %3038 = vmatpush1.bf16.msra.mxu0 0
      %3039 = vmatprep.subr.bf16.mxu0 0
      %3040 = vmatpush1.bf16.msra.mxu0 0
      %3041 = vmatprep.subr.bf16.mxu0 0
      %3042 = vmatpush1.bf16.msra.mxu0 0
      %3043 = vmatprep.subr.bf16.mxu0 0
      %3044 = vmatpush1.bf16.msra.mxu0 0
      %3045 = vmatprep.subr.bf16.mxu0 0
      %3046 = vmatpush1.bf16.msra.mxu0 0
      %3047 = vmatprep.subr.bf16.mxu0 0
      %3048 = vmatpush1.bf16.msra.mxu0 0
      %3049 = vmatprep.subr.bf16.mxu0 0
      %3050 = vmatpush1.bf16.msra.mxu0 0
      %3051 = vmatprep.subr.bf16.mxu0 0
      %3052 = vmatpush1.bf16.msra.mxu0 0
      %3053 = vmatprep.subr.bf16.mxu0 0
      %3054 = vmatpush1.bf16.msra.mxu0 0
      %3055 = vmatprep.subr.bf16.mxu0 0
      %3056 = vmatpush1.bf16.msra.mxu0 0
      %3057 = vmatprep.subr.bf16.mxu0 0
      %3058 = vmatpush1.bf16.msra.mxu0 0
      %3059 = vmatprep.subr.bf16.mxu0 0
      %3060 = vmatpush1.bf16.msra.mxu0 0
      %3061 = vmatprep.subr.bf16.mxu0 0
      %3062 = vmatpush1.bf16.msra.mxu0 0
      %3063 = vmatprep.mubr.bf16.mxu0 0
      %3064 = vmatmul.mubr.bf16.gmra.mrb[0].mxu0 %v2748
      %v3065 = vpop.f32.mrb[0].mxu0
      %v3066 = vadd.f32 0.0, %v3065
      %v3067 = vpop.f32.mrb[0].mxu0
      %v3068 = vpop.f32.mrb[0].mxu0
      %v3069 = vadd.f32 0.0, %v3068
      %v3070 = vpop.f32.mrb[0].mxu0
      %3071 = vmatprep.mubr.bf16.mxu0 0
      %3072 = vmatmul.mubr.bf16.gmra.mrb[0].mxu0 %v2751
      %v3073 = vpop.f32.mrb[0].mxu0
      %v3074 = vadd.f32 0.0, %v3073
      %v3075 = vpop.f32.mrb[0].mxu0
      %v3076 = vpop.f32.mrb[0].mxu0
      %v3077 = vadd.f32 0.0, %v3076
      %v3078 = vpop.f32.mrb[0].mxu0
      %3079 = vmatprep.mubr.bf16.mxu0 0
      %3080 = vmatmul.mubr.bf16.gmra.mrb[0].mxu0 %v2754
      %v3081 = vpop.f32.mrb[0].mxu0
      %v3082 = vadd.f32 0.0, %v3081
      %v3083 = vpop.f32.mrb[0].mxu0
      %v3084 = vpop.f32.mrb[0].mxu0
      %v3085 = vadd.f32 0.0, %v3084
      %v3086 = vpop.f32.mrb[0].mxu0
      %3087 = vmatprep.mubr.bf16.mxu0 0
      %3088 = vmatmul.mubr.bf16.gmra.mrb[0].mxu0 %v2757
      %v3089 = vpop.f32.mrb[0].mxu0
      %v3090 = vadd.f32 0.0, %v3089
      %v3091 = vpop.f32.mrb[0].mxu0
      %v3092 = vpop.f32.mrb[0].mxu0
      %v3093 = vadd.f32 0.0, %v3092
      %v3094 = vpop.f32.mrb[0].mxu0
      %3095 = vmatprep.mubr.bf16.mxu0 0
      %3096 = vmatmul.mubr.bf16.gmra.mrb[0].mxu0 %v2760
      %v3097 = vpop.f32.mrb[0].mxu0
      %v3098 = vadd.f32 0.0, %v3097
      %v3099 = vpop.f32.mrb[0].mxu0
      %v3100 = vpop.f32.mrb[0].mxu0
      %v3101 = vadd.f32 0.0, %v3100
      %v3102 = vpop.f32.mrb[0].mxu0
      %3103 = vmatprep.mubr.bf16.mxu0 0
      %3104 = vmatmul.mubr.bf16.gmra.mrb[0].mxu0 %v2763
      %v3105 = vpop.f32.mrb[0].mxu0
      %v3106 = vadd.f32 0.0, %v3105
      %v3107 = vpop.f32.mrb[0].mxu0
      %v3108 = vpop.f32.mrb[0].mxu0
      %v3109 = vadd.f32 0.0, %v3108
      %v3110 = vpop.f32.mrb[0].mxu0
      %3111 = vmatprep.mubr.bf16.mxu0 0
      %3112 = vmatmul.mubr.bf16.gmra.mrb[0].mxu0 %v2766
      %v3113 = vpop.f32.mrb[0].mxu0
      %v3114 = vadd.f32 0.0, %v3113
      %v3115 = vpop.f32.mrb[0].mxu0
      %v3116 = vpop.f32.mrb[0].mxu0
      %v3117 = vadd.f32 0.0, %v3116
      %v3118 = vpop.f32.mrb[0].mxu0
      %3119 = vmatprep.mubr.bf16.mxu0 0
      %3120 = vmatmul.mubr.bf16.gmra.mrb[0].mxu0 %v2769
      %v3121 = vpop.f32.mrb[0].mxu0
      %v3122 = vadd.f32 0.0, %v3121
      %v3123 = vpop.f32.mrb[0].mxu0
      %v3124 = vpop.f32.mrb[0].mxu0
      %v3125 = vadd.f32 0.0, %v3124
      %v3126 = vpop.f32.mrb[0].mxu0
      %3127 = vmatprep.mubr.bf16.mxu0 0
      %3128 = vmatmul.mubr.bf16.gmra.mrb[0].mxu0 %v2772
      %v3129 = vpop.f32.mrb[0].mxu0
      %v3130 = vadd.f32 0.0, %v3129
      %v3131 = vpop.f32.mrb[0].mxu0
      %v3132 = vpop.f32.mrb[0].mxu0
      %v3133 = vadd.f32 0.0, %v3132
      %v3134 = vpop.f32.mrb[0].mxu0
      %3135 = vmatprep.mubr.bf16.mxu0 0
      %3136 = vmatmul.mubr.bf16.gmra.mrb[0].mxu0 %v2775
      %v3137 = vpop.f32.mrb[0].mxu0
      %v3138 = vadd.f32 0.0, %v3137
      %v3139 = vpop.f32.mrb[0].mxu0
      %v3140 = vpop.f32.mrb[0].mxu0
      %v3141 = vadd.f32 0.0, %v3140
      %v3142 = vpop.f32.mrb[0].mxu0
      %3143 = vmatprep.mubr.bf16.mxu0 0
      %3144 = vmatmul.mubr.bf16.gmra.mrb[0].mxu0 %v2778
      %v3145 = vpop.f32.mrb[0].mxu0
      %v3146 = vadd.f32 0.0, %v3145
      %v3147 = vpop.f32.mrb[0].mxu0
      %v3148 = vpop.f32.mrb[0].mxu0
      %v3149 = vadd.f32 0.0, %v3148
      %v3150 = vpop.f32.mrb[0].mxu0
      %3151 = vmatprep.mubr.bf16.mxu0 0
      %3152 = vmatmul.mubr.bf16.gmra.mrb[0].mxu0 %v2781
      %v3153 = vpop.f32.mrb[0].mxu0
      %v3154 = vadd.f32 0.0, %v3153
      %v3155 = vpop.f32.mrb[0].mxu0
      %v3156 = vpop.f32.mrb[0].mxu0
      %v3157 = vadd.f32 0.0, %v3156
      %v3158 = vpop.f32.mrb[0].mxu0
      %3159 = vmatprep.mubr.bf16.mxu0 0
      %3160 = vmatmul.mubr.bf16.gmra.mrb[0].mxu0 %v2784
      %v3161 = vpop.f32.mrb[0].mxu0
      %v3162 = vadd.f32 0.0, %v3161
      %v3163 = vpop.f32.mrb[0].mxu0
      %v3164 = vpop.f32.mrb[0].mxu0
      %v3165 = vadd.f32 0.0, %v3164
      %v3166 = vpop.f32.mrb[0].mxu0
      %3167 = vmatprep.mubr.bf16.mxu0 0
      %3168 = vmatmul.mubr.bf16.gmra.mrb[0].mxu0 %v2787
      %v3169 = vpop.f32.mrb[0].mxu0
      %v3170 = vadd.f32 0.0, %v3169
      %v3171 = vpop.f32.mrb[0].mxu0
      %v3172 = vpop.f32.mrb[0].mxu0
      %v3173 = vadd.f32 0.0, %v3172
      %v3174 = vpop.f32.mrb[0].mxu0
      %3175 = vmatprep.mubr.bf16.mxu0 0
      %3176 = vmatmul.mubr.bf16.gmra.mrb[0].mxu0 %v2790
      %v3177 = vpop.f32.mrb[0].mxu0
      %v3178 = vadd.f32 0.0, %v3177
      %v3179 = vpop.f32.mrb[0].mxu0
      %v3180 = vpop.f32.mrb[0].mxu0
      %v3181 = vadd.f32 0.0, %v3180
      %v3182 = vpop.f32.mrb[0].mxu0
      %3183 = vdwg.mxu0
      %v3184 = vadd.f32 %v2991, %v3066
      %v3185 = vadd.f32 %v2992, %v3069
      %v3186 = vadd.f32 %v2993, %v3074
      %v3187 = vadd.f32 %v2994, %v3077
      %v3188 = vadd.f32 %v2995, %v3082
      %v3189 = vadd.f32 %v2996, %v3085
      %v3190 = vadd.f32 %v2997, %v3090
      %v3191 = vadd.f32 %v2998, %v3093
      %v3192 = vadd.f32 %v2999, %v3098
      %v3193 = vadd.f32 %v3000, %v3101
      %v3194 = vadd.f32 %v3001, %v3106
      %v3195 = vadd.f32 %v3002, %v3109
      %v3196 = vadd.f32 %v3003, %v3114
      %v3197 = vadd.f32 %v3004, %v3117
      %v3198 = vadd.f32 %v3005, %v3122
      %v3199 = vadd.f32 %v3006, %v3125
      %v3200 = vadd.f32 %v3007, %v3130
      %v3201 = vadd.f32 %v3008, %v3133
      %v3202 = vadd.f32 %v3009, %v3138
      %v3203 = vadd.f32 %v3010, %v3141
      %v3204 = vadd.f32 %v3011, %v3146
      %v3205 = vadd.f32 %v3012, %v3149
      %v3206 = vadd.f32 %v3013, %v3154
      %v3207 = vadd.f32 %v3014, %v3157
      %v3208 = vadd.f32 %v3015, %v3162
      %v3209 = vadd.f32 %v3016, %v3165
      %v3210 = vadd.f32 %v3017, %v3170
      %v3211 = vadd.f32 %v3018, %v3173
      %v3212 = vadd.f32 %v3019, %v3178
      %v3213 = vadd.f32 %v3020, %v3181
      %3214 = vst.msk [vmem:[#allocation2 + $0x10] sm:$0xff] %vm1019, %v3184
      %3215 = vst.msk [vmem:[#allocation2 + $0x18] sm:$0xff] %vm1019, %v3185
      %3216 = vst.msk [vmem:[#allocation2 + $0x20] sm:$0xff] %vm1019, %v3186
      %3217 = vst.msk [vmem:[#allocation2 + $0x28] sm:$0xff] %vm1019, %v3187
      %3218 = vst.msk [vmem:[#allocation2 + $0x30] sm:$0xff] %vm1019, %v3188
      %3219 = vst.msk [vmem:[#allocation2 + $0x38] sm:$0xff] %vm1019, %v3189
      %3220 = vst.msk [vmem:[#allocation2 + $0x40] sm:$0xff] %vm1019, %v3190
      %3221 = vst.msk [vmem:[#allocation2 + $0x48] sm:$0xff] %vm1019, %v3191
      %3222 = vst.msk [vmem:[#allocation2 + $0x50] sm:$0xff] %vm1019, %v3192
      %3223 = vst.msk [vmem:[#allocation2 + $0x58] sm:$0xff] %vm1019, %v3193
      %3224 = vst.msk [vmem:[#allocation2 + $0x60] sm:$0xff] %vm1019, %v3194
      %3225 = vst.msk [vmem:[#allocation2 + $0x68] sm:$0xff] %vm1019, %v3195
      %3226 = vst.msk [vmem:[#allocation2 + $0x70] sm:$0xff] %vm1019, %v3196
      %3227 = vst.msk [vmem:[#allocation2 + $0x78] sm:$0xff] %vm1019, %v3197
      %3228 = vst.msk [vmem:[#allocation2 + $0x80] sm:$0xff] %vm1019, %v3198
      %3229 = vst.msk [vmem:[#allocation2 + $0x88] sm:$0xff] %vm1019, %v3199
      %3230 = vst.msk [vmem:[#allocation2 + $0x90] sm:$0xff] %vm1019, %v3200
      %3231 = vst.msk [vmem:[#allocation2 + $0x98] sm:$0xff] %vm1019, %v3201
      %3232 = vst.msk [vmem:[#allocation2 + $0xa0] sm:$0xff] %vm1019, %v3202
      %3233 = vst.msk [vmem:[#allocation2 + $0xa8] sm:$0xff] %vm1019, %v3203
      %3234 = vst.msk [vmem:[#allocation2 + $0xb0] sm:$0xff] %vm1019, %v3204
      %3235 = vst.msk [vmem:[#allocation2 + $0xb8] sm:$0xff] %vm1019, %v3205
      %3236 = vst.msk [vmem:[#allocation2 + $0xc0] sm:$0xff] %vm1019, %v3206
      %3237 = vst.msk [vmem:[#allocation2 + $0xc8] sm:$0xff] %vm1019, %v3207
      %3238 = vst.msk [vmem:[#allocation2 + $0xd0] sm:$0xff] %vm1019, %v3208
      %3239 = vst.msk [vmem:[#allocation2 + $0xd8] sm:$0xff] %vm1019, %v3209
      %3240 = vst.msk [vmem:[#allocation2 + $0xe0] sm:$0xff] %vm1019, %v3210
      %3241 = vst.msk [vmem:[#allocation2 + $0xe8] sm:$0xff] %vm1019, %v3211
      %3242 = vst.msk [vmem:[#allocation2 + $0xf0] sm:$0xff] %vm1019, %v3212
      %3243 = vst.msk [vmem:[#allocation2 + $0xf8] sm:$0xff] %vm1019, %v3213
      %v3244 = vld [vmem:[#allocation2] sm:$0xff]
      %v3245 = vld [vmem:[#allocation2 + $0x8] sm:$0xff]
      %v3246 = vld [vmem:[#allocation2 + $0x10] sm:$0xff]
      %v3247 = vld [vmem:[#allocation2 + $0x18] sm:$0xff]
      %v3248 = vld [vmem:[#allocation2 + $0x20] sm:$0xff]
      %v3249 = vld [vmem:[#allocation2 + $0x28] sm:$0xff]
      %v3250 = vld [vmem:[#allocation2 + $0x30] sm:$0xff]
      %v3251 = vld [vmem:[#allocation2 + $0x38] sm:$0xff]
      %v3252 = vld [vmem:[#allocation2 + $0x40] sm:$0xff]
      %v3253 = vld [vmem:[#allocation2 + $0x48] sm:$0xff]
      %v3254 = vld [vmem:[#allocation2 + $0x50] sm:$0xff]
      %v3255 = vld [vmem:[#allocation2 + $0x58] sm:$0xff]
      %v3256 = vld [vmem:[#allocation2 + $0x60] sm:$0xff]
      %v3257 = vld [vmem:[#allocation2 + $0x68] sm:$0xff]
      %v3258 = vld [vmem:[#allocation2 + $0x70] sm:$0xff]
      %v3259 = vld [vmem:[#allocation2 + $0x78] sm:$0xff]
      %v3260 = vld [vmem:[#allocation2 + $0x80] sm:$0xff]
      %v3261 = vld [vmem:[#allocation2 + $0x88] sm:$0xff]
      %v3262 = vld [vmem:[#allocation2 + $0x90] sm:$0xff]
      %v3263 = vld [vmem:[#allocation2 + $0x98] sm:$0xff]
      %v3264 = vld [vmem:[#allocation2 + $0xa0] sm:$0xff]
      %v3265 = vld [vmem:[#allocation2 + $0xa8] sm:$0xff]
      %v3266 = vld [vmem:[#allocation2 + $0xb0] sm:$0xff]
      %v3267 = vld [vmem:[#allocation2 + $0xb8] sm:$0xff]
      %v3268 = vld [vmem:[#allocation2 + $0xc0] sm:$0xff]
      %v3269 = vld [vmem:[#allocation2 + $0xc8] sm:$0xff]
      %v3270 = vld [vmem:[#allocation2 + $0xd0] sm:$0xff]
      %v3271 = vld [vmem:[#allocation2 + $0xd8] sm:$0xff]
      %v3272 = vld [vmem:[#allocation2 + $0xe0] sm:$0xff]
      %v3273 = vld [vmem:[#allocation2 + $0xe8] sm:$0xff]
      %s3274 = scalar_lea.vmem %s4, 16
      %v3275 = vld [vmem:[%s3274] sm:$0xf]
      %v3276 = vld [vmem:[%s3274 + $0x4] sm:$0x3]
      %v3279 = vunpack.c.l.b16 %v3275
      %v3280 = vunpack.c.l.b16 %v3276
      %v3281 = vpack.c.b16 %v3280, %v3279
      %v3283 = vsel %vm1158, %v3281, 0
      %3285 = vmatprep.subr.bf16.mxu0 0
      %3286 = vmatpush1.bf16.msra.mxu0 %v3283
      %3287 = vmatprep.subr.bf16.mxu0 0
      %3288 = vmatpush1.bf16.msra.mxu0 0
      %3289 = vmatprep.subr.bf16.mxu0 0
      %3290 = vmatpush1.bf16.msra.mxu0 0
      %3291 = vmatprep.subr.bf16.mxu0 0
      %3292 = vmatpush1.bf16.msra.mxu0 0
      %3293 = vmatprep.subr.bf16.mxu0 0
      %3294 = vmatpush1.bf16.msra.mxu0 0
      %3295 = vmatprep.subr.bf16.mxu0 0
      %3296 = vmatpush1.bf16.msra.mxu0 0
      %3297 = vmatprep.subr.bf16.mxu0 0
      %3298 = vmatpush1.bf16.msra.mxu0 0
      %3299 = vmatprep.subr.bf16.mxu0 0
      %3300 = vmatpush1.bf16.msra.mxu0 0
      %3301 = vmatprep.subr.bf16.mxu0 0
      %3302 = vmatpush1.bf16.msra.mxu0 0
      %3303 = vmatprep.subr.bf16.mxu0 0
      %3304 = vmatpush1.bf16.msra.mxu0 0
      %3305 = vmatprep.subr.bf16.mxu0 0
      %3306 = vmatpush1.bf16.msra.mxu0 0
      %3307 = vmatprep.subr.bf16.mxu0 0
      %3308 = vmatpush1.bf16.msra.mxu0 0
      %3309 = vmatprep.subr.bf16.mxu0 0
      %3310 = vmatpush1.bf16.msra.mxu0 0
      %3311 = vmatprep.subr.bf16.mxu0 0
      %3312 = vmatpush1.bf16.msra.mxu0 0
      %3313 = vmatprep.subr.bf16.mxu0 0
      %3314 = vmatpush1.bf16.msra.mxu0 0
      %3315 = vmatprep.subr.bf16.mxu0 0
      %3316 = vmatpush1.bf16.msra.mxu0 0
      %3317 = vmatprep.mubr.bf16.mxu0 0
      %3318 = vmatmul.mubr.bf16.gmra.mrb[0].mxu0 %v2751
      %v3319 = vpop.f32.mrb[0].mxu0
      %v3320 = vadd.f32 0.0, %v3319
      %v3321 = vpop.f32.mrb[0].mxu0
      %v3322 = vpop.f32.mrb[0].mxu0
      %v3323 = vadd.f32 0.0, %v3322
      %v3324 = vpop.f32.mrb[0].mxu0
      %3325 = vmatprep.mubr.bf16.mxu0 0
      %3326 = vmatmul.mubr.bf16.gmra.mrb[0].mxu0 %v2754
      %v3327 = vpop.f32.mrb[0].mxu0
      %v3328 = vadd.f32 0.0, %v3327
      %v3329 = vpop.f32.mrb[0].mxu0
      %v3330 = vpop.f32.mrb[0].mxu0
      %v3331 = vadd.f32 0.0, %v3330
      %v3332 = vpop.f32.mrb[0].mxu0
      %3333 = vmatprep.mubr.bf16.mxu0 0
      %3334 = vmatmul.mubr.bf16.gmra.mrb[0].mxu0 %v2757
      %v3335 = vpop.f32.mrb[0].mxu0
      %v3336 = vadd.f32 0.0, %v3335
      %v3337 = vpop.f32.mrb[0].mxu0
      %v3338 = vpop.f32.mrb[0].mxu0
      %v3339 = vadd.f32 0.0, %v3338
      %v3340 = vpop.f32.mrb[0].mxu0
      %3341 = vmatprep.mubr.bf16.mxu0 0
      %3342 = vmatmul.mubr.bf16.gmra.mrb[0].mxu0 %v2760
      %v3343 = vpop.f32.mrb[0].mxu0
      %v3344 = vadd.f32 0.0, %v3343
      %v3345 = vpop.f32.mrb[0].mxu0
      %v3346 = vpop.f32.mrb[0].mxu0
      %v3347 = vadd.f32 0.0, %v3346
      %v3348 = vpop.f32.mrb[0].mxu0
      %3349 = vmatprep.mubr.bf16.mxu0 0
      %3350 = vmatmul.mubr.bf16.gmra.mrb[0].mxu0 %v2763
      %v3351 = vpop.f32.mrb[0].mxu0
      %v3352 = vadd.f32 0.0, %v3351
      %v3353 = vpop.f32.mrb[0].mxu0
      %v3354 = vpop.f32.mrb[0].mxu0
      %v3355 = vadd.f32 0.0, %v3354
      %v3356 = vpop.f32.mrb[0].mxu0
      %3357 = vmatprep.mubr.bf16.mxu0 0
      %3358 = vmatmul.mubr.bf16.gmra.mrb[0].mxu0 %v2766
      %v3359 = vpop.f32.mrb[0].mxu0
      %v3360 = vadd.f32 0.0, %v3359
      %v3361 = vpop.f32.mrb[0].mxu0
      %v3362 = vpop.f32.mrb[0].mxu0
      %v3363 = vadd.f32 0.0, %v3362
      %v3364 = vpop.f32.mrb[0].mxu0
      %3365 = vmatprep.mubr.bf16.mxu0 0
      %3366 = vmatmul.mubr.bf16.gmra.mrb[0].mxu0 %v2769
      %v3367 = vpop.f32.mrb[0].mxu0
      %v3368 = vadd.f32 0.0, %v3367
      %v3369 = vpop.f32.mrb[0].mxu0
      %v3370 = vpop.f32.mrb[0].mxu0
      %v3371 = vadd.f32 0.0, %v3370
      %v3372 = vpop.f32.mrb[0].mxu0
      %3373 = vmatprep.mubr.bf16.mxu0 0
      %3374 = vmatmul.mubr.bf16.gmra.mrb[0].mxu0 %v2772
      %v3375 = vpop.f32.mrb[0].mxu0
      %v3376 = vadd.f32 0.0, %v3375
      %v3377 = vpop.f32.mrb[0].mxu0
      %v3378 = vpop.f32.mrb[0].mxu0
      %v3379 = vadd.f32 0.0, %v3378
      %v3380 = vpop.f32.mrb[0].mxu0
      %3381 = vmatprep.mubr.bf16.mxu0 0
      %3382 = vmatmul.mubr.bf16.gmra.mrb[0].mxu0 %v2775
      %v3383 = vpop.f32.mrb[0].mxu0
      %v3384 = vadd.f32 0.0, %v3383
      %v3385 = vpop.f32.mrb[0].mxu0
      %v3386 = vpop.f32.mrb[0].mxu0
      %v3387 = vadd.f32 0.0, %v3386
      %v3388 = vpop.f32.mrb[0].mxu0
      %3389 = vmatprep.mubr.bf16.mxu0 0
      %3390 = vmatmul.mubr.bf16.gmra.mrb[0].mxu0 %v2778
      %v3391 = vpop.f32.mrb[0].mxu0
      %v3392 = vadd.f32 0.0, %v3391
      %v3393 = vpop.f32.mrb[0].mxu0
      %v3394 = vpop.f32.mrb[0].mxu0
      %v3395 = vadd.f32 0.0, %v3394
      %v3396 = vpop.f32.mrb[0].mxu0
      %3397 = vmatprep.mubr.bf16.mxu0 0
      %3398 = vmatmul.mubr.bf16.gmra.mrb[0].mxu0 %v2781
      %v3399 = vpop.f32.mrb[0].mxu0
      %v3400 = vadd.f32 0.0, %v3399
      %v3401 = vpop.f32.mrb[0].mxu0
      %v3402 = vpop.f32.mrb[0].mxu0
      %v3403 = vadd.f32 0.0, %v3402
      %v3404 = vpop.f32.mrb[0].mxu0
      %3405 = vmatprep.mubr.bf16.mxu0 0
      %3406 = vmatmul.mubr.bf16.gmra.mrb[0].mxu0 %v2784
      %v3407 = vpop.f32.mrb[0].mxu0
      %v3408 = vadd.f32 0.0, %v3407
      %v3409 = vpop.f32.mrb[0].mxu0
      %v3410 = vpop.f32.mrb[0].mxu0
      %v3411 = vadd.f32 0.0, %v3410
      %v3412 = vpop.f32.mrb[0].mxu0
      %3413 = vmatprep.mubr.bf16.mxu0 0
      %3414 = vmatmul.mubr.bf16.gmra.mrb[0].mxu0 %v2787
      %v3415 = vpop.f32.mrb[0].mxu0
      %v3416 = vadd.f32 0.0, %v3415
      %v3417 = vpop.f32.mrb[0].mxu0
      %v3418 = vpop.f32.mrb[0].mxu0
      %v3419 = vadd.f32 0.0, %v3418
      %v3420 = vpop.f32.mrb[0].mxu0
      %3421 = vmatprep.mubr.bf16.mxu0 0
      %3422 = vmatmul.mubr.bf16.gmra.mrb[0].mxu0 %v2790
      %v3423 = vpop.f32.mrb[0].mxu0
      %v3424 = vadd.f32 0.0, %v3423
      %v3425 = vpop.f32.mrb[0].mxu0
      %v3426 = vpop.f32.mrb[0].mxu0
      %v3427 = vadd.f32 0.0, %v3426
      %v3428 = vpop.f32.mrb[0].mxu0
      %3429 = vmatprep.mubr.bf16.mxu0 0
      %3430 = vmatmul.mubr.bf16.gmra.mrb[0].mxu0 %v2793
      %v3431 = vpop.f32.mrb[0].mxu0
      %v3432 = vadd.f32 0.0, %v3431
      %v3433 = vpop.f32.mrb[0].mxu0
      %v3434 = vpop.f32.mrb[0].mxu0
      %v3435 = vadd.f32 0.0, %v3434
      %v3436 = vpop.f32.mrb[0].mxu0
      %3437 = vdwg.mxu0
      %v3438 = vadd.f32 %v3244, %v3320
      %v3439 = vadd.f32 %v3245, %v3323
      %v3440 = vadd.f32 %v3246, %v3328
      %v3441 = vadd.f32 %v3247, %v3331
      %v3442 = vadd.f32 %v3248, %v3336
      %v3443 = vadd.f32 %v3249, %v3339
      %v3444 = vadd.f32 %v3250, %v3344
      %v3445 = vadd.f32 %v3251, %v3347
      %v3446 = vadd.f32 %v3252, %v3352
      %v3447 = vadd.f32 %v3253, %v3355
      %v3448 = vadd.f32 %v3254, %v3360
      %v3449 = vadd.f32 %v3255, %v3363
      %v3450 = vadd.f32 %v3256, %v3368
      %v3451 = vadd.f32 %v3257, %v3371
      %v3452 = vadd.f32 %v3258, %v3376
      %v3453 = vadd.f32 %v3259, %v3379
      %v3454 = vadd.f32 %v3260, %v3384
      %v3455 = vadd.f32 %v3261, %v3387
      %v3456 = vadd.f32 %v3262, %v3392
      %v3457 = vadd.f32 %v3263, %v3395
      %v3458 = vadd.f32 %v3264, %v3400
      %v3459 = vadd.f32 %v3265, %v3403
      %v3460 = vadd.f32 %v3266, %v3408
      %v3461 = vadd.f32 %v3267, %v3411
      %v3462 = vadd.f32 %v3268, %v3416
      %v3463 = vadd.f32 %v3269, %v3419
      %v3464 = vadd.f32 %v3270, %v3424
      %v3465 = vadd.f32 %v3271, %v3427
      %v3466 = vadd.f32 %v3272, %v3432
      %v3467 = vadd.f32 %v3273, %v3435
      %3468 = vst.msk [vmem:[#allocation2] sm:$0xff] %vm1019, %v3438
      %3469 = vst.msk [vmem:[#allocation2 + $0x8] sm:$0xff] %vm1019, %v3439
      %3470 = vst.msk [vmem:[#allocation2 + $0x10] sm:$0xff] %vm1019, %v3440
      %3471 = vst.msk [vmem:[#allocation2 + $0x18] sm:$0xff] %vm1019, %v3441
      %3472 = vst.msk [vmem:[#allocation2 + $0x20] sm:$0xff] %vm1019, %v3442
      %3473 = vst.msk [vmem:[#allocation2 + $0x28] sm:$0xff] %vm1019, %v3443
      %3474 = vst.msk [vmem:[#allocation2 + $0x30] sm:$0xff] %vm1019, %v3444
      %3475 = vst.msk [vmem:[#allocation2 + $0x38] sm:$0xff] %vm1019, %v3445
      %3476 = vst.msk [vmem:[#allocation2 + $0x40] sm:$0xff] %vm1019, %v3446
      %3477 = vst.msk [vmem:[#allocation2 + $0x48] sm:$0xff] %vm1019, %v3447
      %3478 = vst.msk [vmem:[#allocation2 + $0x50] sm:$0xff] %vm1019, %v3448
      %3479 = vst.msk [vmem:[#allocation2 + $0x58] sm:$0xff] %vm1019, %v3449
      %3480 = vst.msk [vmem:[#allocation2 + $0x60] sm:$0xff] %vm1019, %v3450
      %3481 = vst.msk [vmem:[#allocation2 + $0x68] sm:$0xff] %vm1019, %v3451
      %3482 = vst.msk [vmem:[#allocation2 + $0x70] sm:$0xff] %vm1019, %v3452
      %3483 = vst.msk [vmem:[#allocation2 + $0x78] sm:$0xff] %vm1019, %v3453
      %3484 = vst.msk [vmem:[#allocation2 + $0x80] sm:$0xff] %vm1019, %v3454
      %3485 = vst.msk [vmem:[#allocation2 + $0x88] sm:$0xff] %vm1019, %v3455
      %3486 = vst.msk [vmem:[#allocation2 + $0x90] sm:$0xff] %vm1019, %v3456
      %3487 = vst.msk [vmem:[#allocation2 + $0x98] sm:$0xff] %vm1019, %v3457
      %3488 = vst.msk [vmem:[#allocation2 + $0xa0] sm:$0xff] %vm1019, %v3458
      %3489 = vst.msk [vmem:[#allocation2 + $0xa8] sm:$0xff] %vm1019, %v3459
      %3490 = vst.msk [vmem:[#allocation2 + $0xb0] sm:$0xff] %vm1019, %v3460
      %3491 = vst.msk [vmem:[#allocation2 + $0xb8] sm:$0xff] %vm1019, %v3461
      %3492 = vst.msk [vmem:[#allocation2 + $0xc0] sm:$0xff] %vm1019, %v3462
      %3493 = vst.msk [vmem:[#allocation2 + $0xc8] sm:$0xff] %vm1019, %v3463
      %3494 = vst.msk [vmem:[#allocation2 + $0xd0] sm:$0xff] %vm1019, %v3464
      %3495 = vst.msk [vmem:[#allocation2 + $0xd8] sm:$0xff] %vm1019, %v3465
      %3496 = vst.msk [vmem:[#allocation2 + $0xe0] sm:$0xff] %vm1019, %v3466
      %3497 = vst.msk [vmem:[#allocation2 + $0xe8] sm:$0xff] %vm1019, %v3467
      %v3498 = vld [vmem:[#allocation2] sm:$0xff]
      %v3499 = vld [vmem:[#allocation2 + $0x8] sm:$0xff]
      %v3500 = vld [vmem:[#allocation2 + $0x10] sm:$0xff]
      %v3501 = vld [vmem:[#allocation2 + $0x18] sm:$0xff]
      %v3502 = vld [vmem:[#allocation2 + $0x20] sm:$0xff]
      %v3503 = vld [vmem:[#allocation2 + $0x28] sm:$0xff]
      %v3504 = vld [vmem:[#allocation2 + $0x30] sm:$0xff]
      %v3505 = vld [vmem:[#allocation2 + $0x38] sm:$0xff]
      %v3506 = vld [vmem:[#allocation2 + $0x40] sm:$0xff]
      %v3507 = vld [vmem:[#allocation2 + $0x48] sm:$0xff]
      %v3508 = vld [vmem:[#allocation2 + $0x50] sm:$0xff]
      %v3509 = vld [vmem:[#allocation2 + $0x58] sm:$0xff]
      %v3510 = vld [vmem:[#allocation2 + $0x60] sm:$0xff]
      %v3511 = vld [vmem:[#allocation2 + $0x68] sm:$0xff]
      %v3512 = vld [vmem:[#allocation2 + $0x70] sm:$0xff]
      %v3513 = vld [vmem:[#allocation2 + $0x78] sm:$0xff]
      %v3514 = vld [vmem:[#allocation2 + $0x80] sm:$0xff]
      %v3515 = vld [vmem:[#allocation2 + $0x88] sm:$0xff]
      %v3516 = vld [vmem:[#allocation2 + $0x90] sm:$0xff]
      %v3517 = vld [vmem:[#allocation2 + $0x98] sm:$0xff]
      %v3518 = vld [vmem:[#allocation2 + $0xa0] sm:$0xff]
      %v3519 = vld [vmem:[#allocation2 + $0xa8] sm:$0xff]
      %v3520 = vld [vmem:[#allocation2 + $0xb0] sm:$0xff]
      %v3521 = vld [vmem:[#allocation2 + $0xb8] sm:$0xff]
      %v3522 = vld [vmem:[#allocation2 + $0xc0] sm:$0xff]
      %v3523 = vld [vmem:[#allocation2 + $0xc8] sm:$0xff]
      %v3524 = vld [vmem:[#allocation2 + $0xd0] sm:$0xff]
      %v3525 = vld [vmem:[#allocation2 + $0xd8] sm:$0xff]
      %v3526 = vld [vmem:[#allocation2 + $0xe0] sm:$0xff]
      %v3527 = vld [vmem:[#allocation2 + $0xe8] sm:$0xff]
      %v3528 = vld [vmem:[#allocation2 + $0xf0] sm:$0xff]
      %v3529 = vld [vmem:[#allocation2 + $0xf8] sm:$0xff]
      %v3530 = vsel %vm1019, %v3498, 0.0
      %v3531 = vsel %vm1019, %v3499, 0.0
      %v3532 = vadd.f32 %v3530, %v3531
      %v3533 = vsel %vm1019, %v3500, 0.0
      %v3534 = vadd.f32 %v3532, %v3533
      %v3535 = vsel %vm1019, %v3501, 0.0
      %v3536 = vadd.f32 %v3534, %v3535
      %v3537 = vsel %vm1019, %v3502, 0.0
      %v3538 = vadd.f32 %v3536, %v3537
      %v3539 = vsel %vm1019, %v3503, 0.0
      %v3540 = vadd.f32 %v3538, %v3539
      %v3541 = vsel %vm1019, %v3504, 0.0
      %v3542 = vadd.f32 %v3540, %v3541
      %v3543 = vsel %vm1019, %v3505, 0.0
      %v3544 = vadd.f32 %v3542, %v3543
      %v3545 = vsel %vm1019, %v3506, 0.0
      %v3546 = vadd.f32 %v3544, %v3545
      %v3547 = vsel %vm1019, %v3507, 0.0
      %v3548 = vadd.f32 %v3546, %v3547
      %v3549 = vsel %vm1019, %v3508, 0.0
      %v3550 = vadd.f32 %v3548, %v3549
      %v3551 = vsel %vm1019, %v3509, 0.0
      %v3552 = vadd.f32 %v3550, %v3551
      %v3553 = vsel %vm1019, %v3510, 0.0
      %v3554 = vadd.f32 %v3552, %v3553
      %v3555 = vsel %vm1019, %v3511, 0.0
      %v3556 = vadd.f32 %v3554, %v3555
      %v3557 = vsel %vm1019, %v3512, 0.0
      %v3558 = vadd.f32 %v3556, %v3557
      %v3559 = vsel %vm1019, %v3513, 0.0
      %v3560 = vadd.f32 %v3558, %v3559
      %v3561 = vsel %vm1019, %v3514, 0.0
      %v3562 = vadd.f32 %v3560, %v3561
      %v3563 = vsel %vm1019, %v3515, 0.0
      %v3564 = vadd.f32 %v3562, %v3563
      %v3565 = vsel %vm1019, %v3516, 0.0
      %v3566 = vadd.f32 %v3564, %v3565
      %v3567 = vsel %vm1019, %v3517, 0.0
      %v3568 = vadd.f32 %v3566, %v3567
      %v3569 = vsel %vm1019, %v3518, 0.0
      %v3570 = vadd.f32 %v3568, %v3569
      %v3571 = vsel %vm1019, %v3519, 0.0
      %v3572 = vadd.f32 %v3570, %v3571
      %v3573 = vsel %vm1019, %v3520, 0.0
      %v3574 = vadd.f32 %v3572, %v3573
      %v3575 = vsel %vm1019, %v3521, 0.0
      %v3576 = vadd.f32 %v3574, %v3575
      %v3577 = vsel %vm1019, %v3522, 0.0
      %v3578 = vadd.f32 %v3576, %v3577
      %v3579 = vsel %vm1019, %v3523, 0.0
      %v3580 = vadd.f32 %v3578, %v3579
      %v3581 = vsel %vm1019, %v3524, 0.0
      %v3582 = vadd.f32 %v3580, %v3581
      %v3583 = vsel %vm1019, %v3525, 0.0
      %v3584 = vadd.f32 %v3582, %v3583
      %v3585 = vsel %vm1019, %v3526, 0.0
      %v3586 = vadd.f32 %v3584, %v3585
      %v3587 = vsel %vm1019, %v3527, 0.0
      %v3588 = vadd.f32 %v3586, %v3587
      %v3589 = vsel %vm1019, %v3528, 0.0
      %v3590 = vadd.f32 %v3588, %v3589
      %v3591 = vsel %vm1019, %v3529, 0.0
      %v3592 = vadd.f32 %v3590, %v3591
      %v3593 = vrot.slane %v3592, 4
      %v3594 = vadd.f32 %v3592, %v3593
      %v3595 = vrot.slane %v3594, 2
      %v3596 = vadd.f32 %v3594, %v3595
      %v3597 = vrot.slane %v3596, 1
      %v3598 = vadd.f32 %v3596, %v3597
      %v3599 = vmul.f32 %v3598, 0.00390625
      %v3600 = vsub.f32 %v3498, %v3599
      %v3601 = vsub.f32 %v3499, %v3599
      %v3602 = vsub.f32 %v3500, %v3599
      %v3603 = vsub.f32 %v3501, %v3599
      %v3604 = vsub.f32 %v3502, %v3599
      %v3605 = vsub.f32 %v3503, %v3599
      %v3606 = vsub.f32 %v3504, %v3599
      %v3607 = vsub.f32 %v3505, %v3599
      %v3608 = vsub.f32 %v3506, %v3599
      %v3609 = vsub.f32 %v3507, %v3599
      %v3610 = vsub.f32 %v3508, %v3599
      %v3611 = vsub.f32 %v3509, %v3599
      %v3612 = vsub.f32 %v3510, %v3599
      %v3613 = vsub.f32 %v3511, %v3599
      %v3614 = vsub.f32 %v3512, %v3599
      %v3615 = vsub.f32 %v3513, %v3599
      %v3616 = vsub.f32 %v3514, %v3599
      %v3617 = vsub.f32 %v3515, %v3599
      %v3618 = vsub.f32 %v3516, %v3599
      %v3619 = vsub.f32 %v3517, %v3599
      %v3620 = vsub.f32 %v3518, %v3599
      %v3621 = vsub.f32 %v3519, %v3599
      %v3622 = vsub.f32 %v3520, %v3599
      %v3623 = vsub.f32 %v3521, %v3599
      %v3624 = vsub.f32 %v3522, %v3599
      %v3625 = vsub.f32 %v3523, %v3599
      %v3626 = vsub.f32 %v3524, %v3599
      %v3627 = vsub.f32 %v3525, %v3599
      %v3628 = vsub.f32 %v3526, %v3599
      %v3629 = vsub.f32 %v3527, %v3599
      %v3630 = vsub.f32 %v3528, %v3599
      %v3631 = vsub.f32 %v3529, %v3599
      %v3632 = vmul.f32 %v3600, %v3600
      %v3633 = vmul.f32 %v3601, %v3601
      %v3634 = vmul.f32 %v3602, %v3602
      %v3635 = vmul.f32 %v3603, %v3603
      %v3636 = vmul.f32 %v3604, %v3604
      %v3637 = vmul.f32 %v3605, %v3605
      %v3638 = vmul.f32 %v3606, %v3606
      %v3639 = vmul.f32 %v3607, %v3607
      %v3640 = vmul.f32 %v3608, %v3608
      %v3641 = vmul.f32 %v3609, %v3609
      %v3642 = vmul.f32 %v3610, %v3610
      %v3643 = vmul.f32 %v3611, %v3611
      %v3644 = vmul.f32 %v3612, %v3612
      %v3645 = vmul.f32 %v3613, %v3613
      %v3646 = vmul.f32 %v3614, %v3614
      %v3647 = vmul.f32 %v3615, %v3615
      %v3648 = vmul.f32 %v3616, %v3616
      %v3649 = vmul.f32 %v3617, %v3617
      %v3650 = vmul.f32 %v3618, %v3618
      %v3651 = vmul.f32 %v3619, %v3619
      %v3652 = vmul.f32 %v3620, %v3620
      %v3653 = vmul.f32 %v3621, %v3621
      %v3654 = vmul.f32 %v3622, %v3622
      %v3655 = vmul.f32 %v3623, %v3623
      %v3656 = vmul.f32 %v3624, %v3624
      %v3657 = vmul.f32 %v3625, %v3625
      %v3658 = vmul.f32 %v3626, %v3626
      %v3659 = vmul.f32 %v3627, %v3627
      %v3660 = vmul.f32 %v3628, %v3628
      %v3661 = vmul.f32 %v3629, %v3629
      %v3662 = vmul.f32 %v3630, %v3630
      %v3663 = vmul.f32 %v3631, %v3631
      %v3664 = vsel %vm1019, %v3632, 0.0
      %v3665 = vsel %vm1019, %v3633, 0.0
      %v3666 = vadd.f32 %v3664, %v3665
      %v3667 = vsel %vm1019, %v3634, 0.0
      %v3668 = vadd.f32 %v3666, %v3667
      %v3669 = vsel %vm1019, %v3635, 0.0
      %v3670 = vadd.f32 %v3668, %v3669
      %v3671 = vsel %vm1019, %v3636, 0.0
      %v3672 = vadd.f32 %v3670, %v3671
      %v3673 = vsel %vm1019, %v3637, 0.0
      %v3674 = vadd.f32 %v3672, %v3673
      %v3675 = vsel %vm1019, %v3638, 0.0
      %v3676 = vadd.f32 %v3674, %v3675
      %v3677 = vsel %vm1019, %v3639, 0.0
      %v3678 = vadd.f32 %v3676, %v3677
      %v3679 = vsel %vm1019, %v3640, 0.0
      %v3680 = vadd.f32 %v3678, %v3679
      %v3681 = vsel %vm1019, %v3641, 0.0
      %v3682 = vadd.f32 %v3680, %v3681
      %v3683 = vsel %vm1019, %v3642, 0.0
      %v3684 = vadd.f32 %v3682, %v3683
      %v3685 = vsel %vm1019, %v3643, 0.0
      %v3686 = vadd.f32 %v3684, %v3685
      %v3687 = vsel %vm1019, %v3644, 0.0
      %v3688 = vadd.f32 %v3686, %v3687
      %v3689 = vsel %vm1019, %v3645, 0.0
      %v3690 = vadd.f32 %v3688, %v3689
      %v3691 = vsel %vm1019, %v3646, 0.0
      %v3692 = vadd.f32 %v3690, %v3691
      %v3693 = vsel %vm1019, %v3647, 0.0
      %v3694 = vadd.f32 %v3692, %v3693
      %v3695 = vsel %vm1019, %v3648, 0.0
      %v3696 = vadd.f32 %v3694, %v3695
      %v3697 = vsel %vm1019, %v3649, 0.0
      %v3698 = vadd.f32 %v3696, %v3697
      %v3699 = vsel %vm1019, %v3650, 0.0
      %v3700 = vadd.f32 %v3698, %v3699
      %v3701 = vsel %vm1019, %v3651, 0.0
      %v3702 = vadd.f32 %v3700, %v3701
      %v3703 = vsel %vm1019, %v3652, 0.0
      %v3704 = vadd.f32 %v3702, %v3703
      %v3705 = vsel %vm1019, %v3653, 0.0
      %v3706 = vadd.f32 %v3704, %v3705
      %v3707 = vsel %vm1019, %v3654, 0.0
      %v3708 = vadd.f32 %v3706, %v3707
      %v3709 = vsel %vm1019, %v3655, 0.0
      %v3710 = vadd.f32 %v3708, %v3709
      %v3711 = vsel %vm1019, %v3656, 0.0
      %v3712 = vadd.f32 %v3710, %v3711
      %v3713 = vsel %vm1019, %v3657, 0.0
      %v3714 = vadd.f32 %v3712, %v3713
      %v3715 = vsel %vm1019, %v3658, 0.0
      %v3716 = vadd.f32 %v3714, %v3715
      %v3717 = vsel %vm1019, %v3659, 0.0
      %v3718 = vadd.f32 %v3716, %v3717
      %v3719 = vsel %vm1019, %v3660, 0.0
      %v3720 = vadd.f32 %v3718, %v3719
      %v3721 = vsel %vm1019, %v3661, 0.0
      %v3722 = vadd.f32 %v3720, %v3721
      %v3723 = vsel %vm1019, %v3662, 0.0
      %v3724 = vadd.f32 %v3722, %v3723
      %v3725 = vsel %vm1019, %v3663, 0.0
      %v3726 = vadd.f32 %v3724, %v3725
      %v3727 = vrot.slane %v3726, 4
      %v3728 = vadd.f32 %v3726, %v3727
      %v3729 = vrot.slane %v3728, 2
      %v3730 = vadd.f32 %v3728, %v3729
      %v3731 = vrot.slane %v3730, 1
      %v3732 = vadd.f32 %v3730, %v3731
      %v3733 = vmul.f32 %v3732, 0.00390625
      %v3734 = vld [vmem:[%s5] sm:$0x1]
      %v3735 = vadd.f32 %v3733, 1e-05
      %v3736 = vrsqrt.pop %v3735
      %v3737 = vmul.f32 %v3734, %v3736
      %v3739 = vlaneseq
      %v3740 = vshrl.u32 %v3739, 7
      %v3741 = vsub.s32 0, %v3740
      %v3742 = vrot.slane %v3737, %v3741
      %v3744 = vmul.f32 %v3600, %v3742
      %v3745 = vmul.f32 %v3601, %v3742
      %v3746 = vmul.f32 %v3602, %v3742
      %v3747 = vmul.f32 %v3603, %v3742
      %v3748 = vmul.f32 %v3604, %v3742
      %v3749 = vmul.f32 %v3605, %v3742
      %v3750 = vmul.f32 %v3606, %v3742
      %v3751 = vmul.f32 %v3607, %v3742
      %v3752 = vmul.f32 %v3608, %v3742
      %v3753 = vmul.f32 %v3609, %v3742
      %v3754 = vmul.f32 %v3610, %v3742
      %v3755 = vmul.f32 %v3611, %v3742
      %v3756 = vmul.f32 %v3612, %v3742
      %v3757 = vmul.f32 %v3613, %v3742
      %v3758 = vmul.f32 %v3614, %v3742
      %v3759 = vmul.f32 %v3615, %v3742
      %v3760 = vmul.f32 %v3616, %v3742
      %v3761 = vmul.f32 %v3617, %v3742
      %v3762 = vmul.f32 %v3618, %v3742
      %v3763 = vmul.f32 %v3619, %v3742
      %v3764 = vmul.f32 %v3620, %v3742
      %v3765 = vmul.f32 %v3621, %v3742
      %v3766 = vmul.f32 %v3622, %v3742
      %v3767 = vmul.f32 %v3623, %v3742
      %v3768 = vmul.f32 %v3624, %v3742
      %v3769 = vmul.f32 %v3625, %v3742
      %v3770 = vmul.f32 %v3626, %v3742
      %v3771 = vmul.f32 %v3627, %v3742
      %v3772 = vmul.f32 %v3628, %v3742
      %v3773 = vmul.f32 %v3629, %v3742
      %v3774 = vmul.f32 %v3630, %v3742
      %v3775 = vmul.f32 %v3631, %v3742
      %v3776 = vld [vmem:[%s6] sm:$0x1]
      %v3778 = vlaneseq
      %v3779 = vshrl.u32 %v3778, 7
      %v3780 = vsub.s32 0, %v3779
      %v3781 = vrot.slane %v3776, %v3780
      %v3783 = vadd.f32 %v3744, %v3781
      %v3784 = vadd.f32 %v3745, %v3781
      %v3785 = vadd.f32 %v3746, %v3781
      %v3786 = vadd.f32 %v3747, %v3781
      %v3787 = vadd.f32 %v3748, %v3781
      %v3788 = vadd.f32 %v3749, %v3781
      %v3789 = vadd.f32 %v3750, %v3781
      %v3790 = vadd.f32 %v3751, %v3781
      %v3791 = vadd.f32 %v3752, %v3781
      %v3792 = vadd.f32 %v3753, %v3781
      %v3793 = vadd.f32 %v3754, %v3781
      %v3794 = vadd.f32 %v3755, %v3781
      %v3795 = vadd.f32 %v3756, %v3781
      %v3796 = vadd.f32 %v3757, %v3781
      %v3797 = vadd.f32 %v3758, %v3781
      %v3798 = vadd.f32 %v3759, %v3781
      %v3799 = vadd.f32 %v3760, %v3781
      %v3800 = vadd.f32 %v3761, %v3781
      %v3801 = vadd.f32 %v3762, %v3781
      %v3802 = vadd.f32 %v3763, %v3781
      %v3803 = vadd.f32 %v3764, %v3781
      %v3804 = vadd.f32 %v3765, %v3781
      %v3805 = vadd.f32 %v3766, %v3781
      %v3806 = vadd.f32 %v3767, %v3781
      %v3807 = vadd.f32 %v3768, %v3781
      %v3808 = vadd.f32 %v3769, %v3781
      %v3809 = vadd.f32 %v3770, %v3781
      %v3810 = vadd.f32 %v3771, %v3781
      %v3811 = vadd.f32 %v3772, %v3781
      %v3812 = vadd.f32 %v3773, %v3781
      %v3813 = vadd.f32 %v3774, %v3781
      %v3814 = vadd.f32 %v3775, %v3781
      %v3815 = vadd.f32 %v280, %v3783
      %v3816 = vadd.f32 %v281, %v3784
      %v3817 = vadd.f32 %v282, %v3785
      %v3818 = vadd.f32 %v283, %v3786
      %v3819 = vadd.f32 %v284, %v3787
      %v3820 = vadd.f32 %v285, %v3788
      %v3821 = vadd.f32 %v286, %v3789
      %v3822 = vadd.f32 %v287, %v3790
      %v3823 = vadd.f32 %v288, %v3791
      %v3824 = vadd.f32 %v289, %v3792
      %v3825 = vadd.f32 %v290, %v3793
      %v3826 = vadd.f32 %v291, %v3794
      %v3827 = vadd.f32 %v292, %v3795
      %v3828 = vadd.f32 %v293, %v3796
      %v3829 = vadd.f32 %v294, %v3797
      %v3830 = vadd.f32 %v295, %v3798
      %v3831 = vadd.f32 %v296, %v3799
      %v3832 = vadd.f32 %v297, %v3800
      %v3833 = vadd.f32 %v298, %v3801
      %v3834 = vadd.f32 %v299, %v3802
      %v3835 = vadd.f32 %v300, %v3803
      %v3836 = vadd.f32 %v301, %v3804
      %v3837 = vadd.f32 %v302, %v3805
      %v3838 = vadd.f32 %v303, %v3806
      %v3839 = vadd.f32 %v304, %v3807
      %v3840 = vadd.f32 %v305, %v3808
      %v3841 = vadd.f32 %v306, %v3809
      %v3842 = vadd.f32 %v307, %v3810
      %v3843 = vadd.f32 %v308, %v3811
      %v3844 = vadd.f32 %v309, %v3812
      %v3845 = vadd.f32 %v310, %v3813
      %v3846 = vadd.f32 %v311, %v3814
      %3847 = vst.msk [vmem:[%s278] sm:$0xff] %vm1019, %v3815
      %3848 = vst.msk [vmem:[%s278 + $0x8] sm:$0xff] %vm1019, %v3816
      %3849 = vst.msk [vmem:[%s278 + $0x10] sm:$0xff] %vm1019, %v3817
      %3850 = vst.msk [vmem:[%s278 + $0x18] sm:$0xff] %vm1019, %v3818
      %3851 = vst.msk [vmem:[%s278 + $0x20] sm:$0xff] %vm1019, %v3819
      %3852 = vst.msk [vmem:[%s278 + $0x28] sm:$0xff] %vm1019, %v3820
      %3853 = vst.msk [vmem:[%s278 + $0x30] sm:$0xff] %vm1019, %v3821
      %3854 = vst.msk [vmem:[%s278 + $0x38] sm:$0xff] %vm1019, %v3822
      %3855 = vst.msk [vmem:[%s278 + $0x40] sm:$0xff] %vm1019, %v3823
      %3856 = vst.msk [vmem:[%s278 + $0x48] sm:$0xff] %vm1019, %v3824
      %3857 = vst.msk [vmem:[%s278 + $0x50] sm:$0xff] %vm1019, %v3825
      %3858 = vst.msk [vmem:[%s278 + $0x58] sm:$0xff] %vm1019, %v3826
      %3859 = vst.msk [vmem:[%s278 + $0x60] sm:$0xff] %vm1019, %v3827
      %3860 = vst.msk [vmem:[%s278 + $0x68] sm:$0xff] %vm1019, %v3828
      %3861 = vst.msk [vmem:[%s278 + $0x70] sm:$0xff] %vm1019, %v3829
      %3862 = vst.msk [vmem:[%s278 + $0x78] sm:$0xff] %vm1019, %v3830
      %3863 = vst.msk [vmem:[%s278 + $0x80] sm:$0xff] %vm1019, %v3831
      %3864 = vst.msk [vmem:[%s278 + $0x88] sm:$0xff] %vm1019, %v3832
      %3865 = vst.msk [vmem:[%s278 + $0x90] sm:$0xff] %vm1019, %v3833
      %3866 = vst.msk [vmem:[%s278 + $0x98] sm:$0xff] %vm1019, %v3834
      %3867 = vst.msk [vmem:[%s278 + $0xa0] sm:$0xff] %vm1019, %v3835
      %3868 = vst.msk [vmem:[%s278 + $0xa8] sm:$0xff] %vm1019, %v3836
      %3869 = vst.msk [vmem:[%s278 + $0xb0] sm:$0xff] %vm1019, %v3837
      %3870 = vst.msk [vmem:[%s278 + $0xb8] sm:$0xff] %vm1019, %v3838
      %3871 = vst.msk [vmem:[%s278 + $0xc0] sm:$0xff] %vm1019, %v3839
      %3872 = vst.msk [vmem:[%s278 + $0xc8] sm:$0xff] %vm1019, %v3840
      %3873 = vst.msk [vmem:[%s278 + $0xd0] sm:$0xff] %vm1019, %v3841
      %3874 = vst.msk [vmem:[%s278 + $0xd8] sm:$0xff] %vm1019, %v3842
      %3875 = vst.msk [vmem:[%s278 + $0xe0] sm:$0xff] %vm1019, %v3843
      %3876 = vst.msk [vmem:[%s278 + $0xe8] sm:$0xff] %vm1019, %v3844
      %3877 = vst.msk [vmem:[%s278 + $0xf0] sm:$0xff] %vm1019, %v3845
      %3878 = vst.msk [vmem:[%s278 + $0xf8] sm:$0xff] %vm1019, %v3846
      %p3879 = scmp.lt.s32.totalorder %s18, 1
      %s3880 = scalar_select %p3879, %s18, 1
      %s3881 = smul.addr %s3880, 32
      %s3882 = smul.addr %s3881, 8
      %s3883 = scalar_lea.vmem %s7, %s3882
      // Predicated region
      $region49: #{tpu_custom_call.1} parent=47 // pred_check
        %p3884 = pneg %p188
      $region50: #{tpu_custom_call.1} parent=47 // pred_check_branch
        %3886 = sbr.rel (%p3884) target = $region52
      $region51: #{tpu_custom_call.1} parent=47 // pred_region
        _
      $region52: #{tpu_custom_call.1} parent=47 // pred_fallthru
        _
    $region48: #{tpu_custom_call.1} parent=5 // pred_fallthru
      _
    %p3887 = scmp.le.s32.totalorder 2, %s13
    // Predicated region
    $region53: #{tpu_custom_call.1} parent=5 // pred_check
      %p3888 = pneg %p3887
    $region54: #{tpu_custom_call.1} parent=5 // pred_check_branch
      %3890 = sbr.rel (%p3888) target = $region56
    $region55: #{tpu_custom_call.1} parent=5 // pred_region
      %s3891 = ssub.s32 %s13, 2
      // Predicated region
      $region57: #{tpu_custom_call.1} parent=55 // pred_check
        %p3892 = pneg %p194
      $region58: #{tpu_custom_call.1} parent=55 // pred_check_branch
        %3894 = sbr.rel (%p3892) target = $region60
      $region59: #{tpu_custom_call.1} parent=55 // pred_region
        %p3895 = scmp.lt.s32.totalorder %s19, 1
        %s3896 = scalar_select %p3895, %s19, 1
        %s3897 = smul.addr %s3896, 32
        %s3898 = smul.addr %s3897, 8
        %s3899 = scalar_lea.vmem %s7, %s3898
      $region60: #{tpu_custom_call.1} parent=55 // pred_fallthru
        _
    $region56: #{tpu_custom_call.1} parent=5 // pred_fallthru
      _
  $region6: #{tpu_custom_call.1} parent=0 // loop_footer
    %s17 = sadd.s32 1, %s13
  $region7: #{tpu_custom_call.1} parent=0 // loop_footer_branch
    %12 = sbr.rel target = $region3
  $region8: #{tpu_custom_call.1} parent=0 // loop_exit
    _

</llo_original>
